<compile_context>
chip_gen: v7x
topology: tpu7x:2x2x1
jax: 0.10.0
libtpu: 0.0.40
codegen_flags: <defaults>
</compile_context>

<pallas_src>
import functools

import jax
import jax.numpy as jnp
from jax import lax
from jax.experimental import pallas as pl
from jax.experimental.pallas import tpu as pltpu


def _pick_tile(dim, target, align):
    """Largest divisor of `dim` that is <= target and a multiple of `align`.

    Falls back to the full extent (always a legal block shape) only when no
    aligned divisor exists.
    """
    t = min(target, dim)
    for cand in range(t, 0, -1):
        if dim % cand == 0 and cand % align == 0:
            return cand
    return dim


# ---------------- projection matmuls: out = x @ w.T (+ bias) ----------------
# PyTorch nn.Linear (out, in) weights are consumed directly: the kernels contract
# x's last dim against w's last dim, so no w.T HBM round trip in the wrapper.

def _matmul_resident_kernel(x_ref, w_ref, o_ref):
    o_ref[...] = lax.dot_general(
        x_ref[...], w_ref[...],
        dimension_numbers=(((1,), (1,)), ((), ())),
        preferred_element_type=jnp.float32).astype(o_ref.dtype)


def _matmul_resident_bias_kernel(x_ref, w_ref, b_ref, o_ref):
    acc = lax.dot_general(
        x_ref[...], w_ref[...],
        dimension_numbers=(((1,), (1,)), ((), ())),
        preferred_element_type=jnp.float32)
    o_ref[...] = (acc + b_ref[...].astype(jnp.float32)).astype(o_ref.dtype)


def _matmul_tiled_kernel(x_ref, w_ref, o_ref, acc_ref):
    @pl.when(pl.program_id(2) == 0)
    def _init():
        acc_ref[...] = jnp.zeros_like(acc_ref)

    acc_ref[...] += lax.dot_general(
        x_ref[...], w_ref[...],
        dimension_numbers=(((1,), (1,)), ((), ())),
        preferred_element_type=jnp.float32)

    @pl.when(pl.program_id(2) == pl.num_programs(2) - 1)
    def _store():
        o_ref[...] = acc_ref[...].astype(o_ref.dtype)


def _matmul_tiled_bias_kernel(x_ref, w_ref, b_ref, o_ref, acc_ref):
    @pl.when(pl.program_id(2) == 0)
    def _init():
        # Accumulator starts at the broadcast bias -> no extra (tm, tn) f32 VALU
        # pass in the last-k epilogue.
        acc_ref[...] = jnp.broadcast_to(b_ref[...].astype(jnp.float32),
                                        acc_ref.shape)

    acc_ref[...] += lax.dot_general(
        x_ref[...], w_ref[...],
        dimension_numbers=(((1,), (1,)), ((), ())),
        preferred_element_type=jnp.float32)

    @pl.when(pl.program_id(2) == pl.num_programs(2) - 1)
    def _store():
        o_ref[...] = acc_ref[...].astype(o_ref.dtype)


def _linear(x2d, w, bias=None, *, out_dtype=None, tm=256, tn=512, tk=512):
    """out = x2d @ w.T (+ bias).  w is (Nout, K) in PyTorch nn.Linear layout."""
    M, K = x2d.shape
    Nout, Kw = w.shape
    assert K == Kw
    out_dtype = x2d.dtype if out_dtype is None else out_dtype
    itemsize = x2d.dtype.itemsize
    tm = _pick_tile(M, tm, 8)

    cost = pl.CostEstimate(
        flops=2 * M * Nout * K,
        transcendentals=0,
        bytes_accessed=(M * K + Nout * K + M * Nout) * itemsize)
    cp = pltpu.CompilerParams(
        dimension_semantics=("parallel",),
        vmem_limit_bytes=32 * 1024 * 1024)

    # Weight-resident path: the whole (Nout, K) weight sits in VMEM with a constant
    # index_map and is read from HBM exactly once; x / out stream in row tiles.
    resident_bytes = (2 * Nout * K * itemsize      # weight (buffer pair)
                      + 2 * tm * K * itemsize      # x tile (double-buffered)
                      + 2 * tm * Nout * itemsize   # out tile (double-buffered)
                      + tm * Nout * 4)             # f32 matmul intermediate
    if resident_bytes <= 12 * 1024 * 1024:
        x_spec = pl.BlockSpec((tm, K), lambda i: (i, 0))
        w_spec = pl.BlockSpec((Nout, K), lambda i: (0, 0))
        o_spec = pl.BlockSpec((tm, Nout), lambda i: (i, 0))
        common = dict(
            grid=(M // tm,),
            out_shape=jax.ShapeDtypeStruct((M, Nout), out_dtype),
            out_specs=o_spec,
            compiler_params=cp,
            cost_estimate=cost)
        if bias is None:
            return pl.pallas_call(_matmul_resident_kernel,
                                  in_specs=[x_spec, w_spec], **common)(x2d, w)
        b2d = bias.reshape(1, Nout)
        b_spec = pl.BlockSpec((1, Nout), lambda i: (0, 0))
        return pl.pallas_call(_matmul_resident_bias_kernel,
                              in_specs=[x_spec, w_spec, b_spec],
                              **common)(x2d, w, b2d)

    # Tiled fallback for weights too large to keep VMEM-resident.
    tn = _pick_tile(Nout, tn, 128)
    tk = _pick_tile(K, tk, 128)
    grid = (M // tm, Nout // tn, K // tk)            # reduction axis last
    x_spec = pl.BlockSpec((tm, tk), lambda i, j, k: (i, k))
    w_spec = pl.BlockSpec((tn, tk), lambda i, j, k: (j, k))
    o_spec = pl.BlockSpec((tm, tn), lambda i, j, k: (i, j))
    common = dict(
        grid=grid,
        out_shape=jax.ShapeDtypeStruct((M, Nout), out_dtype),
        out_specs=o_spec,
        scratch_shapes=[pltpu.VMEM((tm, tn), jnp.float32)],
        compiler_params=pltpu.CompilerParams(
            dimension_semantics=("parallel", "parallel", "arbitrary"),
            vmem_limit_bytes=32 * 1024 * 1024),
        cost_estimate=cost)
    if bias is None:
        return pl.pallas_call(_matmul_tiled_kernel,
                              in_specs=[x_spec, w_spec], **common)(x2d, w)
    b2d = bias.reshape(1, Nout)
    b_spec = pl.BlockSpec((1, tn), lambda i, j, k: (0, j))
    return pl.pallas_call(_matmul_tiled_bias_kernel,
                          in_specs=[x_spec, w_spec, b_spec], **common)(x2d, w, b2d)


# -------- attention: flash-style softmax(q k^T * scale) @ v per (batch, head) --------

def _flash_attn_kernel(q_ref, k_ref, v_ref, o_ref, m_sc, l_sc, acc_sc, *,
                       scale, head_dim, heads_per_block):
    # q_ref: (tq, W); k_ref / v_ref: (tk, W); o_ref: (tq, W) with W = g * head_dim.
    kv = pl.program_id(3)

    @pl.when(kv == 0)
    def _init():
        m_sc[...] = jnp.full_like(m_sc, -jnp.inf)
        l_sc[...] = jnp.zeros_like(l_sc)
        acc_sc[...] = jnp.zeros_like(acc_sc)

    qb = q_ref[...]
    kb = k_ref[...]
    vb = v_ref[...]
    for h in range(heads_per_block):               # static unroll over grouped heads
        lo, hi = h * head_dim, (h + 1) * head_dim
        q = qb[:, lo:hi] * scale                   # fold scale into q (tq*Dh mults)
        s = lax.dot_general(q, kb[:, lo:hi],
                            dimension_numbers=(((1,), (1,)), ((), ())),
                            preferred_element_type=jnp.float32)       # (tq, tk) f32
        m_prev = m_sc[h]                                               # (tq, 1)
        m_new = jnp.maximum(m_prev, jnp.max(s, axis=-1, keepdims=True))
        alpha = jnp.exp(m_prev - m_new)
        p = jnp.exp(s - m_new)                                         # EUP
        l_sc[h] = alpha * l_sc[h] + jnp.sum(p, axis=-1, keepdims=True)
        pv = lax.dot_general(p.astype(vb.dtype), vb[:, lo:hi],
                             dimension_numbers=(((1,), (0,)), ((), ())),
                             preferred_element_type=jnp.float32)       # (tq, Dh)
        acc_sc[h] = alpha * acc_sc[h] + pv
        m_sc[h] = m_new

    @pl.when(kv == pl.num_programs(3) - 1)
    def _store():
        # Exact divide on the small (tq, 1) denominator (correctness over approx).
        parts = [acc_sc[h] / l_sc[h] for h in range(heads_per_block)]
        out = parts[0] if heads_per_block == 1 else jnp.concatenate(parts, axis=-1)
        o_ref[...] = out.astype(o_ref.dtype)


def _attention(qkv, B, N, C, num_heads, *, tq=256, tk=512):
    H = num_heads
    Dh = C // H
    scale = Dh ** (-0.5)
    tq = _pick_tile(N, tq, 8)
    tk = _pick_tile(N, tk, 8)

    cost = pl.CostEstimate(
        flops=4 * B * H * N * N * Dh,
        transcendentals=B * H * N * N,
        bytes_accessed=4 * B * N * C * qkv.dtype.itemsize)
    cp = pltpu.CompilerParams(
        dimension_semantics=("parallel", "parallel", "parallel", "arbitrary"),
        vmem_limit_bytes=32 * 1024 * 1024)

    # Lane-dense head blocking straight out of (B, N, 3C):
    #   Dh % 128 == 0  -> one head per Dh-wide block,
    #   128 % Dh == 0  -> g = 128 // Dh heads share one 128-lane block.
    if Dh % 128 == 0:
        W = Dh
    elif 128 % Dh == 0 and H % (128 // Dh) == 0:
        W = 128
    else:
        W = None

    if W is not None:
        g = W // Dh
        n_groups = H // g
        cw = C // W                       # W-wide column blocks per q / k / v slab
        kernel = functools.partial(_flash_attn_kernel, scale=scale,
                                   head_dim=Dh, heads_per_block=g)
        q_spec = pl.BlockSpec((None, tq, W), lambda b, gi, qi, ki: (b, qi, gi))
        k_spec = pl.BlockSpec((None, tk, W), lambda b, gi, qi, ki: (b, ki, cw + gi))
        v_spec = pl.BlockSpec((None, tk, W),
                              lambda b, gi, qi, ki: (b, ki, 2 * cw + gi))
        o_spec = pl.BlockSpec((None, tq, W), lambda b, gi, qi, ki: (b, qi, gi))
        scratch = [pltpu.VMEM((g, tq, 1), jnp.float32),
                   pltpu.VMEM((g, tq, 1), jnp.float32),
                   pltpu.VMEM((g, tq, Dh), jnp.float32)]
        return pl.pallas_call(
            kernel, grid=(B, n_groups, N // tq, N // tk),
            in_specs=[q_spec, k_spec, v_spec], out_specs=o_spec,
            out_shape=jax.ShapeDtypeStruct((B, N, C), qkv.dtype),
            scratch_shapes=scratch, compiler_params=cp, cost_estimate=cost,
        )(qkv, qkv, qkv)

    # TODO(synk): lane-group heads for head_dims that neither divide nor are divided
    # by 128; this fallback pays two extra HBM layout passes (split + merge).
    qkv4 = qkv.reshape(B, N, 3 * H, Dh).transpose(0, 2, 1, 3)   # (B, 3H, N, Dh)
    kernel = functools.partial(_flash_attn_kernel, scale=scale,
                               head_dim=Dh, heads_per_block=1)
    q_spec = pl.BlockSpec((None, None, tq, Dh), lambda b, h, qi, ki: (b, h, qi, 0))
    k_spec = pl.BlockSpec((None, None, tk, Dh),
                          lambda b, h, qi, ki: (b, H + h, ki, 0))
    v_spec = pl.BlockSpec((None, None, tk, Dh),
                          lambda b, h, qi, ki: (b, 2 * H + h, ki, 0))
    o_spec = pl.BlockSpec((None, None, tq, Dh), lambda b, h, qi, ki: (b, h, qi, 0))
    scratch = [pltpu.VMEM((1, tq, 1), jnp.float32),
               pltpu.VMEM((1, tq, 1), jnp.float32),
               pltpu.VMEM((1, tq, Dh), jnp.float32)]
    out = pl.pallas_call(
        kernel, grid=(B, H, N // tq, N // tk),
        in_specs=[q_spec, k_spec, v_spec], out_specs=o_spec,
        out_shape=jax.ShapeDtypeStruct((B, H, N, Dh), qkv.dtype),
        scratch_shapes=scratch, compiler_params=cp, cost_estimate=cost,
    )(qkv4, qkv4, qkv4)
    return out.transpose(0, 2, 1, 3).reshape(B, N, C)


# ---------------- module forward ----------------

def simple_attention(x, w_qkv, w_proj, b_proj, num_heads, *,
                     compute_dtype=jnp.bfloat16):
    """Pallas port of SimpleAttention.forward (dropout = 0 / eval).

    x:      (B, N, C)
    w_qkv:  (3C, C)  PyTorch nn.Linear (out, in) layout, no bias
    w_proj: (C, C)   PyTorch nn.Linear (out, in) layout
    b_proj: (C,)
    compute_dtype: MXU-operand dtype (bfloat16 by default on all TPU generations);
                   accumulation and softmax stay in f32 regardless.
    Also covers the module's N > 1024 chunked path: the flash kernel's query tiling
    with full-key online softmax is mathematically identical to it.
    """
    B, N, C = x.shape
    assert C % num_heads == 0
    out_dtype = x.dtype
    if compute_dtype is not None and x.dtype != compute_dtype:
        x = x.astype(compute_dtype)
        w_qkv = w_qkv.astype(compute_dtype)
        w_proj = w_proj.astype(compute_dtype)

    # QKV projection (weight transpose folded into the kernel contraction).
    qkv = _linear(x.reshape(B * N, C), w_qkv).reshape(B, N, 3 * C)

    # Flash-style attention, heads sliced straight out of the (B, N, 3C) activation.
    attn = _attention(qkv, B, N, C, num_heads)

    # Output projection with fused bias; produced directly in the caller's dtype.
    out = _linear(attn.reshape(B * N, C), w_proj, b_proj, out_dtype=out_dtype)
    return out.reshape(B, N, C)


# ---------------- reference (pure JAX) for sanity ----------------

def _reference(x, w_qkv, w_proj, b_proj, num_heads):
    B, N, C = x.shape
    Dh = C // num_heads
    scale = Dh ** (-0.5)
    qkv = (x.reshape(B * N, C) @ w_qkv.T).reshape(B, N, 3, num_heads, Dh)
    qkv = qkv.transpose(2, 0, 3, 1, 4)
    q, k, v = qkv[0], qkv[1], qkv[2]
    attn = jax.nn.softmax(jnp.einsum("bhqd,bhkd->bhqk", q, k) * scale, axis=-1)
    o = jnp.einsum("bhqk,bhkd->bhqd", attn, v)
    o = o.transpose(0, 2, 1, 3).reshape(B, N, C)
    return o @ w_proj.T + b_proj


if __name__ == "__main__":
    key = jax.random.PRNGKey(0)

    def make_inputs(B, N, C, subkey):
        ks = jax.random.split(subkey, 4)
        x = jax.random.normal(ks[0], (B, N, C), dtype=jnp.float32)
        w_qkv = jax.random.normal(ks[1], (3 * C, C), dtype=jnp.float32) * (C ** -0.5)
        w_proj = jax.random.normal(ks[2], (C, C), dtype=jnp.float32) * (C ** -0.5)
        b_proj = jax.random.normal(ks[3], (C,), dtype=jnp.float32) * 0.01
        return x, w_qkv, w_proj, b_proj

    k1, k2 = jax.random.split(key)

    # Case 1: head_dim = 512 / 4 = 128 -> one head per lane block, default bf16 MXU
    # operands.  Compare against a reference fed the same bf16-quantized inputs.
    B, N, C, H = 2, 128, 512, 4
    x, wq, wp, bp = make_inputs(B, N, C, k1)
    out = jax.block_until_ready(simple_attention(x, wq, wp, bp, H))
    ref = _reference(x.astype(jnp.bfloat16).astype(jnp.float32),
                     wq.astype(jnp.bfloat16).astype(jnp.float32),
                     wp.astype(jnp.bfloat16).astype(jnp.float32), bp, H)
    assert out.shape == (B, N, C) and out.dtype == x.dtype
    err = float(jnp.max(jnp.abs(out.astype(jnp.float32) - ref)))
    assert jnp.allclose(out.astype(jnp.float32), ref, atol=5e-2, rtol=5e-2), \
        f"bf16 path mismatch vs reference: {err}"

    # Case 2: head_dim = 256 / 4 = 64 -> two heads share one 128-lane block; f32
    # operands to check the grouped-head path tightly.
    B, N, C, H = 2, 128, 256, 4
    x, wq, wp, bp = make_inputs(B, N, C, k2)
    out = jax.block_until_ready(
        simple_attention(x, wq, wp, bp, H, compute_dtype=jnp.float32))
    ref = _reference(x, wq, wp, bp, H)
    assert out.shape == (B, N, C)
    err = float(jnp.max(jnp.abs(out - ref)))
    assert jnp.allclose(out, ref, atol=2e-2, rtol=2e-2), \
        f"f32 grouped-head path mismatch vs reference: {err}"

    print("KERNEL_OK")
</pallas_src>

<mosaic_0001>
module attributes {stable_mosaic.version = 11 : i64} {
  func.func @_matmul_resident_kernel(%arg0: i32, %arg1: memref<256x512xbf16, #tpu.memory_space<vmem>>, %arg2: memref<1536x512xbf16, #tpu.memory_space<vmem>>, %arg3: memref<256x1536xbf16, #tpu.memory_space<vmem>>) attributes {dimension_semantics = [#tpu.dimension_semantics<parallel>], iteration_bounds = array<i64: 1>, scalar_prefetch = 0 : i64, scratch_operands = 0 : i64, tpu.core_type = #tpu.core_type<tc>, window_params = [{transform_indices = @transform_0, window_bounds = array<i64: 256, 512>}, {pipeline_mode = #tpu.pipeline_mode<synchronous>, transform_indices = @transform_1, window_bounds = array<i64: 1536, 512>}, {transform_indices = @transform_2, window_bounds = array<i64: 256, 1536>}]} {
    %c0 = arith.constant 0 : index
    %c0_0 = arith.constant 0 : index
    %0 = vector.load %arg1[%c0, %c0_0] : memref<256x512xbf16, #tpu.memory_space<vmem>>, vector<256x512xbf16>
    %c0_1 = arith.constant 0 : index
    %c0_2 = arith.constant 0 : index
    %1 = vector.load %arg2[%c0_1, %c0_2] : memref<1536x512xbf16, #tpu.memory_space<vmem>>, vector<1536x512xbf16>
    %cst = arith.constant dense<0.000000e+00> : vector<256x1536xf32>
    %2 = tpu.matmul %0, %1, %cst {dimension_numbers = #tpu.dot_dimension_numbers<[1], [1], [0], [0], [0, 0, 1, 0], [], []>} : vector<256x512xbf16>, vector<1536x512xbf16>, vector<256x1536xf32> -> vector<256x1536xf32>
    %3 = arith.truncf %2 : vector<256x1536xf32> to vector<256x1536xbf16>
    %c0_3 = arith.constant 0 : index
    %c0_4 = arith.constant 0 : index
    %4 = vector.load %arg3[%c0_3, %c0_4] : memref<256x1536xbf16, #tpu.memory_space<vmem>>, vector<256x1536xbf16>
    tpu.vector_store %arg3[%c0_3, %c0_4], %3 {strides = array<i32>} : memref<256x1536xbf16, #tpu.memory_space<vmem>>, vector<256x1536xbf16>,
    return
  }
  func.func @transform_0(%arg0: i32) -> (i32, i32) {
    %c0_i32 = arith.constant 0 : i32
    %c0_i32_0 = arith.constant 0 : i32
    return %arg0, %c0_i32 : i32, i32
  }
  func.func @transform_1(%arg0: i32) -> (i32, i32) {
    %c0_i32 = arith.constant 0 : i32
    %c0_i32_0 = arith.constant 0 : i32
    %c0_i32_1 = arith.constant 0 : i32
    return %c0_i32, %c0_i32_0 : i32, i32
  }
  func.func @transform_2(%arg0: i32) -> (i32, i32) {
    %c0_i32 = arith.constant 0 : i32
    %c0_i32_0 = arith.constant 0 : i32
    return %arg0, %c0_i32 : i32, i32
  }
}

</mosaic_0001>

<llo_original>
// kernel: tpu_custom_call.1
$region0: #{tpu_custom_call.1}
  #allocation0 [shape = 'u32[]', space=smem, size = 0x4, offset = 0x4, fixed_abs, tag = 'smem constant byte address 0x4 - core index']
  #allocation1 [shape = 'u32[144,128]{1,0:T(1,128)}', space=vmem, size = 0x12000, scoped, tag = 'internal scratch']
  %s0 = inlined_call_operand.hbm [shape: bf16[256,512], index: 0, kind: input, shape index: {}]
  %s1 = inlined_call_operand.hbm [shape: bf16[1536,512], index: 1, kind: input, shape index: {}]
  %s2 = inlined_call_operand.hbm [shape: bf16[256,1536], index: 2, kind: output, shape index: {}]
  %s3 = sld [smem:[#allocation0]]
  $region26: #{tpu_custom_call.1} parent=0
    _
  %s5 = ssub.s32 1, %s3
  %s6 = scalar_select 0, %s5, %s3
  $region1: #{tpu_custom_call.1} parent=0
    #allocation2 [shape = 'u8[262144]{0}', space=vmem, size = 0x40000, scoped, tag = 'input window, operand 0, single buffered']
    #allocation3 [shape = 's32[1]{0}', space=sflag, size = 0x4, scoped, tag = 'scoped memory for tpu_custom_call.1']
    #allocation4 [shape = 's32[1]{0}', space=sflag, size = 0x4, scoped, tag = 'scoped memory for tpu_custom_call.1']
    #allocation5 [shape = 'u8[1572864]{0}', space=vmem, size = 0x180000, scoped, tag = 'input window, operand 1, single buffered']
    #allocation6 [shape = 's32[1]{0}', space=sflag, size = 0x4, scoped, tag = 'scoped memory for tpu_custom_call.1']
    #allocation7 [shape = 'u8[786432]{0}', space=vmem, size = 0xc0000, scoped, tag = 'output window, operand 0, single buffered']
    %7 = vsyncpa [#allocation3], 0
    %8 = vsyncpa [#allocation6], 0
    %9 = vsyncpa [#allocation4], 0
    // Predicated region
    $region2: #{tpu_custom_call.1} parent=1 // pred_check
      _
    $region3: #{tpu_custom_call.1} parent=1 // pred_check_branch
      %11 = sbr.rel (0) target = $region5
    $region4: #{tpu_custom_call.1} parent=1 // pred_region
      %s13 = ssub.s32 8192, 8192
      %14 = vsyncadd [#allocation3], %s13
      %s15 = sshll.u32 [#allocation2], 4
      %s16 = int_to_ptr.vmem [resolvable:$true] %s15
      %21 = dma.hbm_to_vmem [thread:$0]  %s0, 8192, %s16, [#allocation3], 256, 256, 16
    $region5: #{tpu_custom_call.1} parent=1 // pred_fallthru
      _
    // Predicated region
    $region6: #{tpu_custom_call.1} parent=1 // pred_check
      _
    $region7: #{tpu_custom_call.1} parent=1 // pred_check_branch
      %23 = sbr.rel (0) target = $region9
    $region8: #{tpu_custom_call.1} parent=1 // pred_region
      %s25 = ssub.s32 49152, 49152
      %26 = vsyncadd [#allocation6], %s25
      %s27 = sshll.u32 [#allocation5], 4
      %s28 = int_to_ptr.vmem [resolvable:$true] %s27
      %33 = dma.hbm_to_vmem [thread:$0]  %s1, 49152, %s28, [#allocation6], 256, 256, 16
    $region9: #{tpu_custom_call.1} parent=1 // pred_fallthru
      _
    // Predicated region
    $region10: #{tpu_custom_call.1} parent=1 // pred_check
      _
    $region11: #{tpu_custom_call.1} parent=1 // pred_check_branch
      %35 = sbr.rel (0) target = $region13
    $region12: #{tpu_custom_call.1} parent=1 // pred_region
      %36 = dma.done [#allocation3], 8192
    $region13: #{tpu_custom_call.1} parent=1 // pred_fallthru
      _
    // Predicated region
    $region14: #{tpu_custom_call.1} parent=1 // pred_check
      _
    $region15: #{tpu_custom_call.1} parent=1 // pred_check_branch
      %38 = sbr.rel (0) target = $region17
    $region16: #{tpu_custom_call.1} parent=1 // pred_region
      %39 = dma.done [#allocation6], 49152
    $region17: #{tpu_custom_call.1} parent=1 // pred_fallthru
      _
    %v40 = vld [vmem:[#allocation2] sm:$0xff]
    %v41 = vld [vmem:[#allocation2 + $0x8] sm:$0xff]
    %v42 = vld [vmem:[#allocation2 + $0x10] sm:$0xff]
    %v43 = vld [vmem:[#allocation2 + $0x18] sm:$0xff]
    %v44 = vld [vmem:[#allocation2 + $0x20] sm:$0xff]
    %v45 = vld [vmem:[#allocation2 + $0x28] sm:$0xff]
    %v46 = vld [vmem:[#allocation2 + $0x30] sm:$0xff]
    %v47 = vld [vmem:[#allocation2 + $0x38] sm:$0xff]
    %v48 = vld [vmem:[#allocation2 + $0x40] sm:$0xff]
    %v49 = vld [vmem:[#allocation2 + $0x48] sm:$0xff]
    %v50 = vld [vmem:[#allocation2 + $0x50] sm:$0xff]
    %v51 = vld [vmem:[#allocation2 + $0x58] sm:$0xff]
    %v52 = vld [vmem:[#allocation2 + $0x60] sm:$0xff]
    %v53 = vld [vmem:[#allocation2 + $0x68] sm:$0xff]
    %v54 = vld [vmem:[#allocation2 + $0x70] sm:$0xff]
    %v55 = vld [vmem:[#allocation2 + $0x78] sm:$0xff]
    %v56 = vld [vmem:[#allocation2 + $0x80] sm:$0xff]
    %v57 = vld [vmem:[#allocation2 + $0x88] sm:$0xff]
    %v58 = vld [vmem:[#allocation2 + $0x90] sm:$0xff]
    %v59 = vld [vmem:[#allocation2 + $0x98] sm:$0xff]
    %v60 = vld [vmem:[#allocation2 + $0xa0] sm:$0xff]
    %v61 = vld [vmem:[#allocation2 + $0xa8] sm:$0xff]
    %v62 = vld [vmem:[#allocation2 + $0xb0] sm:$0xff]
    %v63 = vld [vmem:[#allocation2 + $0xb8] sm:$0xff]
    %v64 = vld [vmem:[#allocation2 + $0xc0] sm:$0xff]
    %v65 = vld [vmem:[#allocation2 + $0xc8] sm:$0xff]
    %v66 = vld [vmem:[#allocation2 + $0xd0] sm:$0xff]
    %v67 = vld [vmem:[#allocation2 + $0xd8] sm:$0xff]
    %v68 = vld [vmem:[#allocation2 + $0xe0] sm:$0xff]
    %v69 = vld [vmem:[#allocation2 + $0xe8] sm:$0xff]
    %v70 = vld [vmem:[#allocation2 + $0xf0] sm:$0xff]
    %v71 = vld [vmem:[#allocation2 + $0xf8] sm:$0xff]
    %v72 = vld [vmem:[#allocation2 + $0x100] sm:$0xff]
    %v73 = vld [vmem:[#allocation2 + $0x108] sm:$0xff]
    %v74 = vld [vmem:[#allocation2 + $0x110] sm:$0xff]
    %v75 = vld [vmem:[#allocation2 + $0x118] sm:$0xff]
    %v76 = vld [vmem:[#allocation2 + $0x120] sm:$0xff]
    %v77 = vld [vmem:[#allocation2 + $0x128] sm:$0xff]
    %v78 = vld [vmem:[#allocation2 + $0x130] sm:$0xff]
    %v79 = vld [vmem:[#allocation2 + $0x138] sm:$0xff]
    %v80 = vld [vmem:[#allocation2 + $0x140] sm:$0xff]
    %v81 = vld [vmem:[#allocation2 + $0x148] sm:$0xff]
    %v82 = vld [vmem:[#allocation2 + $0x150] sm:$0xff]
    %v83 = vld [vmem:[#allocation2 + $0x158] sm:$0xff]
    %v84 = vld [vmem:[#allocation2 + $0x160] sm:$0xff]
    %v85 = vld [vmem:[#allocation2 + $0x168] sm:$0xff]
    %v86 = vld [vmem:[#allocation2 + $0x170] sm:$0xff]
    %v87 = vld [vmem:[#allocation2 + $0x178] sm:$0xff]
    %v88 = vld [vmem:[#allocation2 + $0x180] sm:$0xff]
    %v89 = vld [vmem:[#allocation2 + $0x188] sm:$0xff]
    %v90 = vld [vmem:[#allocation2 + $0x190] sm:$0xff]
    %v91 = vld [vmem:[#allocation2 + $0x198] sm:$0xff]
    %v92 = vld [vmem:[#allocation2 + $0x1a0] sm:$0xff]
    %v93 = vld [vmem:[#allocation2 + $0x1a8] sm:$0xff]
    %v94 = vld [vmem:[#allocation2 + $0x1b0] sm:$0xff]
    %v95 = vld [vmem:[#allocation2 + $0x1b8] sm:$0xff]
    %v96 = vld [vmem:[#allocation2 + $0x1c0] sm:$0xff]
    %v97 = vld [vmem:[#allocation2 + $0x1c8] sm:$0xff]
    %v98 = vld [vmem:[#allocation2 + $0x1d0] sm:$0xff]
    %v99 = vld [vmem:[#allocation2 + $0x1d8] sm:$0xff]
    %v100 = vld [vmem:[#allocation2 + $0x1e0] sm:$0xff]
    %v101 = vld [vmem:[#allocation2 + $0x1e8] sm:$0xff]
    %v102 = vld [vmem:[#allocation2 + $0x1f0] sm:$0xff]
    %v103 = vld [vmem:[#allocation2 + $0x1f8] sm:$0xff]
    %v104 = vld [vmem:[#allocation5] sm:$0xff]
    %v105 = vld [vmem:[#allocation5 + $0x8] sm:$0xff]
    %v106 = vld [vmem:[#allocation5 + $0x10] sm:$0xff]
    %v107 = vld [vmem:[#allocation5 + $0x18] sm:$0xff]
    %v108 = vld [vmem:[#allocation5 + $0x20] sm:$0xff]
    %v109 = vld [vmem:[#allocation5 + $0x28] sm:$0xff]
    %v110 = vld [vmem:[#allocation5 + $0x30] sm:$0xff]
    %v111 = vld [vmem:[#allocation5 + $0x38] sm:$0xff]
    %v112 = vld [vmem:[#allocation5 + $0x40] sm:$0xff]
    %v113 = vld [vmem:[#allocation5 + $0x48] sm:$0xff]
    %v114 = vld [vmem:[#allocation5 + $0x50] sm:$0xff]
    %v115 = vld [vmem:[#allocation5 + $0x58] sm:$0xff]
    %v116 = vld [vmem:[#allocation5 + $0x60] sm:$0xff]
    %v117 = vld [vmem:[#allocation5 + $0x68] sm:$0xff]
    %v118 = vld [vmem:[#allocation5 + $0x70] sm:$0xff]
    %v119 = vld [vmem:[#allocation5 + $0x78] sm:$0xff]
    %v120 = vld [vmem:[#allocation5 + $0x80] sm:$0xff]
    %v121 = vld [vmem:[#allocation5 + $0x88] sm:$0xff]
    %v122 = vld [vmem:[#allocation5 + $0x90] sm:$0xff]
    %v123 = vld [vmem:[#allocation5 + $0x98] sm:$0xff]
    %v124 = vld [vmem:[#allocation5 + $0xa0] sm:$0xff]
    %v125 = vld [vmem:[#allocation5 + $0xa8] sm:$0xff]
    %v126 = vld [vmem:[#allocation5 + $0xb0] sm:$0xff]
    %v127 = vld [vmem:[#allocation5 + $0xb8] sm:$0xff]
    %v128 = vld [vmem:[#allocation5 + $0xc0] sm:$0xff]
    %v129 = vld [vmem:[#allocation5 + $0xc8] sm:$0xff]
    %v130 = vld [vmem:[#allocation5 + $0xd0] sm:$0xff]
    %v131 = vld [vmem:[#allocation5 + $0xd8] sm:$0xff]
    %v132 = vld [vmem:[#allocation5 + $0xe0] sm:$0xff]
    %v133 = vld [vmem:[#allocation5 + $0xe8] sm:$0xff]
    %v134 = vld [vmem:[#allocation5 + $0xf0] sm:$0xff]
    %v135 = vld [vmem:[#allocation5 + $0xf8] sm:$0xff]
    %v136 = vld [vmem:[#allocation5 + $0x100] sm:$0xff]
    %v137 = vld [vmem:[#allocation5 + $0x108] sm:$0xff]
    %v138 = vld [vmem:[#allocation5 + $0x110] sm:$0xff]
    %v139 = vld [vmem:[#allocation5 + $0x118] sm:$0xff]
    %v140 = vld [vmem:[#allocation5 + $0x120] sm:$0xff]
    %v141 = vld [vmem:[#allocation5 + $0x128] sm:$0xff]
    %v142 = vld [vmem:[#allocation5 + $0x130] sm:$0xff]
    %v143 = vld [vmem:[#allocation5 + $0x138] sm:$0xff]
    %v144 = vld [vmem:[#allocation5 + $0x140] sm:$0xff]
    %v145 = vld [vmem:[#allocation5 + $0x148] sm:$0xff]
    %v146 = vld [vmem:[#allocation5 + $0x150] sm:$0xff]
    %v147 = vld [vmem:[#allocation5 + $0x158] sm:$0xff]
    %v148 = vld [vmem:[#allocation5 + $0x160] sm:$0xff]
    %v149 = vld [vmem:[#allocation5 + $0x168] sm:$0xff]
    %v150 = vld [vmem:[#allocation5 + $0x170] sm:$0xff]
    %v151 = vld [vmem:[#allocation5 + $0x178] sm:$0xff]
    %v152 = vld [vmem:[#allocation5 + $0x180] sm:$0xff]
    %v153 = vld [vmem:[#allocation5 + $0x188] sm:$0xff]
    %v154 = vld [vmem:[#allocation5 + $0x190] sm:$0xff]
    %v155 = vld [vmem:[#allocation5 + $0x198] sm:$0xff]
    %v156 = vld [vmem:[#allocation5 + $0x1a0] sm:$0xff]
    %v157 = vld [vmem:[#allocation5 + $0x1a8] sm:$0xff]
    %v158 = vld [vmem:[#allocation5 + $0x1b0] sm:$0xff]
    %v159 = vld [vmem:[#allocation5 + $0x1b8] sm:$0xff]
    %v160 = vld [vmem:[#allocation5 + $0x1c0] sm:$0xff]
    %v161 = vld [vmem:[#allocation5 + $0x1c8] sm:$0xff]
    %v162 = vld [vmem:[#allocation5 + $0x1d0] sm:$0xff]
    %v163 = vld [vmem:[#allocation5 + $0x1d8] sm:$0xff]
    %v164 = vld [vmem:[#allocation5 + $0x1e0] sm:$0xff]
    %v165 = vld [vmem:[#allocation5 + $0x1e8] sm:$0xff]
    %v166 = vld [vmem:[#allocation5 + $0x1f0] sm:$0xff]
    %v167 = vld [vmem:[#allocation5 + $0x1f8] sm:$0xff]
    %v168 = vld [vmem:[#allocation5 + $0x200] sm:$0xff]
    %v169 = vld [vmem:[#allocation5 + $0x208] sm:$0xff]
    %v170 = vld [vmem:[#allocation5 + $0x210] sm:$0xff]
    %v171 = vld [vmem:[#allocation5 + $0x218] sm:$0xff]
    %v172 = vld [vmem:[#allocation5 + $0x220] sm:$0xff]
    %v173 = vld [vmem:[#allocation5 + $0x228] sm:$0xff]
    %v174 = vld [vmem:[#allocation5 + $0x230] sm:$0xff]
    %v175 = vld [vmem:[#allocation5 + $0x238] sm:$0xff]
    %v176 = vld [vmem:[#allocation5 + $0x240] sm:$0xff]
    %v177 = vld [vmem:[#allocation5 + $0x248] sm:$0xff]
    %v178 = vld [vmem:[#allocation5 + $0x250] sm:$0xff]
    %v179 = vld [vmem:[#allocation5 + $0x258] sm:$0xff]
    %v180 = vld [vmem:[#allocation5 + $0x260] sm:$0xff]
    %v181 = vld [vmem:[#allocation5 + $0x268] sm:$0xff]
    %v182 = vld [vmem:[#allocation5 + $0x270] sm:$0xff]
    %v183 = vld [vmem:[#allocation5 + $0x278] sm:$0xff]
    %v184 = vld [vmem:[#allocation5 + $0x280] sm:$0xff]
    %v185 = vld [vmem:[#allocation5 + $0x288] sm:$0xff]
    %v186 = vld [vmem:[#allocation5 + $0x290] sm:$0xff]
    %v187 = vld [vmem:[#allocation5 + $0x298] sm:$0xff]
    %v188 = vld [vmem:[#allocation5 + $0x2a0] sm:$0xff]
    %v189 = vld [vmem:[#allocation5 + $0x2a8] sm:$0xff]
    %v190 = vld [vmem:[#allocation5 + $0x2b0] sm:$0xff]
    %v191 = vld [vmem:[#allocation5 + $0x2b8] sm:$0xff]
    %v192 = vld [vmem:[#allocation5 + $0x2c0] sm:$0xff]
    %v193 = vld [vmem:[#allocation5 + $0x2c8] sm:$0xff]
    %v194 = vld [vmem:[#allocation5 + $0x2d0] sm:$0xff]
    %v195 = vld [vmem:[#allocation5 + $0x2d8] sm:$0xff]
    %v196 = vld [vmem:[#allocation5 + $0x2e0] sm:$0xff]
    %v197 = vld [vmem:[#allocation5 + $0x2e8] sm:$0xff]
    %v198 = vld [vmem:[#allocation5 + $0x2f0] sm:$0xff]
    %v199 = vld [vmem:[#allocation5 + $0x2f8] sm:$0xff]
    %v200 = vld [vmem:[#allocation5 + $0x300] sm:$0xff]
    %v201 = vld [vmem:[#allocation5 + $0x308] sm:$0xff]
    %v202 = vld [vmem:[#allocation5 + $0x310] sm:$0xff]
    %v203 = vld [vmem:[#allocation5 + $0x318] sm:$0xff]
    %v204 = vld [vmem:[#allocation5 + $0x320] sm:$0xff]
    %v205 = vld [vmem:[#allocation5 + $0x328] sm:$0xff]
    %v206 = vld [vmem:[#allocation5 + $0x330] sm:$0xff]
    %v207 = vld [vmem:[#allocation5 + $0x338] sm:$0xff]
    %v208 = vld [vmem:[#allocation5 + $0x340] sm:$0xff]
    %v209 = vld [vmem:[#allocation5 + $0x348] sm:$0xff]
    %v210 = vld [vmem:[#allocation5 + $0x350] sm:$0xff]
    %v211 = vld [vmem:[#allocation5 + $0x358] sm:$0xff]
    %v212 = vld [vmem:[#allocation5 + $0x360] sm:$0xff]
    %v213 = vld [vmem:[#allocation5 + $0x368] sm:$0xff]
    %v214 = vld [vmem:[#allocation5 + $0x370] sm:$0xff]
    %v215 = vld [vmem:[#allocation5 + $0x378] sm:$0xff]
    %v216 = vld [vmem:[#allocation5 + $0x380] sm:$0xff]
    %v217 = vld [vmem:[#allocation5 + $0x388] sm:$0xff]
    %v218 = vld [vmem:[#allocation5 + $0x390] sm:$0xff]
    %v219 = vld [vmem:[#allocation5 + $0x398] sm:$0xff]
    %v220 = vld [vmem:[#allocation5 + $0x3a0] sm:$0xff]
    %v221 = vld [vmem:[#allocation5 + $0x3a8] sm:$0xff]
    %v222 = vld [vmem:[#allocation5 + $0x3b0] sm:$0xff]
    %v223 = vld [vmem:[#allocation5 + $0x3b8] sm:$0xff]
    %v224 = vld [vmem:[#allocation5 + $0x3c0] sm:$0xff]
    %v225 = vld [vmem:[#allocation5 + $0x3c8] sm:$0xff]
    %v226 = vld [vmem:[#allocation5 + $0x3d0] sm:$0xff]
    %v227 = vld [vmem:[#allocation5 + $0x3d8] sm:$0xff]
    %v228 = vld [vmem:[#allocation5 + $0x3e0] sm:$0xff]
    %v229 = vld [vmem:[#allocation5 + $0x3e8] sm:$0xff]
    %v230 = vld [vmem:[#allocation5 + $0x3f0] sm:$0xff]
    %v231 = vld [vmem:[#allocation5 + $0x3f8] sm:$0xff]
    %v232 = vld [vmem:[#allocation5 + $0x400] sm:$0xff]
    %v233 = vld [vmem:[#allocation5 + $0x408] sm:$0xff]
    %v234 = vld [vmem:[#allocation5 + $0x410] sm:$0xff]
    %v235 = vld [vmem:[#allocation5 + $0x418] sm:$0xff]
    %v236 = vld [vmem:[#allocation5 + $0x420] sm:$0xff]
    %v237 = vld [vmem:[#allocation5 + $0x428] sm:$0xff]
    %v238 = vld [vmem:[#allocation5 + $0x430] sm:$0xff]
    %v239 = vld [vmem:[#allocation5 + $0x438] sm:$0xff]
    %v240 = vld [vmem:[#allocation5 + $0x440] sm:$0xff]
    %v241 = vld [vmem:[#allocation5 + $0x448] sm:$0xff]
    %v242 = vld [vmem:[#allocation5 + $0x450] sm:$0xff]
    %v243 = vld [vmem:[#allocation5 + $0x458] sm:$0xff]
    %v244 = vld [vmem:[#allocation5 + $0x460] sm:$0xff]
    %v245 = vld [vmem:[#allocation5 + $0x468] sm:$0xff]
    %v246 = vld [vmem:[#allocation5 + $0x470] sm:$0xff]
    %v247 = vld [vmem:[#allocation5 + $0x478] sm:$0xff]
    %v248 = vld [vmem:[#allocation5 + $0x480] sm:$0xff]
    %v249 = vld [vmem:[#allocation5 + $0x488] sm:$0xff]
    %v250 = vld [vmem:[#allocation5 + $0x490] sm:$0xff]
    %v251 = vld [vmem:[#allocation5 + $0x498] sm:$0xff]
    %v252 = vld [vmem:[#allocation5 + $0x4a0] sm:$0xff]
    %v253 = vld [vmem:[#allocation5 + $0x4a8] sm:$0xff]
    %v254 = vld [vmem:[#allocation5 + $0x4b0] sm:$0xff]
    %v255 = vld [vmem:[#allocation5 + $0x4b8] sm:$0xff]
    %v256 = vld [vmem:[#allocation5 + $0x4c0] sm:$0xff]
    %v257 = vld [vmem:[#allocation5 + $0x4c8] sm:$0xff]
    %v258 = vld [vmem:[#allocation5 + $0x4d0] sm:$0xff]
    %v259 = vld [vmem:[#allocation5 + $0x4d8] sm:$0xff]
    %v260 = vld [vmem:[#allocation5 + $0x4e0] sm:$0xff]
    %v261 = vld [vmem:[#allocation5 + $0x4e8] sm:$0xff]
    %v262 = vld [vmem:[#allocation5 + $0x4f0] sm:$0xff]
    %v263 = vld [vmem:[#allocation5 + $0x4f8] sm:$0xff]
    %v264 = vld [vmem:[#allocation5 + $0x500] sm:$0xff]
    %v265 = vld [vmem:[#allocation5 + $0x508] sm:$0xff]
    %v266 = vld [vmem:[#allocation5 + $0x510] sm:$0xff]
    %v267 = vld [vmem:[#allocation5 + $0x518] sm:$0xff]
    %v268 = vld [vmem:[#allocation5 + $0x520] sm:$0xff]
    %v269 = vld [vmem:[#allocation5 + $0x528] sm:$0xff]
    %v270 = vld [vmem:[#allocation5 + $0x530] sm:$0xff]
    %v271 = vld [vmem:[#allocation5 + $0x538] sm:$0xff]
    %v272 = vld [vmem:[#allocation5 + $0x540] sm:$0xff]
    %v273 = vld [vmem:[#allocation5 + $0x548] sm:$0xff]
    %v274 = vld [vmem:[#allocation5 + $0x550] sm:$0xff]
    %v275 = vld [vmem:[#allocation5 + $0x558] sm:$0xff]
    %v276 = vld [vmem:[#allocation5 + $0x560] sm:$0xff]
    %v277 = vld [vmem:[#allocation5 + $0x568] sm:$0xff]
    %v278 = vld [vmem:[#allocation5 + $0x570] sm:$0xff]
    %v279 = vld [vmem:[#allocation5 + $0x578] sm:$0xff]
    %v280 = vld [vmem:[#allocation5 + $0x580] sm:$0xff]
    %v281 = vld [vmem:[#allocation5 + $0x588] sm:$0xff]
    %v282 = vld [vmem:[#allocation5 + $0x590] sm:$0xff]
    %v283 = vld [vmem:[#allocation5 + $0x598] sm:$0xff]
    %v284 = vld [vmem:[#allocation5 + $0x5a0] sm:$0xff]
    %v285 = vld [vmem:[#allocation5 + $0x5a8] sm:$0xff]
    %v286 = vld [vmem:[#allocation5 + $0x5b0] sm:$0xff]
    %v287 = vld [vmem:[#allocation5 + $0x5b8] sm:$0xff]
    %v288 = vld [vmem:[#allocation5 + $0x5c0] sm:$0xff]
    %v289 = vld [vmem:[#allocation5 + $0x5c8] sm:$0xff]
    %v290 = vld [vmem:[#allocation5 + $0x5d0] sm:$0xff]
    %v291 = vld [vmem:[#allocation5 + $0x5d8] sm:$0xff]
    %v292 = vld [vmem:[#allocation5 + $0x5e0] sm:$0xff]
    %v293 = vld [vmem:[#allocation5 + $0x5e8] sm:$0xff]
    %v294 = vld [vmem:[#allocation5 + $0x5f0] sm:$0xff]
    %v295 = vld [vmem:[#allocation5 + $0x5f8] sm:$0xff]
    %v296 = vld [vmem:[#allocation5 + $0x600] sm:$0xff]
    %v297 = vld [vmem:[#allocation5 + $0x608] sm:$0xff]
    %v298 = vld [vmem:[#allocation5 + $0x610] sm:$0xff]
    %v299 = vld [vmem:[#allocation5 + $0x618] sm:$0xff]
    %v300 = vld [vmem:[#allocation5 + $0x620] sm:$0xff]
    %v301 = vld [vmem:[#allocation5 + $0x628] sm:$0xff]
    %v302 = vld [vmem:[#allocation5 + $0x630] sm:$0xff]
    %v303 = vld [vmem:[#allocation5 + $0x638] sm:$0xff]
    %v304 = vld [vmem:[#allocation5 + $0x640] sm:$0xff]
    %v305 = vld [vmem:[#allocation5 + $0x648] sm:$0xff]
    %v306 = vld [vmem:[#allocation5 + $0x650] sm:$0xff]
    %v307 = vld [vmem:[#allocation5 + $0x658] sm:$0xff]
    %v308 = vld [vmem:[#allocation5 + $0x660] sm:$0xff]
    %v309 = vld [vmem:[#allocation5 + $0x668] sm:$0xff]
    %v310 = vld [vmem:[#allocation5 + $0x670] sm:$0xff]
    %v311 = vld [vmem:[#allocation5 + $0x678] sm:$0xff]
    %v312 = vld [vmem:[#allocation5 + $0x680] sm:$0xff]
    %v313 = vld [vmem:[#allocation5 + $0x688] sm:$0xff]
    %v314 = vld [vmem:[#allocation5 + $0x690] sm:$0xff]
    %v315 = vld [vmem:[#allocation5 + $0x698] sm:$0xff]
    %v316 = vld [vmem:[#allocation5 + $0x6a0] sm:$0xff]
    %v317 = vld [vmem:[#allocation5 + $0x6a8] sm:$0xff]
    %v318 = vld [vmem:[#allocation5 + $0x6b0] sm:$0xff]
    %v319 = vld [vmem:[#allocation5 + $0x6b8] sm:$0xff]
    %v320 = vld [vmem:[#allocation5 + $0x6c0] sm:$0xff]
    %v321 = vld [vmem:[#allocation5 + $0x6c8] sm:$0xff]
    %v322 = vld [vmem:[#allocation5 + $0x6d0] sm:$0xff]
    %v323 = vld [vmem:[#allocation5 + $0x6d8] sm:$0xff]
    %v324 = vld [vmem:[#allocation5 + $0x6e0] sm:$0xff]
    %v325 = vld [vmem:[#allocation5 + $0x6e8] sm:$0xff]
    %v326 = vld [vmem:[#allocation5 + $0x6f0] sm:$0xff]
    %v327 = vld [vmem:[#allocation5 + $0x6f8] sm:$0xff]
    %v328 = vld [vmem:[#allocation5 + $0x700] sm:$0xff]
    %v329 = vld [vmem:[#allocation5 + $0x708] sm:$0xff]
    %v330 = vld [vmem:[#allocation5 + $0x710] sm:$0xff]
    %v331 = vld [vmem:[#allocation5 + $0x718] sm:$0xff]
    %v332 = vld [vmem:[#allocation5 + $0x720] sm:$0xff]
    %v333 = vld [vmem:[#allocation5 + $0x728] sm:$0xff]
    %v334 = vld [vmem:[#allocation5 + $0x730] sm:$0xff]
    %v335 = vld [vmem:[#allocation5 + $0x738] sm:$0xff]
    %v336 = vld [vmem:[#allocation5 + $0x740] sm:$0xff]
    %v337 = vld [vmem:[#allocation5 + $0x748] sm:$0xff]
    %v338 = vld [vmem:[#allocation5 + $0x750] sm:$0xff]
    %v339 = vld [vmem:[#allocation5 + $0x758] sm:$0xff]
    %v340 = vld [vmem:[#allocation5 + $0x760] sm:$0xff]
    %v341 = vld [vmem:[#allocation5 + $0x768] sm:$0xff]
    %v342 = vld [vmem:[#allocation5 + $0x770] sm:$0xff]
    %v343 = vld [vmem:[#allocation5 + $0x778] sm:$0xff]
    %v344 = vld [vmem:[#allocation5 + $0x780] sm:$0xff]
    %v345 = vld [vmem:[#allocation5 + $0x788] sm:$0xff]
    %v346 = vld [vmem:[#allocation5 + $0x790] sm:$0xff]
    %v347 = vld [vmem:[#allocation5 + $0x798] sm:$0xff]
    %v348 = vld [vmem:[#allocation5 + $0x7a0] sm:$0xff]
    %v349 = vld [vmem:[#allocation5 + $0x7a8] sm:$0xff]
    %v350 = vld [vmem:[#allocation5 + $0x7b0] sm:$0xff]
    %v351 = vld [vmem:[#allocation5 + $0x7b8] sm:$0xff]
    %v352 = vld [vmem:[#allocation5 + $0x7c0] sm:$0xff]
    %v353 = vld [vmem:[#allocation5 + $0x7c8] sm:$0xff]
    %v354 = vld [vmem:[#allocation5 + $0x7d0] sm:$0xff]
    %v355 = vld [vmem:[#allocation5 + $0x7d8] sm:$0xff]
    %v356 = vld [vmem:[#allocation5 + $0x7e0] sm:$0xff]
    %v357 = vld [vmem:[#allocation5 + $0x7e8] sm:$0xff]
    %v358 = vld [vmem:[#allocation5 + $0x7f0] sm:$0xff]
    %v359 = vld [vmem:[#allocation5 + $0x7f8] sm:$0xff]
    %v360 = vld [vmem:[#allocation5 + $0x800] sm:$0xff]
    %v361 = vld [vmem:[#allocation5 + $0x808] sm:$0xff]
    %v362 = vld [vmem:[#allocation5 + $0x810] sm:$0xff]
    %v363 = vld [vmem:[#allocation5 + $0x818] sm:$0xff]
    %v364 = vld [vmem:[#allocation5 + $0x820] sm:$0xff]
    %v365 = vld [vmem:[#allocation5 + $0x828] sm:$0xff]
    %v366 = vld [vmem:[#allocation5 + $0x830] sm:$0xff]
    %v367 = vld [vmem:[#allocation5 + $0x838] sm:$0xff]
    %v368 = vld [vmem:[#allocation5 + $0x840] sm:$0xff]
    %v369 = vld [vmem:[#allocation5 + $0x848] sm:$0xff]
    %v370 = vld [vmem:[#allocation5 + $0x850] sm:$0xff]
    %v371 = vld [vmem:[#allocation5 + $0x858] sm:$0xff]
    %v372 = vld [vmem:[#allocation5 + $0x860] sm:$0xff]
    %v373 = vld [vmem:[#allocation5 + $0x868] sm:$0xff]
    %v374 = vld [vmem:[#allocation5 + $0x870] sm:$0xff]
    %v375 = vld [vmem:[#allocation5 + $0x878] sm:$0xff]
    %v376 = vld [vmem:[#allocation5 + $0x880] sm:$0xff]
    %v377 = vld [vmem:[#allocation5 + $0x888] sm:$0xff]
    %v378 = vld [vmem:[#allocation5 + $0x890] sm:$0xff]
    %v379 = vld [vmem:[#allocation5 + $0x898] sm:$0xff]
    %v380 = vld [vmem:[#allocation5 + $0x8a0] sm:$0xff]
    %v381 = vld [vmem:[#allocation5 + $0x8a8] sm:$0xff]
    %v382 = vld [vmem:[#allocation5 + $0x8b0] sm:$0xff]
    %v383 = vld [vmem:[#allocation5 + $0x8b8] sm:$0xff]
    %v384 = vld [vmem:[#allocation5 + $0x8c0] sm:$0xff]
    %v385 = vld [vmem:[#allocation5 + $0x8c8] sm:$0xff]
    %v386 = vld [vmem:[#allocation5 + $0x8d0] sm:$0xff]
    %v387 = vld [vmem:[#allocation5 + $0x8d8] sm:$0xff]
    %v388 = vld [vmem:[#allocation5 + $0x8e0] sm:$0xff]
    %v389 = vld [vmem:[#allocation5 + $0x8e8] sm:$0xff]
    %v390 = vld [vmem:[#allocation5 + $0x8f0] sm:$0xff]
    %v391 = vld [vmem:[#allocation5 + $0x8f8] sm:$0xff]
    %v392 = vld [vmem:[#allocation5 + $0x900] sm:$0xff]
    %v393 = vld [vmem:[#allocation5 + $0x908] sm:$0xff]
    %v394 = vld [vmem:[#allocation5 + $0x910] sm:$0xff]
    %v395 = vld [vmem:[#allocation5 + $0x918] sm:$0xff]
    %v396 = vld [vmem:[#allocation5 + $0x920] sm:$0xff]
    %v397 = vld [vmem:[#allocation5 + $0x928] sm:$0xff]
    %v398 = vld [vmem:[#allocation5 + $0x930] sm:$0xff]
    %v399 = vld [vmem:[#allocation5 + $0x938] sm:$0xff]
    %v400 = vld [vmem:[#allocation5 + $0x940] sm:$0xff]
    %v401 = vld [vmem:[#allocation5 + $0x948] sm:$0xff]
    %v402 = vld [vmem:[#allocation5 + $0x950] sm:$0xff]
    %v403 = vld [vmem:[#allocation5 + $0x958] sm:$0xff]
    %v404 = vld [vmem:[#allocation5 + $0x960] sm:$0xff]
    %v405 = vld [vmem:[#allocation5 + $0x968] sm:$0xff]
    %v406 = vld [vmem:[#allocation5 + $0x970] sm:$0xff]
    %v407 = vld [vmem:[#allocation5 + $0x978] sm:$0xff]
    %v408 = vld [vmem:[#allocation5 + $0x980] sm:$0xff]
    %v409 = vld [vmem:[#allocation5 + $0x988] sm:$0xff]
    %v410 = vld [vmem:[#allocation5 + $0x990] sm:$0xff]
    %v411 = vld [vmem:[#allocation5 + $0x998] sm:$0xff]
    %v412 = vld [vmem:[#allocation5 + $0x9a0] sm:$0xff]
    %v413 = vld [vmem:[#allocation5 + $0x9a8] sm:$0xff]
    %v414 = vld [vmem:[#allocation5 + $0x9b0] sm:$0xff]
    %v415 = vld [vmem:[#allocation5 + $0x9b8] sm:$0xff]
    %v416 = vld [vmem:[#allocation5 + $0x9c0] sm:$0xff]
    %v417 = vld [vmem:[#allocation5 + $0x9c8] sm:$0xff]
    %v418 = vld [vmem:[#allocation5 + $0x9d0] sm:$0xff]
    %v419 = vld [vmem:[#allocation5 + $0x9d8] sm:$0xff]
    %v420 = vld [vmem:[#allocation5 + $0x9e0] sm:$0xff]
    %v421 = vld [vmem:[#allocation5 + $0x9e8] sm:$0xff]
    %v422 = vld [vmem:[#allocation5 + $0x9f0] sm:$0xff]
    %v423 = vld [vmem:[#allocation5 + $0x9f8] sm:$0xff]
    %v424 = vld [vmem:[#allocation5 + $0xa00] sm:$0xff]
    %v425 = vld [vmem:[#allocation5 + $0xa08] sm:$0xff]
    %v426 = vld [vmem:[#allocation5 + $0xa10] sm:$0xff]
    %v427 = vld [vmem:[#allocation5 + $0xa18] sm:$0xff]
    %v428 = vld [vmem:[#allocation5 + $0xa20] sm:$0xff]
    %v429 = vld [vmem:[#allocation5 + $0xa28] sm:$0xff]
    %v430 = vld [vmem:[#allocation5 + $0xa30] sm:$0xff]
    %v431 = vld [vmem:[#allocation5 + $0xa38] sm:$0xff]
    %v432 = vld [vmem:[#allocation5 + $0xa40] sm:$0xff]
    %v433 = vld [vmem:[#allocation5 + $0xa48] sm:$0xff]
    %v434 = vld [vmem:[#allocation5 + $0xa50] sm:$0xff]
    %v435 = vld [vmem:[#allocation5 + $0xa58] sm:$0xff]
    %v436 = vld [vmem:[#allocation5 + $0xa60] sm:$0xff]
    %v437 = vld [vmem:[#allocation5 + $0xa68] sm:$0xff]
    %v438 = vld [vmem:[#allocation5 + $0xa70] sm:$0xff]
    %v439 = vld [vmem:[#allocation5 + $0xa78] sm:$0xff]
    %v440 = vld [vmem:[#allocation5 + $0xa80] sm:$0xff]
    %v441 = vld [vmem:[#allocation5 + $0xa88] sm:$0xff]
    %v442 = vld [vmem:[#allocation5 + $0xa90] sm:$0xff]
    %v443 = vld [vmem:[#allocation5 + $0xa98] sm:$0xff]
    %v444 = vld [vmem:[#allocation5 + $0xaa0] sm:$0xff]
    %v445 = vld [vmem:[#allocation5 + $0xaa8] sm:$0xff]
    %v446 = vld [vmem:[#allocation5 + $0xab0] sm:$0xff]
    %v447 = vld [vmem:[#allocation5 + $0xab8] sm:$0xff]
    %v448 = vld [vmem:[#allocation5 + $0xac0] sm:$0xff]
    %v449 = vld [vmem:[#allocation5 + $0xac8] sm:$0xff]
    %v450 = vld [vmem:[#allocation5 + $0xad0] sm:$0xff]
    %v451 = vld [vmem:[#allocation5 + $0xad8] sm:$0xff]
    %v452 = vld [vmem:[#allocation5 + $0xae0] sm:$0xff]
    %v453 = vld [vmem:[#allocation5 + $0xae8] sm:$0xff]
    %v454 = vld [vmem:[#allocation5 + $0xaf0] sm:$0xff]
    %v455 = vld [vmem:[#allocation5 + $0xaf8] sm:$0xff]
    %v456 = vld [vmem:[#allocation5 + $0xb00] sm:$0xff]
    %v457 = vld [vmem:[#allocation5 + $0xb08] sm:$0xff]
    %v458 = vld [vmem:[#allocation5 + $0xb10] sm:$0xff]
    %v459 = vld [vmem:[#allocation5 + $0xb18] sm:$0xff]
    %v460 = vld [vmem:[#allocation5 + $0xb20] sm:$0xff]
    %v461 = vld [vmem:[#allocation5 + $0xb28] sm:$0xff]
    %v462 = vld [vmem:[#allocation5 + $0xb30] sm:$0xff]
    %v463 = vld [vmem:[#allocation5 + $0xb38] sm:$0xff]
    %v464 = vld [vmem:[#allocation5 + $0xb40] sm:$0xff]
    %v465 = vld [vmem:[#allocation5 + $0xb48] sm:$0xff]
    %v466 = vld [vmem:[#allocation5 + $0xb50] sm:$0xff]
    %v467 = vld [vmem:[#allocation5 + $0xb58] sm:$0xff]
    %v468 = vld [vmem:[#allocation5 + $0xb60] sm:$0xff]
    %v469 = vld [vmem:[#allocation5 + $0xb68] sm:$0xff]
    %v470 = vld [vmem:[#allocation5 + $0xb70] sm:$0xff]
    %v471 = vld [vmem:[#allocation5 + $0xb78] sm:$0xff]
    %v472 = vld [vmem:[#allocation5 + $0xb80] sm:$0xff]
    %v473 = vld [vmem:[#allocation5 + $0xb88] sm:$0xff]
    %v474 = vld [vmem:[#allocation5 + $0xb90] sm:$0xff]
    %v475 = vld [vmem:[#allocation5 + $0xb98] sm:$0xff]
    %v476 = vld [vmem:[#allocation5 + $0xba0] sm:$0xff]
    %v477 = vld [vmem:[#allocation5 + $0xba8] sm:$0xff]
    %v478 = vld [vmem:[#allocation5 + $0xbb0] sm:$0xff]
    %v479 = vld [vmem:[#allocation5 + $0xbb8] sm:$0xff]
    %v480 = vld [vmem:[#allocation5 + $0xbc0] sm:$0xff]
    %v481 = vld [vmem:[#allocation5 + $0xbc8] sm:$0xff]
    %v482 = vld [vmem:[#allocation5 + $0xbd0] sm:$0xff]
    %v483 = vld [vmem:[#allocation5 + $0xbd8] sm:$0xff]
    %v484 = vld [vmem:[#allocation5 + $0xbe0] sm:$0xff]
    %v485 = vld [vmem:[#allocation5 + $0xbe8] sm:$0xff]
    %v486 = vld [vmem:[#allocation5 + $0xbf0] sm:$0xff]
    %v487 = vld [vmem:[#allocation5 + $0xbf8] sm:$0xff]
    %v552 = vunpack.c.l.b16 %v40
    %v553 = vunpack.c.h.b16 %v40
    %v554 = vunpack.c.l.b16 %v41
    %v555 = vunpack.c.h.b16 %v41
    %v556 = vunpack.c.l.b16 %v42
    %v557 = vunpack.c.h.b16 %v42
    %v558 = vunpack.c.l.b16 %v43
    %v559 = vunpack.c.h.b16 %v43
    %v560 = vunpack.c.l.b16 %v44
    %v561 = vunpack.c.h.b16 %v44
    %v562 = vunpack.c.l.b16 %v45
    %v563 = vunpack.c.h.b16 %v45
    %v564 = vunpack.c.l.b16 %v46
    %v565 = vunpack.c.h.b16 %v46
    %v566 = vunpack.c.l.b16 %v47
    %v567 = vunpack.c.h.b16 %v47
    %v568 = vunpack.c.l.b16 %v48
    %v569 = vunpack.c.h.b16 %v48
    %v570 = vunpack.c.l.b16 %v49
    %v571 = vunpack.c.h.b16 %v49
    %v572 = vunpack.c.l.b16 %v50
    %v573 = vunpack.c.h.b16 %v50
    %v574 = vunpack.c.l.b16 %v51
    %v575 = vunpack.c.h.b16 %v51
    %v576 = vunpack.c.l.b16 %v52
    %v577 = vunpack.c.h.b16 %v52
    %v578 = vunpack.c.l.b16 %v53
    %v579 = vunpack.c.h.b16 %v53
    %v580 = vunpack.c.l.b16 %v54
    %v581 = vunpack.c.h.b16 %v54
    %v582 = vunpack.c.l.b16 %v55
    %v583 = vunpack.c.h.b16 %v55
    %v584 = vunpack.c.l.b16 %v56
    %v585 = vunpack.c.h.b16 %v56
    %v586 = vunpack.c.l.b16 %v57
    %v587 = vunpack.c.h.b16 %v57
    %v588 = vunpack.c.l.b16 %v58
    %v589 = vunpack.c.h.b16 %v58
    %v590 = vunpack.c.l.b16 %v59
    %v591 = vunpack.c.h.b16 %v59
    %v592 = vunpack.c.l.b16 %v60
    %v593 = vunpack.c.h.b16 %v60
    %v594 = vunpack.c.l.b16 %v61
    %v595 = vunpack.c.h.b16 %v61
    %v596 = vunpack.c.l.b16 %v62
    %v597 = vunpack.c.h.b16 %v62
    %v598 = vunpack.c.l.b16 %v63
    %v599 = vunpack.c.h.b16 %v63
    %v600 = vunpack.c.l.b16 %v64
    %v601 = vunpack.c.h.b16 %v64
    %v602 = vunpack.c.l.b16 %v65
    %v603 = vunpack.c.h.b16 %v65
    %v604 = vunpack.c.l.b16 %v66
    %v605 = vunpack.c.h.b16 %v66
    %v606 = vunpack.c.l.b16 %v67
    %v607 = vunpack.c.h.b16 %v67
    %v608 = vunpack.c.l.b16 %v68
    %v609 = vunpack.c.h.b16 %v68
    %v610 = vunpack.c.l.b16 %v69
    %v611 = vunpack.c.h.b16 %v69
    %v612 = vunpack.c.l.b16 %v70
    %v613 = vunpack.c.h.b16 %v70
    %v614 = vunpack.c.l.b16 %v71
    %v615 = vunpack.c.h.b16 %v71
    %v616 = vunpack.c.l.b16 %v72
    %v617 = vunpack.c.h.b16 %v72
    %v618 = vunpack.c.l.b16 %v73
    %v619 = vunpack.c.h.b16 %v73
    %v620 = vunpack.c.l.b16 %v74
    %v621 = vunpack.c.h.b16 %v74
    %v622 = vunpack.c.l.b16 %v75
    %v623 = vunpack.c.h.b16 %v75
    %v624 = vunpack.c.l.b16 %v76
    %v625 = vunpack.c.h.b16 %v76
    %v626 = vunpack.c.l.b16 %v77
    %v627 = vunpack.c.h.b16 %v77
    %v628 = vunpack.c.l.b16 %v78
    %v629 = vunpack.c.h.b16 %v78
    %v630 = vunpack.c.l.b16 %v79
    %v631 = vunpack.c.h.b16 %v79
    %v632 = vunpack.c.l.b16 %v80
    %v633 = vunpack.c.h.b16 %v80
    %v634 = vunpack.c.l.b16 %v81
    %v635 = vunpack.c.h.b16 %v81
    %v636 = vunpack.c.l.b16 %v82
    %v637 = vunpack.c.h.b16 %v82
    %v638 = vunpack.c.l.b16 %v83
    %v639 = vunpack.c.h.b16 %v83
    %v640 = vunpack.c.l.b16 %v84
    %v641 = vunpack.c.h.b16 %v84
    %v642 = vunpack.c.l.b16 %v85
    %v643 = vunpack.c.h.b16 %v85
    %v644 = vunpack.c.l.b16 %v86
    %v645 = vunpack.c.h.b16 %v86
    %v646 = vunpack.c.l.b16 %v87
    %v647 = vunpack.c.h.b16 %v87
    %v648 = vunpack.c.l.b16 %v88
    %v649 = vunpack.c.h.b16 %v88
    %v650 = vunpack.c.l.b16 %v89
    %v651 = vunpack.c.h.b16 %v89
    %v652 = vunpack.c.l.b16 %v90
    %v653 = vunpack.c.h.b16 %v90
    %v654 = vunpack.c.l.b16 %v91
    %v655 = vunpack.c.h.b16 %v91
    %v656 = vunpack.c.l.b16 %v92
    %v657 = vunpack.c.h.b16 %v92
    %v658 = vunpack.c.l.b16 %v93
    %v659 = vunpack.c.h.b16 %v93
    %v660 = vunpack.c.l.b16 %v94
    %v661 = vunpack.c.h.b16 %v94
    %v662 = vunpack.c.l.b16 %v95
    %v663 = vunpack.c.h.b16 %v95
    %v664 = vunpack.c.l.b16 %v96
    %v665 = vunpack.c.h.b16 %v96
    %v666 = vunpack.c.l.b16 %v97
    %v667 = vunpack.c.h.b16 %v97
    %v668 = vunpack.c.l.b16 %v98
    %v669 = vunpack.c.h.b16 %v98
    %v670 = vunpack.c.l.b16 %v99
    %v671 = vunpack.c.h.b16 %v99
    %v672 = vunpack.c.l.b16 %v100
    %v673 = vunpack.c.h.b16 %v100
    %v674 = vunpack.c.l.b16 %v101
    %v675 = vunpack.c.h.b16 %v101
    %v676 = vunpack.c.l.b16 %v102
    %v677 = vunpack.c.h.b16 %v102
    %v678 = vunpack.c.l.b16 %v103
    %v679 = vunpack.c.h.b16 %v103
    %v680 = vpack.c.b16 %v556, %v552
    %v681 = vpack.c.b16 %v557, %v553
    %v682 = vpack.c.b16 %v558, %v554
    %v683 = vpack.c.b16 %v559, %v555
    %v684 = vpack.c.b16 %v564, %v560
    %v685 = vpack.c.b16 %v565, %v561
    %v686 = vpack.c.b16 %v566, %v562
    %v687 = vpack.c.b16 %v567, %v563
    %v688 = vpack.c.b16 %v572, %v568
    %v689 = vpack.c.b16 %v573, %v569
    %v690 = vpack.c.b16 %v574, %v570
    %v691 = vpack.c.b16 %v575, %v571
    %v692 = vpack.c.b16 %v580, %v576
    %v693 = vpack.c.b16 %v581, %v577
    %v694 = vpack.c.b16 %v582, %v578
    %v695 = vpack.c.b16 %v583, %v579
    %v696 = vpack.c.b16 %v588, %v584
    %v697 = vpack.c.b16 %v589, %v585
    %v698 = vpack.c.b16 %v590, %v586
    %v699 = vpack.c.b16 %v591, %v587
    %v700 = vpack.c.b16 %v596, %v592
    %v701 = vpack.c.b16 %v597, %v593
    %v702 = vpack.c.b16 %v598, %v594
    %v703 = vpack.c.b16 %v599, %v595
    %v704 = vpack.c.b16 %v604, %v600
    %v705 = vpack.c.b16 %v605, %v601
    %v706 = vpack.c.b16 %v606, %v602
    %v707 = vpack.c.b16 %v607, %v603
    %v708 = vpack.c.b16 %v612, %v608
    %v709 = vpack.c.b16 %v613, %v609
    %v710 = vpack.c.b16 %v614, %v610
    %v711 = vpack.c.b16 %v615, %v611
    %v712 = vpack.c.b16 %v620, %v616
    %v713 = vpack.c.b16 %v621, %v617
    %v714 = vpack.c.b16 %v622, %v618
    %v715 = vpack.c.b16 %v623, %v619
    %v716 = vpack.c.b16 %v628, %v624
    %v717 = vpack.c.b16 %v629, %v625
    %v718 = vpack.c.b16 %v630, %v626
    %v719 = vpack.c.b16 %v631, %v627
    %v720 = vpack.c.b16 %v636, %v632
    %v721 = vpack.c.b16 %v637, %v633
    %v722 = vpack.c.b16 %v638, %v634
    %v723 = vpack.c.b16 %v639, %v635
    %v724 = vpack.c.b16 %v644, %v640
    %v725 = vpack.c.b16 %v645, %v641
    %v726 = vpack.c.b16 %v646, %v642
    %v727 = vpack.c.b16 %v647, %v643
    %v728 = vpack.c.b16 %v652, %v648
    %v729 = vpack.c.b16 %v653, %v649
    %v730 = vpack.c.b16 %v654, %v650
    %v731 = vpack.c.b16 %v655, %v651
    %v732 = vpack.c.b16 %v660, %v656
    %v733 = vpack.c.b16 %v661, %v657
    %v734 = vpack.c.b16 %v662, %v658
    %v735 = vpack.c.b16 %v663, %v659
    %v736 = vpack.c.b16 %v668, %v664
    %v737 = vpack.c.b16 %v669, %v665
    %v738 = vpack.c.b16 %v670, %v666
    %v739 = vpack.c.b16 %v671, %v667
    %v740 = vpack.c.b16 %v676, %v672
    %v741 = vpack.c.b16 %v677, %v673
    %v742 = vpack.c.b16 %v678, %v674
    %v743 = vpack.c.b16 %v679, %v675
    %v1192 = vunpack.c.l.b16 %v104
    %v1193 = vunpack.c.h.b16 %v104
    %v1194 = vunpack.c.l.b16 %v105
    %v1195 = vunpack.c.h.b16 %v105
    %v1196 = vunpack.c.l.b16 %v106
    %v1197 = vunpack.c.h.b16 %v106
    %v1198 = vunpack.c.l.b16 %v107
    %v1199 = vunpack.c.h.b16 %v107
    %v1200 = vunpack.c.l.b16 %v108
    %v1201 = vunpack.c.h.b16 %v108
    %v1202 = vunpack.c.l.b16 %v109
    %v1203 = vunpack.c.h.b16 %v109
    %v1204 = vunpack.c.l.b16 %v110
    %v1205 = vunpack.c.h.b16 %v110
    %v1206 = vunpack.c.l.b16 %v111
    %v1207 = vunpack.c.h.b16 %v111
    %v1208 = vunpack.c.l.b16 %v112
    %v1209 = vunpack.c.h.b16 %v112
    %v1210 = vunpack.c.l.b16 %v113
    %v1211 = vunpack.c.h.b16 %v113
    %v1212 = vunpack.c.l.b16 %v114
    %v1213 = vunpack.c.h.b16 %v114
    %v1214 = vunpack.c.l.b16 %v115
    %v1215 = vunpack.c.h.b16 %v115
    %v1216 = vunpack.c.l.b16 %v116
    %v1217 = vunpack.c.h.b16 %v116
    %v1218 = vunpack.c.l.b16 %v117
    %v1219 = vunpack.c.h.b16 %v117
    %v1220 = vunpack.c.l.b16 %v118
    %v1221 = vunpack.c.h.b16 %v118
    %v1222 = vunpack.c.l.b16 %v119
    %v1223 = vunpack.c.h.b16 %v119
    %v1224 = vunpack.c.l.b16 %v120
    %v1225 = vunpack.c.h.b16 %v120
    %v1226 = vunpack.c.l.b16 %v121
    %v1227 = vunpack.c.h.b16 %v121
    %v1228 = vunpack.c.l.b16 %v122
    %v1229 = vunpack.c.h.b16 %v122
    %v1230 = vunpack.c.l.b16 %v123
    %v1231 = vunpack.c.h.b16 %v123
    %v1232 = vunpack.c.l.b16 %v124
    %v1233 = vunpack.c.h.b16 %v124
    %v1234 = vunpack.c.l.b16 %v125
    %v1235 = vunpack.c.h.b16 %v125
    %v1236 = vunpack.c.l.b16 %v126
    %v1237 = vunpack.c.h.b16 %v126
    %v1238 = vunpack.c.l.b16 %v127
    %v1239 = vunpack.c.h.b16 %v127
    %v1240 = vunpack.c.l.b16 %v128
    %v1241 = vunpack.c.h.b16 %v128
    %v1242 = vunpack.c.l.b16 %v129
    %v1243 = vunpack.c.h.b16 %v129
    %v1244 = vunpack.c.l.b16 %v130
    %v1245 = vunpack.c.h.b16 %v130
    %v1246 = vunpack.c.l.b16 %v131
    %v1247 = vunpack.c.h.b16 %v131
    %v1248 = vunpack.c.l.b16 %v132
    %v1249 = vunpack.c.h.b16 %v132
    %v1250 = vunpack.c.l.b16 %v133
    %v1251 = vunpack.c.h.b16 %v133
    %v1252 = vunpack.c.l.b16 %v134
    %v1253 = vunpack.c.h.b16 %v134
    %v1254 = vunpack.c.l.b16 %v135
    %v1255 = vunpack.c.h.b16 %v135
    %v1256 = vunpack.c.l.b16 %v136
    %v1257 = vunpack.c.h.b16 %v136
    %v1258 = vunpack.c.l.b16 %v137
    %v1259 = vunpack.c.h.b16 %v137
    %v1260 = vunpack.c.l.b16 %v138
    %v1261 = vunpack.c.h.b16 %v138
    %v1262 = vunpack.c.l.b16 %v139
    %v1263 = vunpack.c.h.b16 %v139
    %v1264 = vunpack.c.l.b16 %v140
    %v1265 = vunpack.c.h.b16 %v140
    %v1266 = vunpack.c.l.b16 %v141
    %v1267 = vunpack.c.h.b16 %v141
    %v1268 = vunpack.c.l.b16 %v142
    %v1269 = vunpack.c.h.b16 %v142
    %v1270 = vunpack.c.l.b16 %v143
    %v1271 = vunpack.c.h.b16 %v143
    %v1272 = vunpack.c.l.b16 %v144
    %v1273 = vunpack.c.h.b16 %v144
    %v1274 = vunpack.c.l.b16 %v145
    %v1275 = vunpack.c.h.b16 %v145
    %v1276 = vunpack.c.l.b16 %v146
    %v1277 = vunpack.c.h.b16 %v146
    %v1278 = vunpack.c.l.b16 %v147
    %v1279 = vunpack.c.h.b16 %v147
    %v1280 = vunpack.c.l.b16 %v148
    %v1281 = vunpack.c.h.b16 %v148
    %v1282 = vunpack.c.l.b16 %v149
    %v1283 = vunpack.c.h.b16 %v149
    %v1284 = vunpack.c.l.b16 %v150
    %v1285 = vunpack.c.h.b16 %v150
    %v1286 = vunpack.c.l.b16 %v151
    %v1287 = vunpack.c.h.b16 %v151
    %v1288 = vunpack.c.l.b16 %v152
    %v1289 = vunpack.c.h.b16 %v152
    %v1290 = vunpack.c.l.b16 %v153
    %v1291 = vunpack.c.h.b16 %v153
    %v1292 = vunpack.c.l.b16 %v154
    %v1293 = vunpack.c.h.b16 %v154
    %v1294 = vunpack.c.l.b16 %v155
    %v1295 = vunpack.c.h.b16 %v155
    %v1296 = vunpack.c.l.b16 %v156
    %v1297 = vunpack.c.h.b16 %v156
    %v1298 = vunpack.c.l.b16 %v157
    %v1299 = vunpack.c.h.b16 %v157
    %v1300 = vunpack.c.l.b16 %v158
    %v1301 = vunpack.c.h.b16 %v158
    %v1302 = vunpack.c.l.b16 %v159
    %v1303 = vunpack.c.h.b16 %v159
    %v1304 = vunpack.c.l.b16 %v160
    %v1305 = vunpack.c.h.b16 %v160
    %v1306 = vunpack.c.l.b16 %v161
    %v1307 = vunpack.c.h.b16 %v161
    %v1308 = vunpack.c.l.b16 %v162
    %v1309 = vunpack.c.h.b16 %v162
    %v1310 = vunpack.c.l.b16 %v163
    %v1311 = vunpack.c.h.b16 %v163
    %v1312 = vunpack.c.l.b16 %v164
    %v1313 = vunpack.c.h.b16 %v164
    %v1314 = vunpack.c.l.b16 %v165
    %v1315 = vunpack.c.h.b16 %v165
    %v1316 = vunpack.c.l.b16 %v166
    %v1317 = vunpack.c.h.b16 %v166
    %v1318 = vunpack.c.l.b16 %v167
    %v1319 = vunpack.c.h.b16 %v167
    %v1320 = vunpack.c.l.b16 %v168
    %v1321 = vunpack.c.h.b16 %v168
    %v1322 = vunpack.c.l.b16 %v169
    %v1323 = vunpack.c.h.b16 %v169
    %v1324 = vunpack.c.l.b16 %v170
    %v1325 = vunpack.c.h.b16 %v170
    %v1326 = vunpack.c.l.b16 %v171
    %v1327 = vunpack.c.h.b16 %v171
    %v1328 = vunpack.c.l.b16 %v172
    %v1329 = vunpack.c.h.b16 %v172
    %v1330 = vunpack.c.l.b16 %v173
    %v1331 = vunpack.c.h.b16 %v173
    %v1332 = vunpack.c.l.b16 %v174
    %v1333 = vunpack.c.h.b16 %v174
    %v1334 = vunpack.c.l.b16 %v175
    %v1335 = vunpack.c.h.b16 %v175
    %v1336 = vunpack.c.l.b16 %v176
    %v1337 = vunpack.c.h.b16 %v176
    %v1338 = vunpack.c.l.b16 %v177
    %v1339 = vunpack.c.h.b16 %v177
    %v1340 = vunpack.c.l.b16 %v178
    %v1341 = vunpack.c.h.b16 %v178
    %v1342 = vunpack.c.l.b16 %v179
    %v1343 = vunpack.c.h.b16 %v179
    %v1344 = vunpack.c.l.b16 %v180
    %v1345 = vunpack.c.h.b16 %v180
    %v1346 = vunpack.c.l.b16 %v181
    %v1347 = vunpack.c.h.b16 %v181
    %v1348 = vunpack.c.l.b16 %v182
    %v1349 = vunpack.c.h.b16 %v182
    %v1350 = vunpack.c.l.b16 %v183
    %v1351 = vunpack.c.h.b16 %v183
    %v1352 = vunpack.c.l.b16 %v184
    %v1353 = vunpack.c.h.b16 %v184
    %v1354 = vunpack.c.l.b16 %v185
    %v1355 = vunpack.c.h.b16 %v185
    %v1356 = vunpack.c.l.b16 %v186
    %v1357 = vunpack.c.h.b16 %v186
    %v1358 = vunpack.c.l.b16 %v187
    %v1359 = vunpack.c.h.b16 %v187
    %v1360 = vunpack.c.l.b16 %v188
    %v1361 = vunpack.c.h.b16 %v188
    %v1362 = vunpack.c.l.b16 %v189
    %v1363 = vunpack.c.h.b16 %v189
    %v1364 = vunpack.c.l.b16 %v190
    %v1365 = vunpack.c.h.b16 %v190
    %v1366 = vunpack.c.l.b16 %v191
    %v1367 = vunpack.c.h.b16 %v191
    %v1368 = vunpack.c.l.b16 %v192
    %v1369 = vunpack.c.h.b16 %v192
    %v1370 = vunpack.c.l.b16 %v193
    %v1371 = vunpack.c.h.b16 %v193
    %v1372 = vunpack.c.l.b16 %v194
    %v1373 = vunpack.c.h.b16 %v194
    %v1374 = vunpack.c.l.b16 %v195
    %v1375 = vunpack.c.h.b16 %v195
    %v1376 = vunpack.c.l.b16 %v196
    %v1377 = vunpack.c.h.b16 %v196
    %v1378 = vunpack.c.l.b16 %v197
    %v1379 = vunpack.c.h.b16 %v197
    %v1380 = vunpack.c.l.b16 %v198
    %v1381 = vunpack.c.h.b16 %v198
    %v1382 = vunpack.c.l.b16 %v199
    %v1383 = vunpack.c.h.b16 %v199
    %v1384 = vunpack.c.l.b16 %v200
    %v1385 = vunpack.c.h.b16 %v200
    %v1386 = vunpack.c.l.b16 %v201
    %v1387 = vunpack.c.h.b16 %v201
    %v1388 = vunpack.c.l.b16 %v202
    %v1389 = vunpack.c.h.b16 %v202
    %v1390 = vunpack.c.l.b16 %v203
    %v1391 = vunpack.c.h.b16 %v203
    %v1392 = vunpack.c.l.b16 %v204
    %v1393 = vunpack.c.h.b16 %v204
    %v1394 = vunpack.c.l.b16 %v205
    %v1395 = vunpack.c.h.b16 %v205
    %v1396 = vunpack.c.l.b16 %v206
    %v1397 = vunpack.c.h.b16 %v206
    %v1398 = vunpack.c.l.b16 %v207
    %v1399 = vunpack.c.h.b16 %v207
    %v1400 = vunpack.c.l.b16 %v208
    %v1401 = vunpack.c.h.b16 %v208
    %v1402 = vunpack.c.l.b16 %v209
    %v1403 = vunpack.c.h.b16 %v209
    %v1404 = vunpack.c.l.b16 %v210
    %v1405 = vunpack.c.h.b16 %v210
    %v1406 = vunpack.c.l.b16 %v211
    %v1407 = vunpack.c.h.b16 %v211
    %v1408 = vunpack.c.l.b16 %v212
    %v1409 = vunpack.c.h.b16 %v212
    %v1410 = vunpack.c.l.b16 %v213
    %v1411 = vunpack.c.h.b16 %v213
    %v1412 = vunpack.c.l.b16 %v214
    %v1413 = vunpack.c.h.b16 %v214
    %v1414 = vunpack.c.l.b16 %v215
    %v1415 = vunpack.c.h.b16 %v215
    %v1416 = vunpack.c.l.b16 %v216
    %v1417 = vunpack.c.h.b16 %v216
    %v1418 = vunpack.c.l.b16 %v217
    %v1419 = vunpack.c.h.b16 %v217
    %v1420 = vunpack.c.l.b16 %v218
    %v1421 = vunpack.c.h.b16 %v218
    %v1422 = vunpack.c.l.b16 %v219
    %v1423 = vunpack.c.h.b16 %v219
    %v1424 = vunpack.c.l.b16 %v220
    %v1425 = vunpack.c.h.b16 %v220
    %v1426 = vunpack.c.l.b16 %v221
    %v1427 = vunpack.c.h.b16 %v221
    %v1428 = vunpack.c.l.b16 %v222
    %v1429 = vunpack.c.h.b16 %v222
    %v1430 = vunpack.c.l.b16 %v223
    %v1431 = vunpack.c.h.b16 %v223
    %v1432 = vunpack.c.l.b16 %v224
    %v1433 = vunpack.c.h.b16 %v224
    %v1434 = vunpack.c.l.b16 %v225
    %v1435 = vunpack.c.h.b16 %v225
    %v1436 = vunpack.c.l.b16 %v226
    %v1437 = vunpack.c.h.b16 %v226
    %v1438 = vunpack.c.l.b16 %v227
    %v1439 = vunpack.c.h.b16 %v227
    %v1440 = vunpack.c.l.b16 %v228
    %v1441 = vunpack.c.h.b16 %v228
    %v1442 = vunpack.c.l.b16 %v229
    %v1443 = vunpack.c.h.b16 %v229
    %v1444 = vunpack.c.l.b16 %v230
    %v1445 = vunpack.c.h.b16 %v230
    %v1446 = vunpack.c.l.b16 %v231
    %v1447 = vunpack.c.h.b16 %v231
    %v1448 = vunpack.c.l.b16 %v232
    %v1449 = vunpack.c.h.b16 %v232
    %v1450 = vunpack.c.l.b16 %v233
    %v1451 = vunpack.c.h.b16 %v233
    %v1452 = vunpack.c.l.b16 %v234
    %v1453 = vunpack.c.h.b16 %v234
    %v1454 = vunpack.c.l.b16 %v235
    %v1455 = vunpack.c.h.b16 %v235
    %v1456 = vunpack.c.l.b16 %v236
    %v1457 = vunpack.c.h.b16 %v236
    %v1458 = vunpack.c.l.b16 %v237
    %v1459 = vunpack.c.h.b16 %v237
    %v1460 = vunpack.c.l.b16 %v238
    %v1461 = vunpack.c.h.b16 %v238
    %v1462 = vunpack.c.l.b16 %v239
    %v1463 = vunpack.c.h.b16 %v239
    %v1464 = vunpack.c.l.b16 %v240
    %v1465 = vunpack.c.h.b16 %v240
    %v1466 = vunpack.c.l.b16 %v241
    %v1467 = vunpack.c.h.b16 %v241
    %v1468 = vunpack.c.l.b16 %v242
    %v1469 = vunpack.c.h.b16 %v242
    %v1470 = vunpack.c.l.b16 %v243
    %v1471 = vunpack.c.h.b16 %v243
    %v1472 = vunpack.c.l.b16 %v244
    %v1473 = vunpack.c.h.b16 %v244
    %v1474 = vunpack.c.l.b16 %v245
    %v1475 = vunpack.c.h.b16 %v245
    %v1476 = vunpack.c.l.b16 %v246
    %v1477 = vunpack.c.h.b16 %v246
    %v1478 = vunpack.c.l.b16 %v247
    %v1479 = vunpack.c.h.b16 %v247
    %v1480 = vunpack.c.l.b16 %v248
    %v1481 = vunpack.c.h.b16 %v248
    %v1482 = vunpack.c.l.b16 %v249
    %v1483 = vunpack.c.h.b16 %v249
    %v1484 = vunpack.c.l.b16 %v250
    %v1485 = vunpack.c.h.b16 %v250
    %v1486 = vunpack.c.l.b16 %v251
    %v1487 = vunpack.c.h.b16 %v251
    %v1488 = vunpack.c.l.b16 %v252
    %v1489 = vunpack.c.h.b16 %v252
    %v1490 = vunpack.c.l.b16 %v253
    %v1491 = vunpack.c.h.b16 %v253
    %v1492 = vunpack.c.l.b16 %v254
    %v1493 = vunpack.c.h.b16 %v254
    %v1494 = vunpack.c.l.b16 %v255
    %v1495 = vunpack.c.h.b16 %v255
    %v1496 = vunpack.c.l.b16 %v256
    %v1497 = vunpack.c.h.b16 %v256
    %v1498 = vunpack.c.l.b16 %v257
    %v1499 = vunpack.c.h.b16 %v257
    %v1500 = vunpack.c.l.b16 %v258
    %v1501 = vunpack.c.h.b16 %v258
    %v1502 = vunpack.c.l.b16 %v259
    %v1503 = vunpack.c.h.b16 %v259
    %v1504 = vunpack.c.l.b16 %v260
    %v1505 = vunpack.c.h.b16 %v260
    %v1506 = vunpack.c.l.b16 %v261
    %v1507 = vunpack.c.h.b16 %v261
    %v1508 = vunpack.c.l.b16 %v262
    %v1509 = vunpack.c.h.b16 %v262
    %v1510 = vunpack.c.l.b16 %v263
    %v1511 = vunpack.c.h.b16 %v263
    %v1512 = vunpack.c.l.b16 %v264
    %v1513 = vunpack.c.h.b16 %v264
    %v1514 = vunpack.c.l.b16 %v265
    %v1515 = vunpack.c.h.b16 %v265
    %v1516 = vunpack.c.l.b16 %v266
    %v1517 = vunpack.c.h.b16 %v266
    %v1518 = vunpack.c.l.b16 %v267
    %v1519 = vunpack.c.h.b16 %v267
    %v1520 = vunpack.c.l.b16 %v268
    %v1521 = vunpack.c.h.b16 %v268
    %v1522 = vunpack.c.l.b16 %v269
    %v1523 = vunpack.c.h.b16 %v269
    %v1524 = vunpack.c.l.b16 %v270
    %v1525 = vunpack.c.h.b16 %v270
    %v1526 = vunpack.c.l.b16 %v271
    %v1527 = vunpack.c.h.b16 %v271
    %v1528 = vunpack.c.l.b16 %v272
    %v1529 = vunpack.c.h.b16 %v272
    %v1530 = vunpack.c.l.b16 %v273
    %v1531 = vunpack.c.h.b16 %v273
    %v1532 = vunpack.c.l.b16 %v274
    %v1533 = vunpack.c.h.b16 %v274
    %v1534 = vunpack.c.l.b16 %v275
    %v1535 = vunpack.c.h.b16 %v275
    %v1536 = vunpack.c.l.b16 %v276
    %v1537 = vunpack.c.h.b16 %v276
    %v1538 = vunpack.c.l.b16 %v277
    %v1539 = vunpack.c.h.b16 %v277
    %v1540 = vunpack.c.l.b16 %v278
    %v1541 = vunpack.c.h.b16 %v278
    %v1542 = vunpack.c.l.b16 %v279
    %v1543 = vunpack.c.h.b16 %v279
    %v1544 = vunpack.c.l.b16 %v280
    %v1545 = vunpack.c.h.b16 %v280
    %v1546 = vunpack.c.l.b16 %v281
    %v1547 = vunpack.c.h.b16 %v281
    %v1548 = vunpack.c.l.b16 %v282
    %v1549 = vunpack.c.h.b16 %v282
    %v1550 = vunpack.c.l.b16 %v283
    %v1551 = vunpack.c.h.b16 %v283
    %v1552 = vunpack.c.l.b16 %v284
    %v1553 = vunpack.c.h.b16 %v284
    %v1554 = vunpack.c.l.b16 %v285
    %v1555 = vunpack.c.h.b16 %v285
    %v1556 = vunpack.c.l.b16 %v286
    %v1557 = vunpack.c.h.b16 %v286
    %v1558 = vunpack.c.l.b16 %v287
    %v1559 = vunpack.c.h.b16 %v287
    %v1560 = vunpack.c.l.b16 %v288
    %v1561 = vunpack.c.h.b16 %v288
    %v1562 = vunpack.c.l.b16 %v289
    %v1563 = vunpack.c.h.b16 %v289
    %v1564 = vunpack.c.l.b16 %v290
    %v1565 = vunpack.c.h.b16 %v290
    %v1566 = vunpack.c.l.b16 %v291
    %v1567 = vunpack.c.h.b16 %v291
    %v1568 = vunpack.c.l.b16 %v292
    %v1569 = vunpack.c.h.b16 %v292
    %v1570 = vunpack.c.l.b16 %v293
    %v1571 = vunpack.c.h.b16 %v293
    %v1572 = vunpack.c.l.b16 %v294
    %v1573 = vunpack.c.h.b16 %v294
    %v1574 = vunpack.c.l.b16 %v295
    %v1575 = vunpack.c.h.b16 %v295
    %v1576 = vunpack.c.l.b16 %v296
    %v1577 = vunpack.c.h.b16 %v296
    %v1578 = vunpack.c.l.b16 %v297
    %v1579 = vunpack.c.h.b16 %v297
    %v1580 = vunpack.c.l.b16 %v298
    %v1581 = vunpack.c.h.b16 %v298
    %v1582 = vunpack.c.l.b16 %v299
    %v1583 = vunpack.c.h.b16 %v299
    %v1584 = vunpack.c.l.b16 %v300
    %v1585 = vunpack.c.h.b16 %v300
    %v1586 = vunpack.c.l.b16 %v301
    %v1587 = vunpack.c.h.b16 %v301
    %v1588 = vunpack.c.l.b16 %v302
    %v1589 = vunpack.c.h.b16 %v302
    %v1590 = vunpack.c.l.b16 %v303
    %v1591 = vunpack.c.h.b16 %v303
    %v1592 = vunpack.c.l.b16 %v304
    %v1593 = vunpack.c.h.b16 %v304
    %v1594 = vunpack.c.l.b16 %v305
    %v1595 = vunpack.c.h.b16 %v305
    %v1596 = vunpack.c.l.b16 %v306
    %v1597 = vunpack.c.h.b16 %v306
    %v1598 = vunpack.c.l.b16 %v307
    %v1599 = vunpack.c.h.b16 %v307
    %v1600 = vunpack.c.l.b16 %v308
    %v1601 = vunpack.c.h.b16 %v308
    %v1602 = vunpack.c.l.b16 %v309
    %v1603 = vunpack.c.h.b16 %v309
    %v1604 = vunpack.c.l.b16 %v310
    %v1605 = vunpack.c.h.b16 %v310
    %v1606 = vunpack.c.l.b16 %v311
    %v1607 = vunpack.c.h.b16 %v311
    %v1608 = vunpack.c.l.b16 %v312
    %v1609 = vunpack.c.h.b16 %v312
    %v1610 = vunpack.c.l.b16 %v313
    %v1611 = vunpack.c.h.b16 %v313
    %v1612 = vunpack.c.l.b16 %v314
    %v1613 = vunpack.c.h.b16 %v314
    %v1614 = vunpack.c.l.b16 %v315
    %v1615 = vunpack.c.h.b16 %v315
    %v1616 = vunpack.c.l.b16 %v316
    %v1617 = vunpack.c.h.b16 %v316
    %v1618 = vunpack.c.l.b16 %v317
    %v1619 = vunpack.c.h.b16 %v317
    %v1620 = vunpack.c.l.b16 %v318
    %v1621 = vunpack.c.h.b16 %v318
    %v1622 = vunpack.c.l.b16 %v319
    %v1623 = vunpack.c.h.b16 %v319
    %v1624 = vunpack.c.l.b16 %v320
    %v1625 = vunpack.c.h.b16 %v320
    %v1626 = vunpack.c.l.b16 %v321
    %v1627 = vunpack.c.h.b16 %v321
    %v1628 = vunpack.c.l.b16 %v322
    %v1629 = vunpack.c.h.b16 %v322
    %v1630 = vunpack.c.l.b16 %v323
    %v1631 = vunpack.c.h.b16 %v323
    %v1632 = vunpack.c.l.b16 %v324
    %v1633 = vunpack.c.h.b16 %v324
    %v1634 = vunpack.c.l.b16 %v325
    %v1635 = vunpack.c.h.b16 %v325
    %v1636 = vunpack.c.l.b16 %v326
    %v1637 = vunpack.c.h.b16 %v326
    %v1638 = vunpack.c.l.b16 %v327
    %v1639 = vunpack.c.h.b16 %v327
    %v1640 = vunpack.c.l.b16 %v328
    %v1641 = vunpack.c.h.b16 %v328
    %v1642 = vunpack.c.l.b16 %v329
    %v1643 = vunpack.c.h.b16 %v329
    %v1644 = vunpack.c.l.b16 %v330
    %v1645 = vunpack.c.h.b16 %v330
    %v1646 = vunpack.c.l.b16 %v331
    %v1647 = vunpack.c.h.b16 %v331
    %v1648 = vunpack.c.l.b16 %v332
    %v1649 = vunpack.c.h.b16 %v332
    %v1650 = vunpack.c.l.b16 %v333
    %v1651 = vunpack.c.h.b16 %v333
    %v1652 = vunpack.c.l.b16 %v334
    %v1653 = vunpack.c.h.b16 %v334
    %v1654 = vunpack.c.l.b16 %v335
    %v1655 = vunpack.c.h.b16 %v335
    %v1656 = vunpack.c.l.b16 %v336
    %v1657 = vunpack.c.h.b16 %v336
    %v1658 = vunpack.c.l.b16 %v337
    %v1659 = vunpack.c.h.b16 %v337
    %v1660 = vunpack.c.l.b16 %v338
    %v1661 = vunpack.c.h.b16 %v338
    %v1662 = vunpack.c.l.b16 %v339
    %v1663 = vunpack.c.h.b16 %v339
    %v1664 = vunpack.c.l.b16 %v340
    %v1665 = vunpack.c.h.b16 %v340
    %v1666 = vunpack.c.l.b16 %v341
    %v1667 = vunpack.c.h.b16 %v341
    %v1668 = vunpack.c.l.b16 %v342
    %v1669 = vunpack.c.h.b16 %v342
    %v1670 = vunpack.c.l.b16 %v343
    %v1671 = vunpack.c.h.b16 %v343
    %v1672 = vunpack.c.l.b16 %v344
    %v1673 = vunpack.c.h.b16 %v344
    %v1674 = vunpack.c.l.b16 %v345
    %v1675 = vunpack.c.h.b16 %v345
    %v1676 = vunpack.c.l.b16 %v346
    %v1677 = vunpack.c.h.b16 %v346
    %v1678 = vunpack.c.l.b16 %v347
    %v1679 = vunpack.c.h.b16 %v347
    %v1680 = vunpack.c.l.b16 %v348
    %v1681 = vunpack.c.h.b16 %v348
    %v1682 = vunpack.c.l.b16 %v349
    %v1683 = vunpack.c.h.b16 %v349
    %v1684 = vunpack.c.l.b16 %v350
    %v1685 = vunpack.c.h.b16 %v350
    %v1686 = vunpack.c.l.b16 %v351
    %v1687 = vunpack.c.h.b16 %v351
    %v1688 = vunpack.c.l.b16 %v352
    %v1689 = vunpack.c.h.b16 %v352
    %v1690 = vunpack.c.l.b16 %v353
    %v1691 = vunpack.c.h.b16 %v353
    %v1692 = vunpack.c.l.b16 %v354
    %v1693 = vunpack.c.h.b16 %v354
    %v1694 = vunpack.c.l.b16 %v355
    %v1695 = vunpack.c.h.b16 %v355
    %v1696 = vunpack.c.l.b16 %v356
    %v1697 = vunpack.c.h.b16 %v356
    %v1698 = vunpack.c.l.b16 %v357
    %v1699 = vunpack.c.h.b16 %v357
    %v1700 = vunpack.c.l.b16 %v358
    %v1701 = vunpack.c.h.b16 %v358
    %v1702 = vunpack.c.l.b16 %v359
    %v1703 = vunpack.c.h.b16 %v359
    %v1704 = vunpack.c.l.b16 %v360
    %v1705 = vunpack.c.h.b16 %v360
    %v1706 = vunpack.c.l.b16 %v361
    %v1707 = vunpack.c.h.b16 %v361
    %v1708 = vunpack.c.l.b16 %v362
    %v1709 = vunpack.c.h.b16 %v362
    %v1710 = vunpack.c.l.b16 %v363
    %v1711 = vunpack.c.h.b16 %v363
    %v1712 = vunpack.c.l.b16 %v364
    %v1713 = vunpack.c.h.b16 %v364
    %v1714 = vunpack.c.l.b16 %v365
    %v1715 = vunpack.c.h.b16 %v365
    %v1716 = vunpack.c.l.b16 %v366
    %v1717 = vunpack.c.h.b16 %v366
    %v1718 = vunpack.c.l.b16 %v367
    %v1719 = vunpack.c.h.b16 %v367
    %v1720 = vunpack.c.l.b16 %v368
    %v1721 = vunpack.c.h.b16 %v368
    %v1722 = vunpack.c.l.b16 %v369
    %v1723 = vunpack.c.h.b16 %v369
    %v1724 = vunpack.c.l.b16 %v370
    %v1725 = vunpack.c.h.b16 %v370
    %v1726 = vunpack.c.l.b16 %v371
    %v1727 = vunpack.c.h.b16 %v371
    %v1728 = vunpack.c.l.b16 %v372
    %v1729 = vunpack.c.h.b16 %v372
    %v1730 = vunpack.c.l.b16 %v373
    %v1731 = vunpack.c.h.b16 %v373
    %v1732 = vunpack.c.l.b16 %v374
    %v1733 = vunpack.c.h.b16 %v374
    %v1734 = vunpack.c.l.b16 %v375
    %v1735 = vunpack.c.h.b16 %v375
    %v1736 = vunpack.c.l.b16 %v376
    %v1737 = vunpack.c.h.b16 %v376
    %v1738 = vunpack.c.l.b16 %v377
    %v1739 = vunpack.c.h.b16 %v377
    %v1740 = vunpack.c.l.b16 %v378
    %v1741 = vunpack.c.h.b16 %v378
    %v1742 = vunpack.c.l.b16 %v379
    %v1743 = vunpack.c.h.b16 %v379
    %v1744 = vunpack.c.l.b16 %v380
    %v1745 = vunpack.c.h.b16 %v380
    %v1746 = vunpack.c.l.b16 %v381
    %v1747 = vunpack.c.h.b16 %v381
    %v1748 = vunpack.c.l.b16 %v382
    %v1749 = vunpack.c.h.b16 %v382
    %v1750 = vunpack.c.l.b16 %v383
    %v1751 = vunpack.c.h.b16 %v383
    %v1752 = vunpack.c.l.b16 %v384
    %v1753 = vunpack.c.h.b16 %v384
    %v1754 = vunpack.c.l.b16 %v385
    %v1755 = vunpack.c.h.b16 %v385
    %v1756 = vunpack.c.l.b16 %v386
    %v1757 = vunpack.c.h.b16 %v386
    %v1758 = vunpack.c.l.b16 %v387
    %v1759 = vunpack.c.h.b16 %v387
    %v1760 = vunpack.c.l.b16 %v388
    %v1761 = vunpack.c.h.b16 %v388
    %v1762 = vunpack.c.l.b16 %v389
    %v1763 = vunpack.c.h.b16 %v389
    %v1764 = vunpack.c.l.b16 %v390
    %v1765 = vunpack.c.h.b16 %v390
    %v1766 = vunpack.c.l.b16 %v391
    %v1767 = vunpack.c.h.b16 %v391
    %v1768 = vunpack.c.l.b16 %v392
    %v1769 = vunpack.c.h.b16 %v392
    %v1770 = vunpack.c.l.b16 %v393
    %v1771 = vunpack.c.h.b16 %v393
    %v1772 = vunpack.c.l.b16 %v394
    %v1773 = vunpack.c.h.b16 %v394
    %v1774 = vunpack.c.l.b16 %v395
    %v1775 = vunpack.c.h.b16 %v395
    %v1776 = vunpack.c.l.b16 %v396
    %v1777 = vunpack.c.h.b16 %v396
    %v1778 = vunpack.c.l.b16 %v397
    %v1779 = vunpack.c.h.b16 %v397
    %v1780 = vunpack.c.l.b16 %v398
    %v1781 = vunpack.c.h.b16 %v398
    %v1782 = vunpack.c.l.b16 %v399
    %v1783 = vunpack.c.h.b16 %v399
    %v1784 = vunpack.c.l.b16 %v400
    %v1785 = vunpack.c.h.b16 %v400
    %v1786 = vunpack.c.l.b16 %v401
    %v1787 = vunpack.c.h.b16 %v401
    %v1788 = vunpack.c.l.b16 %v402
    %v1789 = vunpack.c.h.b16 %v402
    %v1790 = vunpack.c.l.b16 %v403
    %v1791 = vunpack.c.h.b16 %v403
    %v1792 = vunpack.c.l.b16 %v404
    %v1793 = vunpack.c.h.b16 %v404
    %v1794 = vunpack.c.l.b16 %v405
    %v1795 = vunpack.c.h.b16 %v405
    %v1796 = vunpack.c.l.b16 %v406
    %v1797 = vunpack.c.h.b16 %v406
    %v1798 = vunpack.c.l.b16 %v407
    %v1799 = vunpack.c.h.b16 %v407
    %v1800 = vunpack.c.l.b16 %v408
    %v1801 = vunpack.c.h.b16 %v408
    %v1802 = vunpack.c.l.b16 %v409
    %v1803 = vunpack.c.h.b16 %v409
    %v1804 = vunpack.c.l.b16 %v410
    %v1805 = vunpack.c.h.b16 %v410
    %v1806 = vunpack.c.l.b16 %v411
    %v1807 = vunpack.c.h.b16 %v411
    %v1808 = vunpack.c.l.b16 %v412
    %v1809 = vunpack.c.h.b16 %v412
    %v1810 = vunpack.c.l.b16 %v413
    %v1811 = vunpack.c.h.b16 %v413
    %v1812 = vunpack.c.l.b16 %v414
    %v1813 = vunpack.c.h.b16 %v414
    %v1814 = vunpack.c.l.b16 %v415
    %v1815 = vunpack.c.h.b16 %v415
    %v1816 = vunpack.c.l.b16 %v416
    %v1817 = vunpack.c.h.b16 %v416
    %v1818 = vunpack.c.l.b16 %v417
    %v1819 = vunpack.c.h.b16 %v417
    %v1820 = vunpack.c.l.b16 %v418
    %v1821 = vunpack.c.h.b16 %v418
    %v1822 = vunpack.c.l.b16 %v419
    %v1823 = vunpack.c.h.b16 %v419
    %v1824 = vunpack.c.l.b16 %v420
    %v1825 = vunpack.c.h.b16 %v420
    %v1826 = vunpack.c.l.b16 %v421
    %v1827 = vunpack.c.h.b16 %v421
    %v1828 = vunpack.c.l.b16 %v422
    %v1829 = vunpack.c.h.b16 %v422
    %v1830 = vunpack.c.l.b16 %v423
    %v1831 = vunpack.c.h.b16 %v423
    %v1832 = vunpack.c.l.b16 %v424
    %v1833 = vunpack.c.h.b16 %v424
    %v1834 = vunpack.c.l.b16 %v425
    %v1835 = vunpack.c.h.b16 %v425
    %v1836 = vunpack.c.l.b16 %v426
    %v1837 = vunpack.c.h.b16 %v426
    %v1838 = vunpack.c.l.b16 %v427
    %v1839 = vunpack.c.h.b16 %v427
    %v1840 = vunpack.c.l.b16 %v428
    %v1841 = vunpack.c.h.b16 %v428
    %v1842 = vunpack.c.l.b16 %v429
    %v1843 = vunpack.c.h.b16 %v429
    %v1844 = vunpack.c.l.b16 %v430
    %v1845 = vunpack.c.h.b16 %v430
    %v1846 = vunpack.c.l.b16 %v431
    %v1847 = vunpack.c.h.b16 %v431
    %v1848 = vunpack.c.l.b16 %v432
    %v1849 = vunpack.c.h.b16 %v432
    %v1850 = vunpack.c.l.b16 %v433
    %v1851 = vunpack.c.h.b16 %v433
    %v1852 = vunpack.c.l.b16 %v434
    %v1853 = vunpack.c.h.b16 %v434
    %v1854 = vunpack.c.l.b16 %v435
    %v1855 = vunpack.c.h.b16 %v435
    %v1856 = vunpack.c.l.b16 %v436
    %v1857 = vunpack.c.h.b16 %v436
    %v1858 = vunpack.c.l.b16 %v437
    %v1859 = vunpack.c.h.b16 %v437
    %v1860 = vunpack.c.l.b16 %v438
    %v1861 = vunpack.c.h.b16 %v438
    %v1862 = vunpack.c.l.b16 %v439
    %v1863 = vunpack.c.h.b16 %v439
    %v1864 = vunpack.c.l.b16 %v440
    %v1865 = vunpack.c.h.b16 %v440
    %v1866 = vunpack.c.l.b16 %v441
    %v1867 = vunpack.c.h.b16 %v441
    %v1868 = vunpack.c.l.b16 %v442
    %v1869 = vunpack.c.h.b16 %v442
    %v1870 = vunpack.c.l.b16 %v443
    %v1871 = vunpack.c.h.b16 %v443
    %v1872 = vunpack.c.l.b16 %v444
    %v1873 = vunpack.c.h.b16 %v444
    %v1874 = vunpack.c.l.b16 %v445
    %v1875 = vunpack.c.h.b16 %v445
    %v1876 = vunpack.c.l.b16 %v446
    %v1877 = vunpack.c.h.b16 %v446
    %v1878 = vunpack.c.l.b16 %v447
    %v1879 = vunpack.c.h.b16 %v447
    %v1880 = vunpack.c.l.b16 %v448
    %v1881 = vunpack.c.h.b16 %v448
    %v1882 = vunpack.c.l.b16 %v449
    %v1883 = vunpack.c.h.b16 %v449
    %v1884 = vunpack.c.l.b16 %v450
    %v1885 = vunpack.c.h.b16 %v450
    %v1886 = vunpack.c.l.b16 %v451
    %v1887 = vunpack.c.h.b16 %v451
    %v1888 = vunpack.c.l.b16 %v452
    %v1889 = vunpack.c.h.b16 %v452
    %v1890 = vunpack.c.l.b16 %v453
    %v1891 = vunpack.c.h.b16 %v453
    %v1892 = vunpack.c.l.b16 %v454
    %v1893 = vunpack.c.h.b16 %v454
    %v1894 = vunpack.c.l.b16 %v455
    %v1895 = vunpack.c.h.b16 %v455
    %v1896 = vunpack.c.l.b16 %v456
    %v1897 = vunpack.c.h.b16 %v456
    %v1898 = vunpack.c.l.b16 %v457
    %v1899 = vunpack.c.h.b16 %v457
    %v1900 = vunpack.c.l.b16 %v458
    %v1901 = vunpack.c.h.b16 %v458
    %v1902 = vunpack.c.l.b16 %v459
    %v1903 = vunpack.c.h.b16 %v459
    %v1904 = vunpack.c.l.b16 %v460
    %v1905 = vunpack.c.h.b16 %v460
    %v1906 = vunpack.c.l.b16 %v461
    %v1907 = vunpack.c.h.b16 %v461
    %v1908 = vunpack.c.l.b16 %v462
    %v1909 = vunpack.c.h.b16 %v462
    %v1910 = vunpack.c.l.b16 %v463
    %v1911 = vunpack.c.h.b16 %v463
    %v1912 = vunpack.c.l.b16 %v464
    %v1913 = vunpack.c.h.b16 %v464
    %v1914 = vunpack.c.l.b16 %v465
    %v1915 = vunpack.c.h.b16 %v465
    %v1916 = vunpack.c.l.b16 %v466
    %v1917 = vunpack.c.h.b16 %v466
    %v1918 = vunpack.c.l.b16 %v467
    %v1919 = vunpack.c.h.b16 %v467
    %v1920 = vunpack.c.l.b16 %v468
    %v1921 = vunpack.c.h.b16 %v468
    %v1922 = vunpack.c.l.b16 %v469
    %v1923 = vunpack.c.h.b16 %v469
    %v1924 = vunpack.c.l.b16 %v470
    %v1925 = vunpack.c.h.b16 %v470
    %v1926 = vunpack.c.l.b16 %v471
    %v1927 = vunpack.c.h.b16 %v471
    %v1928 = vunpack.c.l.b16 %v472
    %v1929 = vunpack.c.h.b16 %v472
    %v1930 = vunpack.c.l.b16 %v473
    %v1931 = vunpack.c.h.b16 %v473
    %v1932 = vunpack.c.l.b16 %v474
    %v1933 = vunpack.c.h.b16 %v474
    %v1934 = vunpack.c.l.b16 %v475
    %v1935 = vunpack.c.h.b16 %v475
    %v1936 = vunpack.c.l.b16 %v476
    %v1937 = vunpack.c.h.b16 %v476
    %v1938 = vunpack.c.l.b16 %v477
    %v1939 = vunpack.c.h.b16 %v477
    %v1940 = vunpack.c.l.b16 %v478
    %v1941 = vunpack.c.h.b16 %v478
    %v1942 = vunpack.c.l.b16 %v479
    %v1943 = vunpack.c.h.b16 %v479
    %v1944 = vunpack.c.l.b16 %v480
    %v1945 = vunpack.c.h.b16 %v480
    %v1946 = vunpack.c.l.b16 %v481
    %v1947 = vunpack.c.h.b16 %v481
    %v1948 = vunpack.c.l.b16 %v482
    %v1949 = vunpack.c.h.b16 %v482
    %v1950 = vunpack.c.l.b16 %v483
    %v1951 = vunpack.c.h.b16 %v483
    %v1952 = vunpack.c.l.b16 %v484
    %v1953 = vunpack.c.h.b16 %v484
    %v1954 = vunpack.c.l.b16 %v485
    %v1955 = vunpack.c.h.b16 %v485
    %v1956 = vunpack.c.l.b16 %v486
    %v1957 = vunpack.c.h.b16 %v486
    %v1958 = vunpack.c.l.b16 %v487
    %v1959 = vunpack.c.h.b16 %v487
    %v1960 = vpack.c.b16 %v1196, %v1192
    %v1961 = vpack.c.b16 %v1197, %v1193
    %v1962 = vpack.c.b16 %v1198, %v1194
    %v1963 = vpack.c.b16 %v1199, %v1195
    %v1964 = vpack.c.b16 %v1204, %v1200
    %v1965 = vpack.c.b16 %v1205, %v1201
    %v1966 = vpack.c.b16 %v1206, %v1202
    %v1967 = vpack.c.b16 %v1207, %v1203
    %v1968 = vpack.c.b16 %v1212, %v1208
    %v1969 = vpack.c.b16 %v1213, %v1209
    %v1970 = vpack.c.b16 %v1214, %v1210
    %v1971 = vpack.c.b16 %v1215, %v1211
    %v1972 = vpack.c.b16 %v1220, %v1216
    %v1973 = vpack.c.b16 %v1221, %v1217
    %v1974 = vpack.c.b16 %v1222, %v1218
    %v1975 = vpack.c.b16 %v1223, %v1219
    %v1976 = vpack.c.b16 %v1228, %v1224
    %v1977 = vpack.c.b16 %v1229, %v1225
    %v1978 = vpack.c.b16 %v1230, %v1226
    %v1979 = vpack.c.b16 %v1231, %v1227
    %v1980 = vpack.c.b16 %v1236, %v1232
    %v1981 = vpack.c.b16 %v1237, %v1233
    %v1982 = vpack.c.b16 %v1238, %v1234
    %v1983 = vpack.c.b16 %v1239, %v1235
    %v1984 = vpack.c.b16 %v1244, %v1240
    %v1985 = vpack.c.b16 %v1245, %v1241
    %v1986 = vpack.c.b16 %v1246, %v1242
    %v1987 = vpack.c.b16 %v1247, %v1243
    %v1988 = vpack.c.b16 %v1252, %v1248
    %v1989 = vpack.c.b16 %v1253, %v1249
    %v1990 = vpack.c.b16 %v1254, %v1250
    %v1991 = vpack.c.b16 %v1255, %v1251
    %v1992 = vpack.c.b16 %v1260, %v1256
    %v1993 = vpack.c.b16 %v1261, %v1257
    %v1994 = vpack.c.b16 %v1262, %v1258
    %v1995 = vpack.c.b16 %v1263, %v1259
    %v1996 = vpack.c.b16 %v1268, %v1264
    %v1997 = vpack.c.b16 %v1269, %v1265
    %v1998 = vpack.c.b16 %v1270, %v1266
    %v1999 = vpack.c.b16 %v1271, %v1267
    %v2000 = vpack.c.b16 %v1276, %v1272
    %v2001 = vpack.c.b16 %v1277, %v1273
    %v2002 = vpack.c.b16 %v1278, %v1274
    %v2003 = vpack.c.b16 %v1279, %v1275
    %v2004 = vpack.c.b16 %v1284, %v1280
    %v2005 = vpack.c.b16 %v1285, %v1281
    %v2006 = vpack.c.b16 %v1286, %v1282
    %v2007 = vpack.c.b16 %v1287, %v1283
    %v2008 = vpack.c.b16 %v1292, %v1288
    %v2009 = vpack.c.b16 %v1293, %v1289
    %v2010 = vpack.c.b16 %v1294, %v1290
    %v2011 = vpack.c.b16 %v1295, %v1291
    %v2012 = vpack.c.b16 %v1300, %v1296
    %v2013 = vpack.c.b16 %v1301, %v1297
    %v2014 = vpack.c.b16 %v1302, %v1298
    %v2015 = vpack.c.b16 %v1303, %v1299
    %v2016 = vpack.c.b16 %v1308, %v1304
    %v2017 = vpack.c.b16 %v1309, %v1305
    %v2018 = vpack.c.b16 %v1310, %v1306
    %v2019 = vpack.c.b16 %v1311, %v1307
    %v2020 = vpack.c.b16 %v1316, %v1312
    %v2021 = vpack.c.b16 %v1317, %v1313
    %v2022 = vpack.c.b16 %v1318, %v1314
    %v2023 = vpack.c.b16 %v1319, %v1315
    %v2024 = vpack.c.b16 %v1324, %v1320
    %v2025 = vpack.c.b16 %v1325, %v1321
    %v2026 = vpack.c.b16 %v1326, %v1322
    %v2027 = vpack.c.b16 %v1327, %v1323
    %v2028 = vpack.c.b16 %v1332, %v1328
    %v2029 = vpack.c.b16 %v1333, %v1329
    %v2030 = vpack.c.b16 %v1334, %v1330
    %v2031 = vpack.c.b16 %v1335, %v1331
    %v2032 = vpack.c.b16 %v1340, %v1336
    %v2033 = vpack.c.b16 %v1341, %v1337
    %v2034 = vpack.c.b16 %v1342, %v1338
    %v2035 = vpack.c.b16 %v1343, %v1339
    %v2036 = vpack.c.b16 %v1348, %v1344
    %v2037 = vpack.c.b16 %v1349, %v1345
    %v2038 = vpack.c.b16 %v1350, %v1346
    %v2039 = vpack.c.b16 %v1351, %v1347
    %v2040 = vpack.c.b16 %v1356, %v1352
    %v2041 = vpack.c.b16 %v1357, %v1353
    %v2042 = vpack.c.b16 %v1358, %v1354
    %v2043 = vpack.c.b16 %v1359, %v1355
    %v2044 = vpack.c.b16 %v1364, %v1360
    %v2045 = vpack.c.b16 %v1365, %v1361
    %v2046 = vpack.c.b16 %v1366, %v1362
    %v2047 = vpack.c.b16 %v1367, %v1363
    %v2048 = vpack.c.b16 %v1372, %v1368
    %v2049 = vpack.c.b16 %v1373, %v1369
    %v2050 = vpack.c.b16 %v1374, %v1370
    %v2051 = vpack.c.b16 %v1375, %v1371
    %v2052 = vpack.c.b16 %v1380, %v1376
    %v2053 = vpack.c.b16 %v1381, %v1377
    %v2054 = vpack.c.b16 %v1382, %v1378
    %v2055 = vpack.c.b16 %v1383, %v1379
    %v2056 = vpack.c.b16 %v1388, %v1384
    %v2057 = vpack.c.b16 %v1389, %v1385
    %v2058 = vpack.c.b16 %v1390, %v1386
    %v2059 = vpack.c.b16 %v1391, %v1387
    %v2060 = vpack.c.b16 %v1396, %v1392
    %v2061 = vpack.c.b16 %v1397, %v1393
    %v2062 = vpack.c.b16 %v1398, %v1394
    %v2063 = vpack.c.b16 %v1399, %v1395
    %v2064 = vpack.c.b16 %v1404, %v1400
    %v2065 = vpack.c.b16 %v1405, %v1401
    %v2066 = vpack.c.b16 %v1406, %v1402
    %v2067 = vpack.c.b16 %v1407, %v1403
    %v2068 = vpack.c.b16 %v1412, %v1408
    %v2069 = vpack.c.b16 %v1413, %v1409
    %v2070 = vpack.c.b16 %v1414, %v1410
    %v2071 = vpack.c.b16 %v1415, %v1411
    %v2072 = vpack.c.b16 %v1420, %v1416
    %v2073 = vpack.c.b16 %v1421, %v1417
    %v2074 = vpack.c.b16 %v1422, %v1418
    %v2075 = vpack.c.b16 %v1423, %v1419
    %v2076 = vpack.c.b16 %v1428, %v1424
    %v2077 = vpack.c.b16 %v1429, %v1425
    %v2078 = vpack.c.b16 %v1430, %v1426
    %v2079 = vpack.c.b16 %v1431, %v1427
    %v2080 = vpack.c.b16 %v1436, %v1432
    %v2081 = vpack.c.b16 %v1437, %v1433
    %v2082 = vpack.c.b16 %v1438, %v1434
    %v2083 = vpack.c.b16 %v1439, %v1435
    %v2084 = vpack.c.b16 %v1444, %v1440
    %v2085 = vpack.c.b16 %v1445, %v1441
    %v2086 = vpack.c.b16 %v1446, %v1442
    %v2087 = vpack.c.b16 %v1447, %v1443
    %v2088 = vpack.c.b16 %v1452, %v1448
    %v2089 = vpack.c.b16 %v1453, %v1449
    %v2090 = vpack.c.b16 %v1454, %v1450
    %v2091 = vpack.c.b16 %v1455, %v1451
    %v2092 = vpack.c.b16 %v1460, %v1456
    %v2093 = vpack.c.b16 %v1461, %v1457
    %v2094 = vpack.c.b16 %v1462, %v1458
    %v2095 = vpack.c.b16 %v1463, %v1459
    %v2096 = vpack.c.b16 %v1468, %v1464
    %v2097 = vpack.c.b16 %v1469, %v1465
    %v2098 = vpack.c.b16 %v1470, %v1466
    %v2099 = vpack.c.b16 %v1471, %v1467
    %v2100 = vpack.c.b16 %v1476, %v1472
    %v2101 = vpack.c.b16 %v1477, %v1473
    %v2102 = vpack.c.b16 %v1478, %v1474
    %v2103 = vpack.c.b16 %v1479, %v1475
    %v2104 = vpack.c.b16 %v1484, %v1480
    %v2105 = vpack.c.b16 %v1485, %v1481
    %v2106 = vpack.c.b16 %v1486, %v1482
    %v2107 = vpack.c.b16 %v1487, %v1483
    %v2108 = vpack.c.b16 %v1492, %v1488
    %v2109 = vpack.c.b16 %v1493, %v1489
    %v2110 = vpack.c.b16 %v1494, %v1490
    %v2111 = vpack.c.b16 %v1495, %v1491
    %v2112 = vpack.c.b16 %v1500, %v1496
    %v2113 = vpack.c.b16 %v1501, %v1497
    %v2114 = vpack.c.b16 %v1502, %v1498
    %v2115 = vpack.c.b16 %v1503, %v1499
    %v2116 = vpack.c.b16 %v1508, %v1504
    %v2117 = vpack.c.b16 %v1509, %v1505
    %v2118 = vpack.c.b16 %v1510, %v1506
    %v2119 = vpack.c.b16 %v1511, %v1507
    %v2120 = vpack.c.b16 %v1516, %v1512
    %v2121 = vpack.c.b16 %v1517, %v1513
    %v2122 = vpack.c.b16 %v1518, %v1514
    %v2123 = vpack.c.b16 %v1519, %v1515
    %v2124 = vpack.c.b16 %v1524, %v1520
    %v2125 = vpack.c.b16 %v1525, %v1521
    %v2126 = vpack.c.b16 %v1526, %v1522
    %v2127 = vpack.c.b16 %v1527, %v1523
    %v2128 = vpack.c.b16 %v1532, %v1528
    %v2129 = vpack.c.b16 %v1533, %v1529
    %v2130 = vpack.c.b16 %v1534, %v1530
    %v2131 = vpack.c.b16 %v1535, %v1531
    %v2132 = vpack.c.b16 %v1540, %v1536
    %v2133 = vpack.c.b16 %v1541, %v1537
    %v2134 = vpack.c.b16 %v1542, %v1538
    %v2135 = vpack.c.b16 %v1543, %v1539
    %v2136 = vpack.c.b16 %v1548, %v1544
    %v2137 = vpack.c.b16 %v1549, %v1545
    %v2138 = vpack.c.b16 %v1550, %v1546
    %v2139 = vpack.c.b16 %v1551, %v1547
    %v2140 = vpack.c.b16 %v1556, %v1552
    %v2141 = vpack.c.b16 %v1557, %v1553
    %v2142 = vpack.c.b16 %v1558, %v1554
    %v2143 = vpack.c.b16 %v1559, %v1555
    %v2144 = vpack.c.b16 %v1564, %v1560
    %v2145 = vpack.c.b16 %v1565, %v1561
    %v2146 = vpack.c.b16 %v1566, %v1562
    %v2147 = vpack.c.b16 %v1567, %v1563
    %v2148 = vpack.c.b16 %v1572, %v1568
    %v2149 = vpack.c.b16 %v1573, %v1569
    %v2150 = vpack.c.b16 %v1574, %v1570
    %v2151 = vpack.c.b16 %v1575, %v1571
    %v2152 = vpack.c.b16 %v1580, %v1576
    %v2153 = vpack.c.b16 %v1581, %v1577
    %v2154 = vpack.c.b16 %v1582, %v1578
    %v2155 = vpack.c.b16 %v1583, %v1579
    %v2156 = vpack.c.b16 %v1588, %v1584
    %v2157 = vpack.c.b16 %v1589, %v1585
    %v2158 = vpack.c.b16 %v1590, %v1586
    %v2159 = vpack.c.b16 %v1591, %v1587
    %v2160 = vpack.c.b16 %v1596, %v1592
    %v2161 = vpack.c.b16 %v1597, %v1593
    %v2162 = vpack.c.b16 %v1598, %v1594
    %v2163 = vpack.c.b16 %v1599, %v1595
    %v2164 = vpack.c.b16 %v1604, %v1600
    %v2165 = vpack.c.b16 %v1605, %v1601
    %v2166 = vpack.c.b16 %v1606, %v1602
    %v2167 = vpack.c.b16 %v1607, %v1603
    %v2168 = vpack.c.b16 %v1612, %v1608
    %v2169 = vpack.c.b16 %v1613, %v1609
    %v2170 = vpack.c.b16 %v1614, %v1610
    %v2171 = vpack.c.b16 %v1615, %v1611
    %v2172 = vpack.c.b16 %v1620, %v1616
    %v2173 = vpack.c.b16 %v1621, %v1617
    %v2174 = vpack.c.b16 %v1622, %v1618
    %v2175 = vpack.c.b16 %v1623, %v1619
    %v2176 = vpack.c.b16 %v1628, %v1624
    %v2177 = vpack.c.b16 %v1629, %v1625
    %v2178 = vpack.c.b16 %v1630, %v1626
    %v2179 = vpack.c.b16 %v1631, %v1627
    %v2180 = vpack.c.b16 %v1636, %v1632
    %v2181 = vpack.c.b16 %v1637, %v1633
    %v2182 = vpack.c.b16 %v1638, %v1634
    %v2183 = vpack.c.b16 %v1639, %v1635
    %v2184 = vpack.c.b16 %v1644, %v1640
    %v2185 = vpack.c.b16 %v1645, %v1641
    %v2186 = vpack.c.b16 %v1646, %v1642
    %v2187 = vpack.c.b16 %v1647, %v1643
    %v2188 = vpack.c.b16 %v1652, %v1648
    %v2189 = vpack.c.b16 %v1653, %v1649
    %v2190 = vpack.c.b16 %v1654, %v1650
    %v2191 = vpack.c.b16 %v1655, %v1651
    %v2192 = vpack.c.b16 %v1660, %v1656
    %v2193 = vpack.c.b16 %v1661, %v1657
    %v2194 = vpack.c.b16 %v1662, %v1658
    %v2195 = vpack.c.b16 %v1663, %v1659
    %v2196 = vpack.c.b16 %v1668, %v1664
    %v2197 = vpack.c.b16 %v1669, %v1665
    %v2198 = vpack.c.b16 %v1670, %v1666
    %v2199 = vpack.c.b16 %v1671, %v1667
    %v2200 = vpack.c.b16 %v1676, %v1672
    %v2201 = vpack.c.b16 %v1677, %v1673
    %v2202 = vpack.c.b16 %v1678, %v1674
    %v2203 = vpack.c.b16 %v1679, %v1675
    %v2204 = vpack.c.b16 %v1684, %v1680
    %v2205 = vpack.c.b16 %v1685, %v1681
    %v2206 = vpack.c.b16 %v1686, %v1682
    %v2207 = vpack.c.b16 %v1687, %v1683
    %v2208 = vpack.c.b16 %v1692, %v1688
    %v2209 = vpack.c.b16 %v1693, %v1689
    %v2210 = vpack.c.b16 %v1694, %v1690
    %v2211 = vpack.c.b16 %v1695, %v1691
    %v2212 = vpack.c.b16 %v1700, %v1696
    %v2213 = vpack.c.b16 %v1701, %v1697
    %v2214 = vpack.c.b16 %v1702, %v1698
    %v2215 = vpack.c.b16 %v1703, %v1699
    %v2216 = vpack.c.b16 %v1708, %v1704
    %v2217 = vpack.c.b16 %v1709, %v1705
    %v2218 = vpack.c.b16 %v1710, %v1706
    %v2219 = vpack.c.b16 %v1711, %v1707
    %v2220 = vpack.c.b16 %v1716, %v1712
    %v2221 = vpack.c.b16 %v1717, %v1713
    %v2222 = vpack.c.b16 %v1718, %v1714
    %v2223 = vpack.c.b16 %v1719, %v1715
    %v2224 = vpack.c.b16 %v1724, %v1720
    %v2225 = vpack.c.b16 %v1725, %v1721
    %v2226 = vpack.c.b16 %v1726, %v1722
    %v2227 = vpack.c.b16 %v1727, %v1723
    %v2228 = vpack.c.b16 %v1732, %v1728
    %v2229 = vpack.c.b16 %v1733, %v1729
    %v2230 = vpack.c.b16 %v1734, %v1730
    %v2231 = vpack.c.b16 %v1735, %v1731
    %v2232 = vpack.c.b16 %v1740, %v1736
    %v2233 = vpack.c.b16 %v1741, %v1737
    %v2234 = vpack.c.b16 %v1742, %v1738
    %v2235 = vpack.c.b16 %v1743, %v1739
    %v2236 = vpack.c.b16 %v1748, %v1744
    %v2237 = vpack.c.b16 %v1749, %v1745
    %v2238 = vpack.c.b16 %v1750, %v1746
    %v2239 = vpack.c.b16 %v1751, %v1747
    %v2240 = vpack.c.b16 %v1756, %v1752
    %v2241 = vpack.c.b16 %v1757, %v1753
    %v2242 = vpack.c.b16 %v1758, %v1754
    %v2243 = vpack.c.b16 %v1759, %v1755
    %v2244 = vpack.c.b16 %v1764, %v1760
    %v2245 = vpack.c.b16 %v1765, %v1761
    %v2246 = vpack.c.b16 %v1766, %v1762
    %v2247 = vpack.c.b16 %v1767, %v1763
    %v2248 = vpack.c.b16 %v1772, %v1768
    %v2249 = vpack.c.b16 %v1773, %v1769
    %v2250 = vpack.c.b16 %v1774, %v1770
    %v2251 = vpack.c.b16 %v1775, %v1771
    %v2252 = vpack.c.b16 %v1780, %v1776
    %v2253 = vpack.c.b16 %v1781, %v1777
    %v2254 = vpack.c.b16 %v1782, %v1778
    %v2255 = vpack.c.b16 %v1783, %v1779
    %v2256 = vpack.c.b16 %v1788, %v1784
    %v2257 = vpack.c.b16 %v1789, %v1785
    %v2258 = vpack.c.b16 %v1790, %v1786
    %v2259 = vpack.c.b16 %v1791, %v1787
    %v2260 = vpack.c.b16 %v1796, %v1792
    %v2261 = vpack.c.b16 %v1797, %v1793
    %v2262 = vpack.c.b16 %v1798, %v1794
    %v2263 = vpack.c.b16 %v1799, %v1795
    %v2264 = vpack.c.b16 %v1804, %v1800
    %v2265 = vpack.c.b16 %v1805, %v1801
    %v2266 = vpack.c.b16 %v1806, %v1802
    %v2267 = vpack.c.b16 %v1807, %v1803
    %v2268 = vpack.c.b16 %v1812, %v1808
    %v2269 = vpack.c.b16 %v1813, %v1809
    %v2270 = vpack.c.b16 %v1814, %v1810
    %v2271 = vpack.c.b16 %v1815, %v1811
    %v2272 = vpack.c.b16 %v1820, %v1816
    %v2273 = vpack.c.b16 %v1821, %v1817
    %v2274 = vpack.c.b16 %v1822, %v1818
    %v2275 = vpack.c.b16 %v1823, %v1819
    %v2276 = vpack.c.b16 %v1828, %v1824
    %v2277 = vpack.c.b16 %v1829, %v1825
    %v2278 = vpack.c.b16 %v1830, %v1826
    %v2279 = vpack.c.b16 %v1831, %v1827
    %v2280 = vpack.c.b16 %v1836, %v1832
    %v2281 = vpack.c.b16 %v1837, %v1833
    %v2282 = vpack.c.b16 %v1838, %v1834
    %v2283 = vpack.c.b16 %v1839, %v1835
    %v2284 = vpack.c.b16 %v1844, %v1840
    %v2285 = vpack.c.b16 %v1845, %v1841
    %v2286 = vpack.c.b16 %v1846, %v1842
    %v2287 = vpack.c.b16 %v1847, %v1843
    %v2288 = vpack.c.b16 %v1852, %v1848
    %v2289 = vpack.c.b16 %v1853, %v1849
    %v2290 = vpack.c.b16 %v1854, %v1850
    %v2291 = vpack.c.b16 %v1855, %v1851
    %v2292 = vpack.c.b16 %v1860, %v1856
    %v2293 = vpack.c.b16 %v1861, %v1857
    %v2294 = vpack.c.b16 %v1862, %v1858
    %v2295 = vpack.c.b16 %v1863, %v1859
    %v2296 = vpack.c.b16 %v1868, %v1864
    %v2297 = vpack.c.b16 %v1869, %v1865
    %v2298 = vpack.c.b16 %v1870, %v1866
    %v2299 = vpack.c.b16 %v1871, %v1867
    %v2300 = vpack.c.b16 %v1876, %v1872
    %v2301 = vpack.c.b16 %v1877, %v1873
    %v2302 = vpack.c.b16 %v1878, %v1874
    %v2303 = vpack.c.b16 %v1879, %v1875
    %v2304 = vpack.c.b16 %v1884, %v1880
    %v2305 = vpack.c.b16 %v1885, %v1881
    %v2306 = vpack.c.b16 %v1886, %v1882
    %v2307 = vpack.c.b16 %v1887, %v1883
    %v2308 = vpack.c.b16 %v1892, %v1888
    %v2309 = vpack.c.b16 %v1893, %v1889
    %v2310 = vpack.c.b16 %v1894, %v1890
    %v2311 = vpack.c.b16 %v1895, %v1891
    %v2312 = vpack.c.b16 %v1900, %v1896
    %v2313 = vpack.c.b16 %v1901, %v1897
    %v2314 = vpack.c.b16 %v1902, %v1898
    %v2315 = vpack.c.b16 %v1903, %v1899
    %v2316 = vpack.c.b16 %v1908, %v1904
    %v2317 = vpack.c.b16 %v1909, %v1905
    %v2318 = vpack.c.b16 %v1910, %v1906
    %v2319 = vpack.c.b16 %v1911, %v1907
    %v2320 = vpack.c.b16 %v1916, %v1912
    %v2321 = vpack.c.b16 %v1917, %v1913
    %v2322 = vpack.c.b16 %v1918, %v1914
    %v2323 = vpack.c.b16 %v1919, %v1915
    %v2324 = vpack.c.b16 %v1924, %v1920
    %v2325 = vpack.c.b16 %v1925, %v1921
    %v2326 = vpack.c.b16 %v1926, %v1922
    %v2327 = vpack.c.b16 %v1927, %v1923
    %v2328 = vpack.c.b16 %v1932, %v1928
    %v2329 = vpack.c.b16 %v1933, %v1929
    %v2330 = vpack.c.b16 %v1934, %v1930
    %v2331 = vpack.c.b16 %v1935, %v1931
    %v2332 = vpack.c.b16 %v1940, %v1936
    %v2333 = vpack.c.b16 %v1941, %v1937
    %v2334 = vpack.c.b16 %v1942, %v1938
    %v2335 = vpack.c.b16 %v1943, %v1939
    %v2336 = vpack.c.b16 %v1948, %v1944
    %v2337 = vpack.c.b16 %v1949, %v1945
    %v2338 = vpack.c.b16 %v1950, %v1946
    %v2339 = vpack.c.b16 %v1951, %v1947
    %v2340 = vpack.c.b16 %v1956, %v1952
    %v2341 = vpack.c.b16 %v1957, %v1953
    %v2342 = vpack.c.b16 %v1958, %v1954
    %v2343 = vpack.c.b16 %v1959, %v1955
    %2728 = vmatprep.subr.bf16.mxu0 %v1961
    %2729 = vmatpush1.bf16.xpose.msra.mxu0 %v1960
    %2730 = vmatprep.subr.bf16.mxu0 %v1965
    %2731 = vmatpush1.bf16.xpose.msra.mxu0 %v1964
    %2732 = vmatprep.subr.bf16.mxu0 %v1969
    %2733 = vmatpush1.bf16.xpose.msra.mxu0 %v1968
    %2734 = vmatprep.subr.bf16.mxu0 %v1973
    %2735 = vmatpush1.bf16.xpose.msra.mxu0 %v1972
    %2736 = vmatprep.subr.bf16.mxu0 %v1977
    %2737 = vmatpush1.bf16.xpose.msra.mxu0 %v1976
    %2738 = vmatprep.subr.bf16.mxu0 %v1981
    %2739 = vmatpush1.bf16.xpose.msra.mxu0 %v1980
    %2740 = vmatprep.subr.bf16.mxu0 %v1985
    %2741 = vmatpush1.bf16.xpose.msra.mxu0 %v1984
    %2742 = vmatprep.subr.bf16.mxu0 %v1989
    %2743 = vmatpush1.bf16.xpose.msra.mxu0 %v1988
    %2744 = vmatprep.subr.bf16.mxu0 %v1993
    %2745 = vmatpush1.bf16.xpose.msra.mxu0 %v1992
    %2746 = vmatprep.subr.bf16.mxu0 %v1997
    %2747 = vmatpush1.bf16.xpose.msra.mxu0 %v1996
    %2748 = vmatprep.subr.bf16.mxu0 %v2001
    %2749 = vmatpush1.bf16.xpose.msra.mxu0 %v2000
    %2750 = vmatprep.subr.bf16.mxu0 %v2005
    %2751 = vmatpush1.bf16.xpose.msra.mxu0 %v2004
    %2752 = vmatprep.subr.bf16.mxu0 %v2009
    %2753 = vmatpush1.bf16.xpose.msra.mxu0 %v2008
    %2754 = vmatprep.subr.bf16.mxu0 %v2013
    %2755 = vmatpush1.bf16.xpose.msra.mxu0 %v2012
    %2756 = vmatprep.subr.bf16.mxu0 %v2017
    %2757 = vmatpush1.bf16.xpose.msra.mxu0 %v2016
    %2758 = vmatprep.subr.bf16.mxu0 %v2021
    %2759 = vmatpush1.bf16.xpose.msra.mxu0 %v2020
    %2760 = vmatprep.mubr.bf16.mxu0 %v681
    %2761 = vmatmul.mubr.bf16.gmra.mrb[0].mxu0 %v680
    %v2762 = vpop.f32.mrb[0].mxu0
    %v2763 = vadd.f32 0.0, %v2762
    %v2764 = vpop.f32.mrb[0].mxu0
    %v2765 = vadd.f32 0.0, %v2764
    %v2766 = vpop.f32.mrb[0].mxu0
    %v2767 = vadd.f32 0.0, %v2766
    %v2768 = vpop.f32.mrb[0].mxu0
    %v2769 = vadd.f32 0.0, %v2768
    %2770 = vmatprep.mubr.bf16.mxu0 %v685
    %2771 = vmatmul.mubr.bf16.gmra.mrb[0].mxu0 %v684
    %v2772 = vpop.f32.mrb[0].mxu0
    %v2773 = vadd.f32 0.0, %v2772
    %v2774 = vpop.f32.mrb[0].mxu0
    %v2775 = vadd.f32 0.0, %v2774
    %v2776 = vpop.f32.mrb[0].mxu0
    %v2777 = vadd.f32 0.0, %v2776
    %v2778 = vpop.f32.mrb[0].mxu0
    %v2779 = vadd.f32 0.0, %v2778
    %2780 = vmatprep.mubr.bf16.mxu0 %v689
    %2781 = vmatmul.mubr.bf16.gmra.mrb[0].mxu0 %v688
    %v2782 = vpop.f32.mrb[0].mxu0
    %v2783 = vadd.f32 0.0, %v2782
    %v2784 = vpop.f32.mrb[0].mxu0
    %v2785 = vadd.f32 0.0, %v2784
    %v2786 = vpop.f32.mrb[0].mxu0
    %v2787 = vadd.f32 0.0, %v2786
    %v2788 = vpop.f32.mrb[0].mxu0
    %v2789 = vadd.f32 0.0, %v2788
    %2790 = vmatprep.mubr.bf16.mxu0 %v693
    %2791 = vmatmul.mubr.bf16.gmra.mrb[0].mxu0 %v692
    %v2792 = vpop.f32.mrb[0].mxu0
    %v2793 = vadd.f32 0.0, %v2792
    %v2794 = vpop.f32.mrb[0].mxu0
    %v2795 = vadd.f32 0.0, %v2794
    %v2796 = vpop.f32.mrb[0].mxu0
    %v2797 = vadd.f32 0.0, %v2796
    %v2798 = vpop.f32.mrb[0].mxu0
    %v2799 = vadd.f32 0.0, %v2798
    %2800 = vmatprep.mubr.bf16.mxu0 %v697
    %2801 = vmatmul.mubr.bf16.gmra.mrb[0].mxu0 %v696
    %v2802 = vpop.f32.mrb[0].mxu0
    %v2803 = vadd.f32 0.0, %v2802
    %v2804 = vpop.f32.mrb[0].mxu0
    %v2805 = vadd.f32 0.0, %v2804
    %v2806 = vpop.f32.mrb[0].mxu0
    %v2807 = vadd.f32 0.0, %v2806
    %v2808 = vpop.f32.mrb[0].mxu0
    %v2809 = vadd.f32 0.0, %v2808
    %2810 = vmatprep.mubr.bf16.mxu0 %v701
    %2811 = vmatmul.mubr.bf16.gmra.mrb[0].mxu0 %v700
    %v2812 = vpop.f32.mrb[0].mxu0
    %v2813 = vadd.f32 0.0, %v2812
    %v2814 = vpop.f32.mrb[0].mxu0
    %v2815 = vadd.f32 0.0, %v2814
    %v2816 = vpop.f32.mrb[0].mxu0
    %v2817 = vadd.f32 0.0, %v2816
    %v2818 = vpop.f32.mrb[0].mxu0
    %v2819 = vadd.f32 0.0, %v2818
    %2820 = vmatprep.mubr.bf16.mxu0 %v705
    %2821 = vmatmul.mubr.bf16.gmra.mrb[0].mxu0 %v704
    %v2822 = vpop.f32.mrb[0].mxu0
    %v2823 = vadd.f32 0.0, %v2822
    %v2824 = vpop.f32.mrb[0].mxu0
    %v2825 = vadd.f32 0.0, %v2824
    %v2826 = vpop.f32.mrb[0].mxu0
    %v2827 = vadd.f32 0.0, %v2826
    %v2828 = vpop.f32.mrb[0].mxu0
    %v2829 = vadd.f32 0.0, %v2828
    %2830 = vmatprep.mubr.bf16.mxu0 %v709
    %2831 = vmatmul.mubr.bf16.gmra.mrb[0].mxu0 %v708
    %v2832 = vpop.f32.mrb[0].mxu0
    %v2833 = vadd.f32 0.0, %v2832
    %v2834 = vpop.f32.mrb[0].mxu0
    %v2835 = vadd.f32 0.0, %v2834
    %v2836 = vpop.f32.mrb[0].mxu0
    %v2837 = vadd.f32 0.0, %v2836
    %v2838 = vpop.f32.mrb[0].mxu0
    %v2839 = vadd.f32 0.0, %v2838
    %2840 = vmatprep.mubr.bf16.mxu0 %v713
    %2841 = vmatmul.mubr.bf16.gmra.mrb[0].mxu0 %v712
    %v2842 = vpop.f32.mrb[0].mxu0
    %v2843 = vadd.f32 0.0, %v2842
    %v2844 = vpop.f32.mrb[0].mxu0
    %v2845 = vadd.f32 0.0, %v2844
    %v2846 = vpop.f32.mrb[0].mxu0
    %v2847 = vadd.f32 0.0, %v2846
    %v2848 = vpop.f32.mrb[0].mxu0
    %v2849 = vadd.f32 0.0, %v2848
    %2850 = vmatprep.mubr.bf16.mxu0 %v717
    %2851 = vmatmul.mubr.bf16.gmra.mrb[0].mxu0 %v716
    %v2852 = vpop.f32.mrb[0].mxu0
    %v2853 = vadd.f32 0.0, %v2852
    %v2854 = vpop.f32.mrb[0].mxu0
    %v2855 = vadd.f32 0.0, %v2854
    %v2856 = vpop.f32.mrb[0].mxu0
    %v2857 = vadd.f32 0.0, %v2856
    %v2858 = vpop.f32.mrb[0].mxu0
    %v2859 = vadd.f32 0.0, %v2858
    %2860 = vmatprep.mubr.bf16.mxu0 %v721
    %2861 = vmatmul.mubr.bf16.gmra.mrb[0].mxu0 %v720
    %v2862 = vpop.f32.mrb[0].mxu0
    %v2863 = vadd.f32 0.0, %v2862
    %v2864 = vpop.f32.mrb[0].mxu0
    %v2865 = vadd.f32 0.0, %v2864
    %v2866 = vpop.f32.mrb[0].mxu0
    %v2867 = vadd.f32 0.0, %v2866
    %v2868 = vpop.f32.mrb[0].mxu0
    %v2869 = vadd.f32 0.0, %v2868
    %2870 = vmatprep.mubr.bf16.mxu0 %v725
    %2871 = vmatmul.mubr.bf16.gmra.mrb[0].mxu0 %v724
    %v2872 = vpop.f32.mrb[0].mxu0
    %v2873 = vadd.f32 0.0, %v2872
    %v2874 = vpop.f32.mrb[0].mxu0
    %v2875 = vadd.f32 0.0, %v2874
    %v2876 = vpop.f32.mrb[0].mxu0
    %v2877 = vadd.f32 0.0, %v2876
    %v2878 = vpop.f32.mrb[0].mxu0
    %v2879 = vadd.f32 0.0, %v2878
    %2880 = vmatprep.mubr.bf16.mxu0 %v729
    %2881 = vmatmul.mubr.bf16.gmra.mrb[0].mxu0 %v728
    %v2882 = vpop.f32.mrb[0].mxu0
    %v2883 = vadd.f32 0.0, %v2882
    %v2884 = vpop.f32.mrb[0].mxu0
    %v2885 = vadd.f32 0.0, %v2884
    %v2886 = vpop.f32.mrb[0].mxu0
    %v2887 = vadd.f32 0.0, %v2886
    %v2888 = vpop.f32.mrb[0].mxu0
    %v2889 = vadd.f32 0.0, %v2888
    %2890 = vmatprep.mubr.bf16.mxu0 %v733
    %2891 = vmatmul.mubr.bf16.gmra.mrb[0].mxu0 %v732
    %v2892 = vpop.f32.mrb[0].mxu0
    %v2893 = vadd.f32 0.0, %v2892
    %v2894 = vpop.f32.mrb[0].mxu0
    %v2895 = vadd.f32 0.0, %v2894
    %v2896 = vpop.f32.mrb[0].mxu0
    %v2897 = vadd.f32 0.0, %v2896
    %v2898 = vpop.f32.mrb[0].mxu0
    %v2899 = vadd.f32 0.0, %v2898
    %2900 = vmatprep.mubr.bf16.mxu0 %v737
    %2901 = vmatmul.mubr.bf16.gmra.mrb[0].mxu0 %v736
    %v2902 = vpop.f32.mrb[0].mxu0
    %v2903 = vadd.f32 0.0, %v2902
    %v2904 = vpop.f32.mrb[0].mxu0
    %v2905 = vadd.f32 0.0, %v2904
    %v2906 = vpop.f32.mrb[0].mxu0
    %v2907 = vadd.f32 0.0, %v2906
    %v2908 = vpop.f32.mrb[0].mxu0
    %v2909 = vadd.f32 0.0, %v2908
    %2910 = vmatprep.mubr.bf16.mxu0 %v741
    %2911 = vmatmul.mubr.bf16.gmra.mrb[0].mxu0 %v740
    %v2912 = vpop.f32.mrb[0].mxu0
    %v2913 = vadd.f32 0.0, %v2912
    %v2914 = vpop.f32.mrb[0].mxu0
    %v2915 = vadd.f32 0.0, %v2914
    %v2916 = vpop.f32.mrb[0].mxu0
    %v2917 = vadd.f32 0.0, %v2916
    %v2918 = vpop.f32.mrb[0].mxu0
    %v2919 = vadd.f32 0.0, %v2918
    %2920 = vdwg.mxu0
    %2921 = vmatprep.subr.bf16.mxu0 %v1963
    %2922 = vmatpush1.bf16.xpose.msra.mxu0 %v1962
    %2923 = vmatprep.subr.bf16.mxu0 %v1967
    %2924 = vmatpush1.bf16.xpose.msra.mxu0 %v1966
    %2925 = vmatprep.subr.bf16.mxu0 %v1971
    %2926 = vmatpush1.bf16.xpose.msra.mxu0 %v1970
    %2927 = vmatprep.subr.bf16.mxu0 %v1975
    %2928 = vmatpush1.bf16.xpose.msra.mxu0 %v1974
    %2929 = vmatprep.subr.bf16.mxu0 %v1979
    %2930 = vmatpush1.bf16.xpose.msra.mxu0 %v1978
    %2931 = vmatprep.subr.bf16.mxu0 %v1983
    %2932 = vmatpush1.bf16.xpose.msra.mxu0 %v1982
    %2933 = vmatprep.subr.bf16.mxu0 %v1987
    %2934 = vmatpush1.bf16.xpose.msra.mxu0 %v1986
    %2935 = vmatprep.subr.bf16.mxu0 %v1991
    %2936 = vmatpush1.bf16.xpose.msra.mxu0 %v1990
    %2937 = vmatprep.subr.bf16.mxu0 %v1995
    %2938 = vmatpush1.bf16.xpose.msra.mxu0 %v1994
    %2939 = vmatprep.subr.bf16.mxu0 %v1999
    %2940 = vmatpush1.bf16.xpose.msra.mxu0 %v1998
    %2941 = vmatprep.subr.bf16.mxu0 %v2003
    %2942 = vmatpush1.bf16.xpose.msra.mxu0 %v2002
    %2943 = vmatprep.subr.bf16.mxu0 %v2007
    %2944 = vmatpush1.bf16.xpose.msra.mxu0 %v2006
    %2945 = vmatprep.subr.bf16.mxu0 %v2011
    %2946 = vmatpush1.bf16.xpose.msra.mxu0 %v2010
    %2947 = vmatprep.subr.bf16.mxu0 %v2015
    %2948 = vmatpush1.bf16.xpose.msra.mxu0 %v2014
    %2949 = vmatprep.subr.bf16.mxu0 %v2019
    %2950 = vmatpush1.bf16.xpose.msra.mxu0 %v2018
    %2951 = vmatprep.subr.bf16.mxu0 %v2023
    %2952 = vmatpush1.bf16.xpose.msra.mxu0 %v2022
    %2953 = vmatprep.mubr.bf16.mxu0 %v683
    %2954 = vmatmul.mubr.bf16.gmra.mrb[0].mxu0 %v682
    %v2955 = vpop.f32.mrb[0].mxu0
    %v2956 = vadd.f32 %v2763, %v2955
    %v2957 = vpop.f32.mrb[0].mxu0
    %v2958 = vadd.f32 %v2765, %v2957
    %v2959 = vpop.f32.mrb[0].mxu0
    %v2960 = vadd.f32 %v2767, %v2959
    %v2961 = vpop.f32.mrb[0].mxu0
    %v2962 = vadd.f32 %v2769, %v2961
    %2963 = vmatprep.mubr.bf16.mxu0 %v687
    %2964 = vmatmul.mubr.bf16.gmra.mrb[0].mxu0 %v686
    %v2965 = vpop.f32.mrb[0].mxu0
    %v2966 = vadd.f32 %v2773, %v2965
    %v2967 = vpop.f32.mrb[0].mxu0
    %v2968 = vadd.f32 %v2775, %v2967
    %v2969 = vpop.f32.mrb[0].mxu0
    %v2970 = vadd.f32 %v2777, %v2969
    %v2971 = vpop.f32.mrb[0].mxu0
    %v2972 = vadd.f32 %v2779, %v2971
    %2973 = vmatprep.mubr.bf16.mxu0 %v691
    %2974 = vmatmul.mubr.bf16.gmra.mrb[0].mxu0 %v690
    %v2975 = vpop.f32.mrb[0].mxu0
    %v2976 = vadd.f32 %v2783, %v2975
    %v2977 = vpop.f32.mrb[0].mxu0
    %v2978 = vadd.f32 %v2785, %v2977
    %v2979 = vpop.f32.mrb[0].mxu0
    %v2980 = vadd.f32 %v2787, %v2979
    %v2981 = vpop.f32.mrb[0].mxu0
    %v2982 = vadd.f32 %v2789, %v2981
    %2983 = vmatprep.mubr.bf16.mxu0 %v695
    %2984 = vmatmul.mubr.bf16.gmra.mrb[0].mxu0 %v694
    %v2985 = vpop.f32.mrb[0].mxu0
    %v2986 = vadd.f32 %v2793, %v2985
    %v2987 = vpop.f32.mrb[0].mxu0
    %v2988 = vadd.f32 %v2795, %v2987
    %v2989 = vpop.f32.mrb[0].mxu0
    %v2990 = vadd.f32 %v2797, %v2989
    %v2991 = vpop.f32.mrb[0].mxu0
    %v2992 = vadd.f32 %v2799, %v2991
    %2993 = vmatprep.mubr.bf16.mxu0 %v699
    %2994 = vmatmul.mubr.bf16.gmra.mrb[0].mxu0 %v698
    %v2995 = vpop.f32.mrb[0].mxu0
    %v2996 = vadd.f32 %v2803, %v2995
    %v2997 = vpop.f32.mrb[0].mxu0
    %v2998 = vadd.f32 %v2805, %v2997
    %v2999 = vpop.f32.mrb[0].mxu0
    %v3000 = vadd.f32 %v2807, %v2999
    %v3001 = vpop.f32.mrb[0].mxu0
    %v3002 = vadd.f32 %v2809, %v3001
    %3003 = vmatprep.mubr.bf16.mxu0 %v703
    %3004 = vmatmul.mubr.bf16.gmra.mrb[0].mxu0 %v702
    %v3005 = vpop.f32.mrb[0].mxu0
    %v3006 = vadd.f32 %v2813, %v3005
    %v3007 = vpop.f32.mrb[0].mxu0
    %v3008 = vadd.f32 %v2815, %v3007
    %v3009 = vpop.f32.mrb[0].mxu0
    %v3010 = vadd.f32 %v2817, %v3009
    %v3011 = vpop.f32.mrb[0].mxu0
    %v3012 = vadd.f32 %v2819, %v3011
    %3013 = vmatprep.mubr.bf16.mxu0 %v707
    %3014 = vmatmul.mubr.bf16.gmra.mrb[0].mxu0 %v706
    %v3015 = vpop.f32.mrb[0].mxu0
    %v3016 = vadd.f32 %v2823, %v3015
    %v3017 = vpop.f32.mrb[0].mxu0
    %v3018 = vadd.f32 %v2825, %v3017
    %v3019 = vpop.f32.mrb[0].mxu0
    %v3020 = vadd.f32 %v2827, %v3019
    %v3021 = vpop.f32.mrb[0].mxu0
    %v3022 = vadd.f32 %v2829, %v3021
    %3023 = vmatprep.mubr.bf16.mxu0 %v711
    %3024 = vmatmul.mubr.bf16.gmra.mrb[0].mxu0 %v710
    %v3025 = vpop.f32.mrb[0].mxu0
    %v3026 = vadd.f32 %v2833, %v3025
    %v3027 = vpop.f32.mrb[0].mxu0
    %v3028 = vadd.f32 %v2835, %v3027
    %v3029 = vpop.f32.mrb[0].mxu0
    %v3030 = vadd.f32 %v2837, %v3029
    %v3031 = vpop.f32.mrb[0].mxu0
    %v3032 = vadd.f32 %v2839, %v3031
    %3033 = vmatprep.mubr.bf16.mxu0 %v715
    %3034 = vmatmul.mubr.bf16.gmra.mrb[0].mxu0 %v714
    %v3035 = vpop.f32.mrb[0].mxu0
    %v3036 = vadd.f32 %v2843, %v3035
    %v3037 = vpop.f32.mrb[0].mxu0
    %v3038 = vadd.f32 %v2845, %v3037
    %v3039 = vpop.f32.mrb[0].mxu0
    %v3040 = vadd.f32 %v2847, %v3039
    %v3041 = vpop.f32.mrb[0].mxu0
    %v3042 = vadd.f32 %v2849, %v3041
    %3043 = vmatprep.mubr.bf16.mxu0 %v719
    %3044 = vmatmul.mubr.bf16.gmra.mrb[0].mxu0 %v718
    %v3045 = vpop.f32.mrb[0].mxu0
    %v3046 = vadd.f32 %v2853, %v3045
    %v3047 = vpop.f32.mrb[0].mxu0
    %v3048 = vadd.f32 %v2855, %v3047
    %v3049 = vpop.f32.mrb[0].mxu0
    %v3050 = vadd.f32 %v2857, %v3049
    %v3051 = vpop.f32.mrb[0].mxu0
    %v3052 = vadd.f32 %v2859, %v3051
    %3053 = vmatprep.mubr.bf16.mxu0 %v723
    %3054 = vmatmul.mubr.bf16.gmra.mrb[0].mxu0 %v722
    %v3055 = vpop.f32.mrb[0].mxu0
    %v3056 = vadd.f32 %v2863, %v3055
    %v3057 = vpop.f32.mrb[0].mxu0
    %v3058 = vadd.f32 %v2865, %v3057
    %v3059 = vpop.f32.mrb[0].mxu0
    %v3060 = vadd.f32 %v2867, %v3059
    %v3061 = vpop.f32.mrb[0].mxu0
    %v3062 = vadd.f32 %v2869, %v3061
    %3063 = vmatprep.mubr.bf16.mxu0 %v727
    %3064 = vmatmul.mubr.bf16.gmra.mrb[0].mxu0 %v726
    %v3065 = vpop.f32.mrb[0].mxu0
    %v3066 = vadd.f32 %v2873, %v3065
    %v3067 = vpop.f32.mrb[0].mxu0
    %v3068 = vadd.f32 %v2875, %v3067
    %v3069 = vpop.f32.mrb[0].mxu0
    %v3070 = vadd.f32 %v2877, %v3069
    %v3071 = vpop.f32.mrb[0].mxu0
    %v3072 = vadd.f32 %v2879, %v3071
    %3073 = vmatprep.mubr.bf16.mxu0 %v731
    %3074 = vmatmul.mubr.bf16.gmra.mrb[0].mxu0 %v730
    %v3075 = vpop.f32.mrb[0].mxu0
    %v3076 = vadd.f32 %v2883, %v3075
    %v3077 = vpop.f32.mrb[0].mxu0
    %v3078 = vadd.f32 %v2885, %v3077
    %v3079 = vpop.f32.mrb[0].mxu0
    %v3080 = vadd.f32 %v2887, %v3079
    %v3081 = vpop.f32.mrb[0].mxu0
    %v3082 = vadd.f32 %v2889, %v3081
    %3083 = vmatprep.mubr.bf16.mxu0 %v735
    %3084 = vmatmul.mubr.bf16.gmra.mrb[0].mxu0 %v734
    %v3085 = vpop.f32.mrb[0].mxu0
    %v3086 = vadd.f32 %v2893, %v3085
    %v3087 = vpop.f32.mrb[0].mxu0
    %v3088 = vadd.f32 %v2895, %v3087
    %v3089 = vpop.f32.mrb[0].mxu0
    %v3090 = vadd.f32 %v2897, %v3089
    %v3091 = vpop.f32.mrb[0].mxu0
    %v3092 = vadd.f32 %v2899, %v3091
    %3093 = vmatprep.mubr.bf16.mxu0 %v739
    %3094 = vmatmul.mubr.bf16.gmra.mrb[0].mxu0 %v738
    %v3095 = vpop.f32.mrb[0].mxu0
    %v3096 = vadd.f32 %v2903, %v3095
    %v3097 = vpop.f32.mrb[0].mxu0
    %v3098 = vadd.f32 %v2905, %v3097
    %v3099 = vpop.f32.mrb[0].mxu0
    %v3100 = vadd.f32 %v2907, %v3099
    %v3101 = vpop.f32.mrb[0].mxu0
    %v3102 = vadd.f32 %v2909, %v3101
    %3103 = vmatprep.mubr.bf16.mxu0 %v743
    %3104 = vmatmul.mubr.bf16.gmra.mrb[0].mxu0 %v742
    %v3105 = vpop.f32.mrb[0].mxu0
    %v3106 = vadd.f32 %v2913, %v3105
    %v3107 = vpop.f32.mrb[0].mxu0
    %v3108 = vadd.f32 %v2915, %v3107
    %v3109 = vpop.f32.mrb[0].mxu0
    %v3110 = vadd.f32 %v2917, %v3109
    %v3111 = vpop.f32.mrb[0].mxu0
    %v3112 = vadd.f32 %v2919, %v3111
    %3113 = vdwg.mxu0
    %3114 = vmatprep.subr.bf16.mxu0 %v2025
    %3115 = vmatpush1.bf16.xpose.msra.mxu0 %v2024
    %3116 = vmatprep.subr.bf16.mxu0 %v2029
    %3117 = vmatpush1.bf16.xpose.msra.mxu0 %v2028
    %3118 = vmatprep.subr.bf16.mxu0 %v2033
    %3119 = vmatpush1.bf16.xpose.msra.mxu0 %v2032
    %3120 = vmatprep.subr.bf16.mxu0 %v2037
    %3121 = vmatpush1.bf16.xpose.msra.mxu0 %v2036
    %3122 = vmatprep.subr.bf16.mxu0 %v2041
    %3123 = vmatpush1.bf16.xpose.msra.mxu0 %v2040
    %3124 = vmatprep.subr.bf16.mxu0 %v2045
    %3125 = vmatpush1.bf16.xpose.msra.mxu0 %v2044
    %3126 = vmatprep.subr.bf16.mxu0 %v2049
    %3127 = vmatpush1.bf16.xpose.msra.mxu0 %v2048
    %3128 = vmatprep.subr.bf16.mxu0 %v2053
    %3129 = vmatpush1.bf16.xpose.msra.mxu0 %v2052
    %3130 = vmatprep.subr.bf16.mxu0 %v2057
    %3131 = vmatpush1.bf16.xpose.msra.mxu0 %v2056
    %3132 = vmatprep.subr.bf16.mxu0 %v2061
    %3133 = vmatpush1.bf16.xpose.msra.mxu0 %v2060
    %3134 = vmatprep.subr.bf16.mxu0 %v2065
    %3135 = vmatpush1.bf16.xpose.msra.mxu0 %v2064
    %3136 = vmatprep.subr.bf16.mxu0 %v2069
    %3137 = vmatpush1.bf16.xpose.msra.mxu0 %v2068
    %3138 = vmatprep.subr.bf16.mxu0 %v2073
    %3139 = vmatpush1.bf16.xpose.msra.mxu0 %v2072
    %3140 = vmatprep.subr.bf16.mxu0 %v2077
    %3141 = vmatpush1.bf16.xpose.msra.mxu0 %v2076
    %3142 = vmatprep.subr.bf16.mxu0 %v2081
    %3143 = vmatpush1.bf16.xpose.msra.mxu0 %v2080
    %3144 = vmatprep.subr.bf16.mxu0 %v2085
    %3145 = vmatpush1.bf16.xpose.msra.mxu0 %v2084
    %3146 = vmatprep.mubr.bf16.mxu0 %v681
    %3147 = vmatmul.mubr.bf16.gmra.mrb[0].mxu0 %v680
    %v3148 = vpop.f32.mrb[0].mxu0
    %v3149 = vadd.f32 0.0, %v3148
    %v3150 = vpop.f32.mrb[0].mxu0
    %v3151 = vadd.f32 0.0, %v3150
    %v3152 = vpop.f32.mrb[0].mxu0
    %v3153 = vadd.f32 0.0, %v3152
    %v3154 = vpop.f32.mrb[0].mxu0
    %v3155 = vadd.f32 0.0, %v3154
    %3156 = vmatprep.mubr.bf16.mxu0 %v685
    %3157 = vmatmul.mubr.bf16.gmra.mrb[0].mxu0 %v684
    %v3158 = vpop.f32.mrb[0].mxu0
    %v3159 = vadd.f32 0.0, %v3158
    %v3160 = vpop.f32.mrb[0].mxu0
    %v3161 = vadd.f32 0.0, %v3160
    %v3162 = vpop.f32.mrb[0].mxu0
    %v3163 = vadd.f32 0.0, %v3162
    %v3164 = vpop.f32.mrb[0].mxu0
    %v3165 = vadd.f32 0.0, %v3164
    %3166 = vmatprep.mubr.bf16.mxu0 %v689
    %3167 = vmatmul.mubr.bf16.gmra.mrb[0].mxu0 %v688
    %v3168 = vpop.f32.mrb[0].mxu0
    %v3169 = vadd.f32 0.0, %v3168
    %v3170 = vpop.f32.mrb[0].mxu0
    %v3171 = vadd.f32 0.0, %v3170
    %v3172 = vpop.f32.mrb[0].mxu0
    %v3173 = vadd.f32 0.0, %v3172
    %v3174 = vpop.f32.mrb[0].mxu0
    %v3175 = vadd.f32 0.0, %v3174
    %3176 = vmatprep.mubr.bf16.mxu0 %v693
    %3177 = vmatmul.mubr.bf16.gmra.mrb[0].mxu0 %v692
    %v3178 = vpop.f32.mrb[0].mxu0
    %v3179 = vadd.f32 0.0, %v3178
    %v3180 = vpop.f32.mrb[0].mxu0
    %v3181 = vadd.f32 0.0, %v3180
    %v3182 = vpop.f32.mrb[0].mxu0
    %v3183 = vadd.f32 0.0, %v3182
    %v3184 = vpop.f32.mrb[0].mxu0
    %v3185 = vadd.f32 0.0, %v3184
    %3186 = vmatprep.mubr.bf16.mxu0 %v697
    %3187 = vmatmul.mubr.bf16.gmra.mrb[0].mxu0 %v696
    %v3188 = vpop.f32.mrb[0].mxu0
    %v3189 = vadd.f32 0.0, %v3188
    %v3190 = vpop.f32.mrb[0].mxu0
    %v3191 = vadd.f32 0.0, %v3190
    %v3192 = vpop.f32.mrb[0].mxu0
    %v3193 = vadd.f32 0.0, %v3192
    %v3194 = vpop.f32.mrb[0].mxu0
    %v3195 = vadd.f32 0.0, %v3194
    %3196 = vmatprep.mubr.bf16.mxu0 %v701
    %3197 = vmatmul.mubr.bf16.gmra.mrb[0].mxu0 %v700
    %v3198 = vpop.f32.mrb[0].mxu0
    %v3199 = vadd.f32 0.0, %v3198
    %v3200 = vpop.f32.mrb[0].mxu0
    %v3201 = vadd.f32 0.0, %v3200
    %v3202 = vpop.f32.mrb[0].mxu0
    %v3203 = vadd.f32 0.0, %v3202
    %v3204 = vpop.f32.mrb[0].mxu0
    %v3205 = vadd.f32 0.0, %v3204
    %3206 = vmatprep.mubr.bf16.mxu0 %v705
    %3207 = vmatmul.mubr.bf16.gmra.mrb[0].mxu0 %v704
    %v3208 = vpop.f32.mrb[0].mxu0
    %v3209 = vadd.f32 0.0, %v3208
    %v3210 = vpop.f32.mrb[0].mxu0
    %v3211 = vadd.f32 0.0, %v3210
    %v3212 = vpop.f32.mrb[0].mxu0
    %v3213 = vadd.f32 0.0, %v3212
    %v3214 = vpop.f32.mrb[0].mxu0
    %v3215 = vadd.f32 0.0, %v3214
    %3216 = vmatprep.mubr.bf16.mxu0 %v709
    %3217 = vmatmul.mubr.bf16.gmra.mrb[0].mxu0 %v708
    %v3218 = vpop.f32.mrb[0].mxu0
    %v3219 = vadd.f32 0.0, %v3218
    %v3220 = vpop.f32.mrb[0].mxu0
    %v3221 = vadd.f32 0.0, %v3220
    %v3222 = vpop.f32.mrb[0].mxu0
    %v3223 = vadd.f32 0.0, %v3222
    %v3224 = vpop.f32.mrb[0].mxu0
    %v3225 = vadd.f32 0.0, %v3224
    %3226 = vmatprep.mubr.bf16.mxu0 %v713
    %3227 = vmatmul.mubr.bf16.gmra.mrb[0].mxu0 %v712
    %v3228 = vpop.f32.mrb[0].mxu0
    %v3229 = vadd.f32 0.0, %v3228
    %v3230 = vpop.f32.mrb[0].mxu0
    %v3231 = vadd.f32 0.0, %v3230
    %v3232 = vpop.f32.mrb[0].mxu0
    %v3233 = vadd.f32 0.0, %v3232
    %v3234 = vpop.f32.mrb[0].mxu0
    %v3235 = vadd.f32 0.0, %v3234
    %3236 = vmatprep.mubr.bf16.mxu0 %v717
    %3237 = vmatmul.mubr.bf16.gmra.mrb[0].mxu0 %v716
    %v3238 = vpop.f32.mrb[0].mxu0
    %v3239 = vadd.f32 0.0, %v3238
    %v3240 = vpop.f32.mrb[0].mxu0
    %v3241 = vadd.f32 0.0, %v3240
    %v3242 = vpop.f32.mrb[0].mxu0
    %v3243 = vadd.f32 0.0, %v3242
    %v3244 = vpop.f32.mrb[0].mxu0
    %v3245 = vadd.f32 0.0, %v3244
    %3246 = vmatprep.mubr.bf16.mxu0 %v721
    %3247 = vmatmul.mubr.bf16.gmra.mrb[0].mxu0 %v720
    %v3248 = vpop.f32.mrb[0].mxu0
    %v3249 = vadd.f32 0.0, %v3248
    %v3250 = vpop.f32.mrb[0].mxu0
    %v3251 = vadd.f32 0.0, %v3250
    %v3252 = vpop.f32.mrb[0].mxu0
    %v3253 = vadd.f32 0.0, %v3252
    %v3254 = vpop.f32.mrb[0].mxu0
    %v3255 = vadd.f32 0.0, %v3254
    %3256 = vmatprep.mubr.bf16.mxu0 %v725
    %3257 = vmatmul.mubr.bf16.gmra.mrb[0].mxu0 %v724
    %v3258 = vpop.f32.mrb[0].mxu0
    %v3259 = vadd.f32 0.0, %v3258
    %v3260 = vpop.f32.mrb[0].mxu0
    %v3261 = vadd.f32 0.0, %v3260
    %v3262 = vpop.f32.mrb[0].mxu0
    %v3263 = vadd.f32 0.0, %v3262
    %v3264 = vpop.f32.mrb[0].mxu0
    %v3265 = vadd.f32 0.0, %v3264
    %3266 = vmatprep.mubr.bf16.mxu0 %v729
    %3267 = vmatmul.mubr.bf16.gmra.mrb[0].mxu0 %v728
    %v3268 = vpop.f32.mrb[0].mxu0
    %v3269 = vadd.f32 0.0, %v3268
    %v3270 = vpop.f32.mrb[0].mxu0
    %v3271 = vadd.f32 0.0, %v3270
    %v3272 = vpop.f32.mrb[0].mxu0
    %v3273 = vadd.f32 0.0, %v3272
    %v3274 = vpop.f32.mrb[0].mxu0
    %v3275 = vadd.f32 0.0, %v3274
    %3276 = vmatprep.mubr.bf16.mxu0 %v733
    %3277 = vmatmul.mubr.bf16.gmra.mrb[0].mxu0 %v732
    %v3278 = vpop.f32.mrb[0].mxu0
    %v3279 = vadd.f32 0.0, %v3278
    %v3280 = vpop.f32.mrb[0].mxu0
    %v3281 = vadd.f32 0.0, %v3280
    %v3282 = vpop.f32.mrb[0].mxu0
    %v3283 = vadd.f32 0.0, %v3282
    %v3284 = vpop.f32.mrb[0].mxu0
    %v3285 = vadd.f32 0.0, %v3284
    %3286 = vmatprep.mubr.bf16.mxu0 %v737
    %3287 = vmatmul.mubr.bf16.gmra.mrb[0].mxu0 %v736
    %v3288 = vpop.f32.mrb[0].mxu0
    %v3289 = vadd.f32 0.0, %v3288
    %v3290 = vpop.f32.mrb[0].mxu0
    %v3291 = vadd.f32 0.0, %v3290
    %v3292 = vpop.f32.mrb[0].mxu0
    %v3293 = vadd.f32 0.0, %v3292
    %v3294 = vpop.f32.mrb[0].mxu0
    %v3295 = vadd.f32 0.0, %v3294
    %3296 = vmatprep.mubr.bf16.mxu0 %v741
    %3297 = vmatmul.mubr.bf16.gmra.mrb[0].mxu0 %v740
    %v3298 = vpop.f32.mrb[0].mxu0
    %v3299 = vadd.f32 0.0, %v3298
    %v3300 = vpop.f32.mrb[0].mxu0
    %v3301 = vadd.f32 0.0, %v3300
    %v3302 = vpop.f32.mrb[0].mxu0
    %v3303 = vadd.f32 0.0, %v3302
    %v3304 = vpop.f32.mrb[0].mxu0
    %v3305 = vadd.f32 0.0, %v3304
    %3306 = vdwg.mxu0
    %3307 = vmatprep.subr.bf16.mxu0 %v2027
    %3308 = vmatpush1.bf16.xpose.msra.mxu0 %v2026
    %3309 = vmatprep.subr.bf16.mxu0 %v2031
    %3310 = vmatpush1.bf16.xpose.msra.mxu0 %v2030
    %3311 = vmatprep.subr.bf16.mxu0 %v2035
    %3312 = vmatpush1.bf16.xpose.msra.mxu0 %v2034
    %3313 = vmatprep.subr.bf16.mxu0 %v2039
    %3314 = vmatpush1.bf16.xpose.msra.mxu0 %v2038
    %3315 = vmatprep.subr.bf16.mxu0 %v2043
    %3316 = vmatpush1.bf16.xpose.msra.mxu0 %v2042
    %3317 = vmatprep.subr.bf16.mxu0 %v2047
    %3318 = vmatpush1.bf16.xpose.msra.mxu0 %v2046
    %3319 = vmatprep.subr.bf16.mxu0 %v2051
    %3320 = vmatpush1.bf16.xpose.msra.mxu0 %v2050
    %3321 = vmatprep.subr.bf16.mxu0 %v2055
    %3322 = vmatpush1.bf16.xpose.msra.mxu0 %v2054
    %3323 = vmatprep.subr.bf16.mxu0 %v2059
    %3324 = vmatpush1.bf16.xpose.msra.mxu0 %v2058
    %3325 = vmatprep.subr.bf16.mxu0 %v2063
    %3326 = vmatpush1.bf16.xpose.msra.mxu0 %v2062
    %3327 = vmatprep.subr.bf16.mxu0 %v2067
    %3328 = vmatpush1.bf16.xpose.msra.mxu0 %v2066
    %3329 = vmatprep.subr.bf16.mxu0 %v2071
    %3330 = vmatpush1.bf16.xpose.msra.mxu0 %v2070
    %3331 = vmatprep.subr.bf16.mxu0 %v2075
    %3332 = vmatpush1.bf16.xpose.msra.mxu0 %v2074
    %3333 = vmatprep.subr.bf16.mxu0 %v2079
    %3334 = vmatpush1.bf16.xpose.msra.mxu0 %v2078
    %3335 = vmatprep.subr.bf16.mxu0 %v2083
    %3336 = vmatpush1.bf16.xpose.msra.mxu0 %v2082
    %3337 = vmatprep.subr.bf16.mxu0 %v2087
    %3338 = vmatpush1.bf16.xpose.msra.mxu0 %v2086
    %3339 = vmatprep.mubr.bf16.mxu0 %v683
    %3340 = vmatmul.mubr.bf16.gmra.mrb[0].mxu0 %v682
    %v3341 = vpop.f32.mrb[0].mxu0
    %v3342 = vadd.f32 %v3149, %v3341
    %v3343 = vpop.f32.mrb[0].mxu0
    %v3344 = vadd.f32 %v3151, %v3343
    %v3345 = vpop.f32.mrb[0].mxu0
    %v3346 = vadd.f32 %v3153, %v3345
    %v3347 = vpop.f32.mrb[0].mxu0
    %v3348 = vadd.f32 %v3155, %v3347
    %3349 = vmatprep.mubr.bf16.mxu0 %v687
    %3350 = vmatmul.mubr.bf16.gmra.mrb[0].mxu0 %v686
    %v3351 = vpop.f32.mrb[0].mxu0
    %v3352 = vadd.f32 %v3159, %v3351
    %v3353 = vpop.f32.mrb[0].mxu0
    %v3354 = vadd.f32 %v3161, %v3353
    %v3355 = vpop.f32.mrb[0].mxu0
    %v3356 = vadd.f32 %v3163, %v3355
    %v3357 = vpop.f32.mrb[0].mxu0
    %v3358 = vadd.f32 %v3165, %v3357
    %3359 = vmatprep.mubr.bf16.mxu0 %v691
    %3360 = vmatmul.mubr.bf16.gmra.mrb[0].mxu0 %v690
    %v3361 = vpop.f32.mrb[0].mxu0
    %v3362 = vadd.f32 %v3169, %v3361
    %v3363 = vpop.f32.mrb[0].mxu0
    %v3364 = vadd.f32 %v3171, %v3363
    %v3365 = vpop.f32.mrb[0].mxu0
    %v3366 = vadd.f32 %v3173, %v3365
    %v3367 = vpop.f32.mrb[0].mxu0
    %v3368 = vadd.f32 %v3175, %v3367
    %3369 = vmatprep.mubr.bf16.mxu0 %v695
    %3370 = vmatmul.mubr.bf16.gmra.mrb[0].mxu0 %v694
    %v3371 = vpop.f32.mrb[0].mxu0
    %v3372 = vadd.f32 %v3179, %v3371
    %v3373 = vpop.f32.mrb[0].mxu0
    %v3374 = vadd.f32 %v3181, %v3373
    %v3375 = vpop.f32.mrb[0].mxu0
    %v3376 = vadd.f32 %v3183, %v3375
    %v3377 = vpop.f32.mrb[0].mxu0
    %v3378 = vadd.f32 %v3185, %v3377
    %3379 = vmatprep.mubr.bf16.mxu0 %v699
    %3380 = vmatmul.mubr.bf16.gmra.mrb[0].mxu0 %v698
    %v3381 = vpop.f32.mrb[0].mxu0
    %v3382 = vadd.f32 %v3189, %v3381
    %v3383 = vpop.f32.mrb[0].mxu0
    %v3384 = vadd.f32 %v3191, %v3383
    %v3385 = vpop.f32.mrb[0].mxu0
    %v3386 = vadd.f32 %v3193, %v3385
    %v3387 = vpop.f32.mrb[0].mxu0
    %v3388 = vadd.f32 %v3195, %v3387
    %3389 = vmatprep.mubr.bf16.mxu0 %v703
    %3390 = vmatmul.mubr.bf16.gmra.mrb[0].mxu0 %v702
    %v3391 = vpop.f32.mrb[0].mxu0
    %v3392 = vadd.f32 %v3199, %v3391
    %v3393 = vpop.f32.mrb[0].mxu0
    %v3394 = vadd.f32 %v3201, %v3393
    %v3395 = vpop.f32.mrb[0].mxu0
    %v3396 = vadd.f32 %v3203, %v3395
    %v3397 = vpop.f32.mrb[0].mxu0
    %v3398 = vadd.f32 %v3205, %v3397
    %3399 = vmatprep.mubr.bf16.mxu0 %v707
    %3400 = vmatmul.mubr.bf16.gmra.mrb[0].mxu0 %v706
    %v3401 = vpop.f32.mrb[0].mxu0
    %v3402 = vadd.f32 %v3209, %v3401
    %v3403 = vpop.f32.mrb[0].mxu0
    %v3404 = vadd.f32 %v3211, %v3403
    %v3405 = vpop.f32.mrb[0].mxu0
    %v3406 = vadd.f32 %v3213, %v3405
    %v3407 = vpop.f32.mrb[0].mxu0
    %v3408 = vadd.f32 %v3215, %v3407
    %3409 = vmatprep.mubr.bf16.mxu0 %v711
    %3410 = vmatmul.mubr.bf16.gmra.mrb[0].mxu0 %v710
    %v3411 = vpop.f32.mrb[0].mxu0
    %v3412 = vadd.f32 %v3219, %v3411
    %v3413 = vpop.f32.mrb[0].mxu0
    %v3414 = vadd.f32 %v3221, %v3413
    %v3415 = vpop.f32.mrb[0].mxu0
    %v3416 = vadd.f32 %v3223, %v3415
    %v3417 = vpop.f32.mrb[0].mxu0
    %v3418 = vadd.f32 %v3225, %v3417
    %3419 = vmatprep.mubr.bf16.mxu0 %v715
    %3420 = vmatmul.mubr.bf16.gmra.mrb[0].mxu0 %v714
    %v3421 = vpop.f32.mrb[0].mxu0
    %v3422 = vadd.f32 %v3229, %v3421
    %v3423 = vpop.f32.mrb[0].mxu0
    %v3424 = vadd.f32 %v3231, %v3423
    %v3425 = vpop.f32.mrb[0].mxu0
    %v3426 = vadd.f32 %v3233, %v3425
    %v3427 = vpop.f32.mrb[0].mxu0
    %v3428 = vadd.f32 %v3235, %v3427
    %3429 = vmatprep.mubr.bf16.mxu0 %v719
    %3430 = vmatmul.mubr.bf16.gmra.mrb[0].mxu0 %v718
    %v3431 = vpop.f32.mrb[0].mxu0
    %v3432 = vadd.f32 %v3239, %v3431
    %v3433 = vpop.f32.mrb[0].mxu0
    %v3434 = vadd.f32 %v3241, %v3433
    %v3435 = vpop.f32.mrb[0].mxu0
    %v3436 = vadd.f32 %v3243, %v3435
    %v3437 = vpop.f32.mrb[0].mxu0
    %v3438 = vadd.f32 %v3245, %v3437
    %3439 = vmatprep.mubr.bf16.mxu0 %v723
    %3440 = vmatmul.mubr.bf16.gmra.mrb[0].mxu0 %v722
    %v3441 = vpop.f32.mrb[0].mxu0
    %v3442 = vadd.f32 %v3249, %v3441
    %v3443 = vpop.f32.mrb[0].mxu0
    %v3444 = vadd.f32 %v3251, %v3443
    %v3445 = vpop.f32.mrb[0].mxu0
    %v3446 = vadd.f32 %v3253, %v3445
    %v3447 = vpop.f32.mrb[0].mxu0
    %v3448 = vadd.f32 %v3255, %v3447
    %3449 = vmatprep.mubr.bf16.mxu0 %v727
    %3450 = vmatmul.mubr.bf16.gmra.mrb[0].mxu0 %v726
    %v3451 = vpop.f32.mrb[0].mxu0
    %v3452 = vadd.f32 %v3259, %v3451
    %v3453 = vpop.f32.mrb[0].mxu0
    %v3454 = vadd.f32 %v3261, %v3453
    %v3455 = vpop.f32.mrb[0].mxu0
    %v3456 = vadd.f32 %v3263, %v3455
    %v3457 = vpop.f32.mrb[0].mxu0
    %v3458 = vadd.f32 %v3265, %v3457
    %3459 = vmatprep.mubr.bf16.mxu0 %v731
    %3460 = vmatmul.mubr.bf16.gmra.mrb[0].mxu0 %v730
    %v3461 = vpop.f32.mrb[0].mxu0
    %v3462 = vadd.f32 %v3269, %v3461
    %v3463 = vpop.f32.mrb[0].mxu0
    %v3464 = vadd.f32 %v3271, %v3463
    %v3465 = vpop.f32.mrb[0].mxu0
    %v3466 = vadd.f32 %v3273, %v3465
    %v3467 = vpop.f32.mrb[0].mxu0
    %v3468 = vadd.f32 %v3275, %v3467
    %3469 = vmatprep.mubr.bf16.mxu0 %v735
    %3470 = vmatmul.mubr.bf16.gmra.mrb[0].mxu0 %v734
    %v3471 = vpop.f32.mrb[0].mxu0
    %v3472 = vadd.f32 %v3279, %v3471
    %v3473 = vpop.f32.mrb[0].mxu0
    %v3474 = vadd.f32 %v3281, %v3473
    %v3475 = vpop.f32.mrb[0].mxu0
    %v3476 = vadd.f32 %v3283, %v3475
    %v3477 = vpop.f32.mrb[0].mxu0
    %v3478 = vadd.f32 %v3285, %v3477
    %3479 = vmatprep.mubr.bf16.mxu0 %v739
    %3480 = vmatmul.mubr.bf16.gmra.mrb[0].mxu0 %v738
    %v3481 = vpop.f32.mrb[0].mxu0
    %v3482 = vadd.f32 %v3289, %v3481
    %v3483 = vpop.f32.mrb[0].mxu0
    %v3484 = vadd.f32 %v3291, %v3483
    %v3485 = vpop.f32.mrb[0].mxu0
    %v3486 = vadd.f32 %v3293, %v3485
    %v3487 = vpop.f32.mrb[0].mxu0
    %v3488 = vadd.f32 %v3295, %v3487
    %3489 = vmatprep.mubr.bf16.mxu0 %v743
    %3490 = vmatmul.mubr.bf16.gmra.mrb[0].mxu0 %v742
    %v3491 = vpop.f32.mrb[0].mxu0
    %v3492 = vadd.f32 %v3299, %v3491
    %v3493 = vpop.f32.mrb[0].mxu0
    %v3494 = vadd.f32 %v3301, %v3493
    %v3495 = vpop.f32.mrb[0].mxu0
    %v3496 = vadd.f32 %v3303, %v3495
    %v3497 = vpop.f32.mrb[0].mxu0
    %v3498 = vadd.f32 %v3305, %v3497
    %3499 = vdwg.mxu0
    %3500 = vmatprep.subr.bf16.mxu0 %v2089
    %3501 = vmatpush1.bf16.xpose.msra.mxu0 %v2088
    %3502 = vmatprep.subr.bf16.mxu0 %v2093
    %3503 = vmatpush1.bf16.xpose.msra.mxu0 %v2092
    %3504 = vmatprep.subr.bf16.mxu0 %v2097
    %3505 = vmatpush1.bf16.xpose.msra.mxu0 %v2096
    %3506 = vmatprep.subr.bf16.mxu0 %v2101
    %3507 = vmatpush1.bf16.xpose.msra.mxu0 %v2100
    %3508 = vmatprep.subr.bf16.mxu0 %v2105
    %3509 = vmatpush1.bf16.xpose.msra.mxu0 %v2104
    %3510 = vmatprep.subr.bf16.mxu0 %v2109
    %3511 = vmatpush1.bf16.xpose.msra.mxu0 %v2108
    %3512 = vmatprep.subr.bf16.mxu0 %v2113
    %3513 = vmatpush1.bf16.xpose.msra.mxu0 %v2112
    %3514 = vmatprep.subr.bf16.mxu0 %v2117
    %3515 = vmatpush1.bf16.xpose.msra.mxu0 %v2116
    %3516 = vmatprep.subr.bf16.mxu0 %v2121
    %3517 = vmatpush1.bf16.xpose.msra.mxu0 %v2120
    %3518 = vmatprep.subr.bf16.mxu0 %v2125
    %3519 = vmatpush1.bf16.xpose.msra.mxu0 %v2124
    %3520 = vmatprep.subr.bf16.mxu0 %v2129
    %3521 = vmatpush1.bf16.xpose.msra.mxu0 %v2128
    %3522 = vmatprep.subr.bf16.mxu0 %v2133
    %3523 = vmatpush1.bf16.xpose.msra.mxu0 %v2132
    %3524 = vmatprep.subr.bf16.mxu0 %v2137
    %3525 = vmatpush1.bf16.xpose.msra.mxu0 %v2136
    %3526 = vmatprep.subr.bf16.mxu0 %v2141
    %3527 = vmatpush1.bf16.xpose.msra.mxu0 %v2140
    %3528 = vmatprep.subr.bf16.mxu0 %v2145
    %3529 = vmatpush1.bf16.xpose.msra.mxu0 %v2144
    %3530 = vmatprep.subr.bf16.mxu0 %v2149
    %3531 = vmatpush1.bf16.xpose.msra.mxu0 %v2148
    %3532 = vmatprep.mubr.bf16.mxu0 %v681
    %3533 = vmatmul.mubr.bf16.gmra.mrb[0].mxu0 %v680
    %v3534 = vpop.f32.mrb[0].mxu0
    %v3535 = vadd.f32 0.0, %v3534
    %v3536 = vpop.f32.mrb[0].mxu0
    %v3537 = vadd.f32 0.0, %v3536
    %v3538 = vpop.f32.mrb[0].mxu0
    %v3539 = vadd.f32 0.0, %v3538
    %v3540 = vpop.f32.mrb[0].mxu0
    %v3541 = vadd.f32 0.0, %v3540
    %3542 = vmatprep.mubr.bf16.mxu0 %v685
    %3543 = vmatmul.mubr.bf16.gmra.mrb[0].mxu0 %v684
    %v3544 = vpop.f32.mrb[0].mxu0
    %v3545 = vadd.f32 0.0, %v3544
    %v3546 = vpop.f32.mrb[0].mxu0
    %v3547 = vadd.f32 0.0, %v3546
    %v3548 = vpop.f32.mrb[0].mxu0
    %v3549 = vadd.f32 0.0, %v3548
    %v3550 = vpop.f32.mrb[0].mxu0
    %v3551 = vadd.f32 0.0, %v3550
    %3552 = vmatprep.mubr.bf16.mxu0 %v689
    %3553 = vmatmul.mubr.bf16.gmra.mrb[0].mxu0 %v688
    %v3554 = vpop.f32.mrb[0].mxu0
    %v3555 = vadd.f32 0.0, %v3554
    %v3556 = vpop.f32.mrb[0].mxu0
    %v3557 = vadd.f32 0.0, %v3556
    %v3558 = vpop.f32.mrb[0].mxu0
    %v3559 = vadd.f32 0.0, %v3558
    %v3560 = vpop.f32.mrb[0].mxu0
    %v3561 = vadd.f32 0.0, %v3560
    %3562 = vmatprep.mubr.bf16.mxu0 %v693
    %3563 = vmatmul.mubr.bf16.gmra.mrb[0].mxu0 %v692
    %v3564 = vpop.f32.mrb[0].mxu0
    %v3565 = vadd.f32 0.0, %v3564
    %v3566 = vpop.f32.mrb[0].mxu0
    %v3567 = vadd.f32 0.0, %v3566
    %v3568 = vpop.f32.mrb[0].mxu0
    %v3569 = vadd.f32 0.0, %v3568
    %v3570 = vpop.f32.mrb[0].mxu0
    %v3571 = vadd.f32 0.0, %v3570
    %3572 = vmatprep.mubr.bf16.mxu0 %v697
    %3573 = vmatmul.mubr.bf16.gmra.mrb[0].mxu0 %v696
    %v3574 = vpop.f32.mrb[0].mxu0
    %v3575 = vadd.f32 0.0, %v3574
    %v3576 = vpop.f32.mrb[0].mxu0
    %v3577 = vadd.f32 0.0, %v3576
    %v3578 = vpop.f32.mrb[0].mxu0
    %v3579 = vadd.f32 0.0, %v3578
    %v3580 = vpop.f32.mrb[0].mxu0
    %v3581 = vadd.f32 0.0, %v3580
    %3582 = vmatprep.mubr.bf16.mxu0 %v701
    %3583 = vmatmul.mubr.bf16.gmra.mrb[0].mxu0 %v700
    %v3584 = vpop.f32.mrb[0].mxu0
    %v3585 = vadd.f32 0.0, %v3584
    %v3586 = vpop.f32.mrb[0].mxu0
    %v3587 = vadd.f32 0.0, %v3586
    %v3588 = vpop.f32.mrb[0].mxu0
    %v3589 = vadd.f32 0.0, %v3588
    %v3590 = vpop.f32.mrb[0].mxu0
    %v3591 = vadd.f32 0.0, %v3590
    %3592 = vmatprep.mubr.bf16.mxu0 %v705
    %3593 = vmatmul.mubr.bf16.gmra.mrb[0].mxu0 %v704
    %v3594 = vpop.f32.mrb[0].mxu0
    %v3595 = vadd.f32 0.0, %v3594
    %v3596 = vpop.f32.mrb[0].mxu0
    %v3597 = vadd.f32 0.0, %v3596
    %v3598 = vpop.f32.mrb[0].mxu0
    %v3599 = vadd.f32 0.0, %v3598
    %v3600 = vpop.f32.mrb[0].mxu0
    %v3601 = vadd.f32 0.0, %v3600
    %3602 = vmatprep.mubr.bf16.mxu0 %v709
    %3603 = vmatmul.mubr.bf16.gmra.mrb[0].mxu0 %v708
    %v3604 = vpop.f32.mrb[0].mxu0
    %v3605 = vadd.f32 0.0, %v3604
    %v3606 = vpop.f32.mrb[0].mxu0
    %v3607 = vadd.f32 0.0, %v3606
    %v3608 = vpop.f32.mrb[0].mxu0
    %v3609 = vadd.f32 0.0, %v3608
    %v3610 = vpop.f32.mrb[0].mxu0
    %v3611 = vadd.f32 0.0, %v3610
    %3612 = vmatprep.mubr.bf16.mxu0 %v713
    %3613 = vmatmul.mubr.bf16.gmra.mrb[0].mxu0 %v712
    %v3614 = vpop.f32.mrb[0].mxu0
    %v3615 = vadd.f32 0.0, %v3614
    %v3616 = vpop.f32.mrb[0].mxu0
    %v3617 = vadd.f32 0.0, %v3616
    %v3618 = vpop.f32.mrb[0].mxu0
    %v3619 = vadd.f32 0.0, %v3618
    %v3620 = vpop.f32.mrb[0].mxu0
    %v3621 = vadd.f32 0.0, %v3620
    %3622 = vmatprep.mubr.bf16.mxu0 %v717
    %3623 = vmatmul.mubr.bf16.gmra.mrb[0].mxu0 %v716
    %v3624 = vpop.f32.mrb[0].mxu0
    %v3625 = vadd.f32 0.0, %v3624
    %v3626 = vpop.f32.mrb[0].mxu0
    %v3627 = vadd.f32 0.0, %v3626
    %v3628 = vpop.f32.mrb[0].mxu0
    %v3629 = vadd.f32 0.0, %v3628
    %v3630 = vpop.f32.mrb[0].mxu0
    %v3631 = vadd.f32 0.0, %v3630
    %3632 = vmatprep.mubr.bf16.mxu0 %v721
    %3633 = vmatmul.mubr.bf16.gmra.mrb[0].mxu0 %v720
    %v3634 = vpop.f32.mrb[0].mxu0
    %v3635 = vadd.f32 0.0, %v3634
    %v3636 = vpop.f32.mrb[0].mxu0
    %v3637 = vadd.f32 0.0, %v3636
    %v3638 = vpop.f32.mrb[0].mxu0
    %v3639 = vadd.f32 0.0, %v3638
    %v3640 = vpop.f32.mrb[0].mxu0
    %v3641 = vadd.f32 0.0, %v3640
    %3642 = vmatprep.mubr.bf16.mxu0 %v725
    %3643 = vmatmul.mubr.bf16.gmra.mrb[0].mxu0 %v724
    %v3644 = vpop.f32.mrb[0].mxu0
    %v3645 = vadd.f32 0.0, %v3644
    %v3646 = vpop.f32.mrb[0].mxu0
    %v3647 = vadd.f32 0.0, %v3646
    %v3648 = vpop.f32.mrb[0].mxu0
    %v3649 = vadd.f32 0.0, %v3648
    %v3650 = vpop.f32.mrb[0].mxu0
    %v3651 = vadd.f32 0.0, %v3650
    %3652 = vmatprep.mubr.bf16.mxu0 %v729
    %3653 = vmatmul.mubr.bf16.gmra.mrb[0].mxu0 %v728
    %v3654 = vpop.f32.mrb[0].mxu0
    %v3655 = vadd.f32 0.0, %v3654
    %v3656 = vpop.f32.mrb[0].mxu0
    %v3657 = vadd.f32 0.0, %v3656
    %v3658 = vpop.f32.mrb[0].mxu0
    %v3659 = vadd.f32 0.0, %v3658
    %v3660 = vpop.f32.mrb[0].mxu0
    %v3661 = vadd.f32 0.0, %v3660
    %3662 = vmatprep.mubr.bf16.mxu0 %v733
    %3663 = vmatmul.mubr.bf16.gmra.mrb[0].mxu0 %v732
    %v3664 = vpop.f32.mrb[0].mxu0
    %v3665 = vadd.f32 0.0, %v3664
    %v3666 = vpop.f32.mrb[0].mxu0
    %v3667 = vadd.f32 0.0, %v3666
    %v3668 = vpop.f32.mrb[0].mxu0
    %v3669 = vadd.f32 0.0, %v3668
    %v3670 = vpop.f32.mrb[0].mxu0
    %v3671 = vadd.f32 0.0, %v3670
    %3672 = vmatprep.mubr.bf16.mxu0 %v737
    %3673 = vmatmul.mubr.bf16.gmra.mrb[0].mxu0 %v736
    %v3674 = vpop.f32.mrb[0].mxu0
    %v3675 = vadd.f32 0.0, %v3674
    %v3676 = vpop.f32.mrb[0].mxu0
    %v3677 = vadd.f32 0.0, %v3676
    %v3678 = vpop.f32.mrb[0].mxu0
    %v3679 = vadd.f32 0.0, %v3678
    %v3680 = vpop.f32.mrb[0].mxu0
    %v3681 = vadd.f32 0.0, %v3680
    %3682 = vmatprep.mubr.bf16.mxu0 %v741
    %3683 = vmatmul.mubr.bf16.gmra.mrb[0].mxu0 %v740
    %v3684 = vpop.f32.mrb[0].mxu0
    %v3685 = vadd.f32 0.0, %v3684
    %v3686 = vpop.f32.mrb[0].mxu0
    %v3687 = vadd.f32 0.0, %v3686
    %v3688 = vpop.f32.mrb[0].mxu0
    %v3689 = vadd.f32 0.0, %v3688
    %v3690 = vpop.f32.mrb[0].mxu0
    %v3691 = vadd.f32 0.0, %v3690
    %3692 = vdwg.mxu0
    %3693 = vmatprep.subr.bf16.mxu0 %v2091
    %3694 = vmatpush1.bf16.xpose.msra.mxu0 %v2090
    %3695 = vmatprep.subr.bf16.mxu0 %v2095
    %3696 = vmatpush1.bf16.xpose.msra.mxu0 %v2094
    %3697 = vmatprep.subr.bf16.mxu0 %v2099
    %3698 = vmatpush1.bf16.xpose.msra.mxu0 %v2098
    %3699 = vmatprep.subr.bf16.mxu0 %v2103
    %3700 = vmatpush1.bf16.xpose.msra.mxu0 %v2102
    %3701 = vmatprep.subr.bf16.mxu0 %v2107
    %3702 = vmatpush1.bf16.xpose.msra.mxu0 %v2106
    %3703 = vmatprep.subr.bf16.mxu0 %v2111
    %3704 = vmatpush1.bf16.xpose.msra.mxu0 %v2110
    %3705 = vmatprep.subr.bf16.mxu0 %v2115
    %3706 = vmatpush1.bf16.xpose.msra.mxu0 %v2114
    %3707 = vmatprep.subr.bf16.mxu0 %v2119
    %3708 = vmatpush1.bf16.xpose.msra.mxu0 %v2118
    %3709 = vmatprep.subr.bf16.mxu0 %v2123
    %3710 = vmatpush1.bf16.xpose.msra.mxu0 %v2122
    %3711 = vmatprep.subr.bf16.mxu0 %v2127
    %3712 = vmatpush1.bf16.xpose.msra.mxu0 %v2126
    %3713 = vmatprep.subr.bf16.mxu0 %v2131
    %3714 = vmatpush1.bf16.xpose.msra.mxu0 %v2130
    %3715 = vmatprep.subr.bf16.mxu0 %v2135
    %3716 = vmatpush1.bf16.xpose.msra.mxu0 %v2134
    %3717 = vmatprep.subr.bf16.mxu0 %v2139
    %3718 = vmatpush1.bf16.xpose.msra.mxu0 %v2138
    %3719 = vmatprep.subr.bf16.mxu0 %v2143
    %3720 = vmatpush1.bf16.xpose.msra.mxu0 %v2142
    %3721 = vmatprep.subr.bf16.mxu0 %v2147
    %3722 = vmatpush1.bf16.xpose.msra.mxu0 %v2146
    %3723 = vmatprep.subr.bf16.mxu0 %v2151
    %3724 = vmatpush1.bf16.xpose.msra.mxu0 %v2150
    %3725 = vmatprep.mubr.bf16.mxu0 %v683
    %3726 = vmatmul.mubr.bf16.gmra.mrb[0].mxu0 %v682
    %v3727 = vpop.f32.mrb[0].mxu0
    %v3728 = vadd.f32 %v3535, %v3727
    %v3729 = vpop.f32.mrb[0].mxu0
    %v3730 = vadd.f32 %v3537, %v3729
    %v3731 = vpop.f32.mrb[0].mxu0
    %v3732 = vadd.f32 %v3539, %v3731
    %v3733 = vpop.f32.mrb[0].mxu0
    %v3734 = vadd.f32 %v3541, %v3733
    %3735 = vmatprep.mubr.bf16.mxu0 %v687
    %3736 = vmatmul.mubr.bf16.gmra.mrb[0].mxu0 %v686
    %v3737 = vpop.f32.mrb[0].mxu0
    %v3738 = vadd.f32 %v3545, %v3737
    %v3739 = vpop.f32.mrb[0].mxu0
    %v3740 = vadd.f32 %v3547, %v3739
    %v3741 = vpop.f32.mrb[0].mxu0
    %v3742 = vadd.f32 %v3549, %v3741
    %v3743 = vpop.f32.mrb[0].mxu0
    %v3744 = vadd.f32 %v3551, %v3743
    %3745 = vmatprep.mubr.bf16.mxu0 %v691
    %3746 = vmatmul.mubr.bf16.gmra.mrb[0].mxu0 %v690
    %v3747 = vpop.f32.mrb[0].mxu0
    %v3748 = vadd.f32 %v3555, %v3747
    %v3749 = vpop.f32.mrb[0].mxu0
    %v3750 = vadd.f32 %v3557, %v3749
    %v3751 = vpop.f32.mrb[0].mxu0
    %v3752 = vadd.f32 %v3559, %v3751
    %v3753 = vpop.f32.mrb[0].mxu0
    %v3754 = vadd.f32 %v3561, %v3753
    %3755 = vmatprep.mubr.bf16.mxu0 %v695
    %3756 = vmatmul.mubr.bf16.gmra.mrb[0].mxu0 %v694
    %v3757 = vpop.f32.mrb[0].mxu0
    %v3758 = vadd.f32 %v3565, %v3757
    %v3759 = vpop.f32.mrb[0].mxu0
    %v3760 = vadd.f32 %v3567, %v3759
    %v3761 = vpop.f32.mrb[0].mxu0
    %v3762 = vadd.f32 %v3569, %v3761
    %v3763 = vpop.f32.mrb[0].mxu0
    %v3764 = vadd.f32 %v3571, %v3763
    %3765 = vmatprep.mubr.bf16.mxu0 %v699
    %3766 = vmatmul.mubr.bf16.gmra.mrb[0].mxu0 %v698
    %v3767 = vpop.f32.mrb[0].mxu0
    %v3768 = vadd.f32 %v3575, %v3767
    %v3769 = vpop.f32.mrb[0].mxu0
    %v3770 = vadd.f32 %v3577, %v3769
    %v3771 = vpop.f32.mrb[0].mxu0
    %v3772 = vadd.f32 %v3579, %v3771
    %v3773 = vpop.f32.mrb[0].mxu0
    %v3774 = vadd.f32 %v3581, %v3773
    %3775 = vmatprep.mubr.bf16.mxu0 %v703
    %3776 = vmatmul.mubr.bf16.gmra.mrb[0].mxu0 %v702
    %v3777 = vpop.f32.mrb[0].mxu0
    %v3778 = vadd.f32 %v3585, %v3777
    %v3779 = vpop.f32.mrb[0].mxu0
    %v3780 = vadd.f32 %v3587, %v3779
    %v3781 = vpop.f32.mrb[0].mxu0
    %v3782 = vadd.f32 %v3589, %v3781
    %v3783 = vpop.f32.mrb[0].mxu0
    %v3784 = vadd.f32 %v3591, %v3783
    %3785 = vmatprep.mubr.bf16.mxu0 %v707
    %3786 = vmatmul.mubr.bf16.gmra.mrb[0].mxu0 %v706
    %v3787 = vpop.f32.mrb[0].mxu0
    %v3788 = vadd.f32 %v3595, %v3787
    %v3789 = vpop.f32.mrb[0].mxu0
    %v3790 = vadd.f32 %v3597, %v3789
    %v3791 = vpop.f32.mrb[0].mxu0
    %v3792 = vadd.f32 %v3599, %v3791
    %v3793 = vpop.f32.mrb[0].mxu0
    %v3794 = vadd.f32 %v3601, %v3793
    %3795 = vmatprep.mubr.bf16.mxu0 %v711
    %3796 = vmatmul.mubr.bf16.gmra.mrb[0].mxu0 %v710
    %v3797 = vpop.f32.mrb[0].mxu0
    %v3798 = vadd.f32 %v3605, %v3797
    %v3799 = vpop.f32.mrb[0].mxu0
    %v3800 = vadd.f32 %v3607, %v3799
    %v3801 = vpop.f32.mrb[0].mxu0
    %v3802 = vadd.f32 %v3609, %v3801
    %v3803 = vpop.f32.mrb[0].mxu0
    %v3804 = vadd.f32 %v3611, %v3803
    %3805 = vmatprep.mubr.bf16.mxu0 %v715
    %3806 = vmatmul.mubr.bf16.gmra.mrb[0].mxu0 %v714
    %v3807 = vpop.f32.mrb[0].mxu0
    %v3808 = vadd.f32 %v3615, %v3807
    %v3809 = vpop.f32.mrb[0].mxu0
    %v3810 = vadd.f32 %v3617, %v3809
    %v3811 = vpop.f32.mrb[0].mxu0
    %v3812 = vadd.f32 %v3619, %v3811
    %v3813 = vpop.f32.mrb[0].mxu0
    %v3814 = vadd.f32 %v3621, %v3813
    %3815 = vmatprep.mubr.bf16.mxu0 %v719
    %3816 = vmatmul.mubr.bf16.gmra.mrb[0].mxu0 %v718
    %v3817 = vpop.f32.mrb[0].mxu0
    %v3818 = vadd.f32 %v3625, %v3817
    %v3819 = vpop.f32.mrb[0].mxu0
    %v3820 = vadd.f32 %v3627, %v3819
    %v3821 = vpop.f32.mrb[0].mxu0
    %v3822 = vadd.f32 %v3629, %v3821
    %v3823 = vpop.f32.mrb[0].mxu0
    %v3824 = vadd.f32 %v3631, %v3823
    %3825 = vmatprep.mubr.bf16.mxu0 %v723
    %3826 = vmatmul.mubr.bf16.gmra.mrb[0].mxu0 %v722
    %v3827 = vpop.f32.mrb[0].mxu0
    %v3828 = vadd.f32 %v3635, %v3827
    %v3829 = vpop.f32.mrb[0].mxu0
    %v3830 = vadd.f32 %v3637, %v3829
    %v3831 = vpop.f32.mrb[0].mxu0
    %v3832 = vadd.f32 %v3639, %v3831
    %v3833 = vpop.f32.mrb[0].mxu0
    %v3834 = vadd.f32 %v3641, %v3833
    %3835 = vmatprep.mubr.bf16.mxu0 %v727
    %3836 = vmatmul.mubr.bf16.gmra.mrb[0].mxu0 %v726
    %v3837 = vpop.f32.mrb[0].mxu0
    %v3838 = vadd.f32 %v3645, %v3837
    %v3839 = vpop.f32.mrb[0].mxu0
    %v3840 = vadd.f32 %v3647, %v3839
    %v3841 = vpop.f32.mrb[0].mxu0
    %v3842 = vadd.f32 %v3649, %v3841
    %v3843 = vpop.f32.mrb[0].mxu0
    %v3844 = vadd.f32 %v3651, %v3843
    %3845 = vmatprep.mubr.bf16.mxu0 %v731
    %3846 = vmatmul.mubr.bf16.gmra.mrb[0].mxu0 %v730
    %v3847 = vpop.f32.mrb[0].mxu0
    %v3848 = vadd.f32 %v3655, %v3847
    %v3849 = vpop.f32.mrb[0].mxu0
    %v3850 = vadd.f32 %v3657, %v3849
    %v3851 = vpop.f32.mrb[0].mxu0
    %v3852 = vadd.f32 %v3659, %v3851
    %v3853 = vpop.f32.mrb[0].mxu0
    %v3854 = vadd.f32 %v3661, %v3853
    %3855 = vmatprep.mubr.bf16.mxu0 %v735
    %3856 = vmatmul.mubr.bf16.gmra.mrb[0].mxu0 %v734
    %v3857 = vpop.f32.mrb[0].mxu0
    %v3858 = vadd.f32 %v3665, %v3857
    %v3859 = vpop.f32.mrb[0].mxu0
    %v3860 = vadd.f32 %v3667, %v3859
    %v3861 = vpop.f32.mrb[0].mxu0
    %v3862 = vadd.f32 %v3669, %v3861
    %v3863 = vpop.f32.mrb[0].mxu0
    %v3864 = vadd.f32 %v3671, %v3863
    %3865 = vmatprep.mubr.bf16.mxu0 %v739
    %3866 = vmatmul.mubr.bf16.gmra.mrb[0].mxu0 %v738
    %v3867 = vpop.f32.mrb[0].mxu0
    %v3868 = vadd.f32 %v3675, %v3867
    %v3869 = vpop.f32.mrb[0].mxu0
    %v3870 = vadd.f32 %v3677, %v3869
    %v3871 = vpop.f32.mrb[0].mxu0
    %v3872 = vadd.f32 %v3679, %v3871
    %v3873 = vpop.f32.mrb[0].mxu0
    %v3874 = vadd.f32 %v3681, %v3873
    %3875 = vmatprep.mubr.bf16.mxu0 %v743
    %3876 = vmatmul.mubr.bf16.gmra.mrb[0].mxu0 %v742
    %v3877 = vpop.f32.mrb[0].mxu0
    %v3878 = vadd.f32 %v3685, %v3877
    %v3879 = vpop.f32.mrb[0].mxu0
    %v3880 = vadd.f32 %v3687, %v3879
    %v3881 = vpop.f32.mrb[0].mxu0
    %v3882 = vadd.f32 %v3689, %v3881
    %v3883 = vpop.f32.mrb[0].mxu0
    %v3884 = vadd.f32 %v3691, %v3883
    %3885 = vdwg.mxu0
    %3886 = vmatprep.subr.bf16.mxu0 %v2153
    %3887 = vmatpush1.bf16.xpose.msra.mxu0 %v2152
    %3888 = vmatprep.subr.bf16.mxu0 %v2157
    %3889 = vmatpush1.bf16.xpose.msra.mxu0 %v2156
    %3890 = vmatprep.subr.bf16.mxu0 %v2161
    %3891 = vmatpush1.bf16.xpose.msra.mxu0 %v2160
    %3892 = vmatprep.subr.bf16.mxu0 %v2165
    %3893 = vmatpush1.bf16.xpose.msra.mxu0 %v2164
    %3894 = vmatprep.subr.bf16.mxu0 %v2169
    %3895 = vmatpush1.bf16.xpose.msra.mxu0 %v2168
    %3896 = vmatprep.subr.bf16.mxu0 %v2173
    %3897 = vmatpush1.bf16.xpose.msra.mxu0 %v2172
    %3898 = vmatprep.subr.bf16.mxu0 %v2177
    %3899 = vmatpush1.bf16.xpose.msra.mxu0 %v2176
    %3900 = vmatprep.subr.bf16.mxu0 %v2181
    %3901 = vmatpush1.bf16.xpose.msra.mxu0 %v2180
    %3902 = vmatprep.subr.bf16.mxu0 %v2185
    %3903 = vmatpush1.bf16.xpose.msra.mxu0 %v2184
    %3904 = vmatprep.subr.bf16.mxu0 %v2189
    %3905 = vmatpush1.bf16.xpose.msra.mxu0 %v2188
    %3906 = vmatprep.subr.bf16.mxu0 %v2193
    %3907 = vmatpush1.bf16.xpose.msra.mxu0 %v2192
    %3908 = vmatprep.subr.bf16.mxu0 %v2197
    %3909 = vmatpush1.bf16.xpose.msra.mxu0 %v2196
    %3910 = vmatprep.subr.bf16.mxu0 %v2201
    %3911 = vmatpush1.bf16.xpose.msra.mxu0 %v2200
    %3912 = vmatprep.subr.bf16.mxu0 %v2205
    %3913 = vmatpush1.bf16.xpose.msra.mxu0 %v2204
    %3914 = vmatprep.subr.bf16.mxu0 %v2209
    %3915 = vmatpush1.bf16.xpose.msra.mxu0 %v2208
    %3916 = vmatprep.subr.bf16.mxu0 %v2213
    %3917 = vmatpush1.bf16.xpose.msra.mxu0 %v2212
    %3918 = vmatprep.mubr.bf16.mxu0 %v681
    %3919 = vmatmul.mubr.bf16.gmra.mrb[0].mxu0 %v680
    %v3920 = vpop.f32.mrb[0].mxu0
    %v3921 = vadd.f32 0.0, %v3920
    %v3922 = vpop.f32.mrb[0].mxu0
    %v3923 = vadd.f32 0.0, %v3922
    %v3924 = vpop.f32.mrb[0].mxu0
    %v3925 = vadd.f32 0.0, %v3924
    %v3926 = vpop.f32.mrb[0].mxu0
    %v3927 = vadd.f32 0.0, %v3926
    %3928 = vmatprep.mubr.bf16.mxu0 %v685
    %3929 = vmatmul.mubr.bf16.gmra.mrb[0].mxu0 %v684
    %v3930 = vpop.f32.mrb[0].mxu0
    %v3931 = vadd.f32 0.0, %v3930
    %v3932 = vpop.f32.mrb[0].mxu0
    %v3933 = vadd.f32 0.0, %v3932
    %v3934 = vpop.f32.mrb[0].mxu0
    %v3935 = vadd.f32 0.0, %v3934
    %v3936 = vpop.f32.mrb[0].mxu0
    %v3937 = vadd.f32 0.0, %v3936
    %3938 = vmatprep.mubr.bf16.mxu0 %v689
    %3939 = vmatmul.mubr.bf16.gmra.mrb[0].mxu0 %v688
    %v3940 = vpop.f32.mrb[0].mxu0
    %v3941 = vadd.f32 0.0, %v3940
    %v3942 = vpop.f32.mrb[0].mxu0
    %v3943 = vadd.f32 0.0, %v3942
    %v3944 = vpop.f32.mrb[0].mxu0
    %v3945 = vadd.f32 0.0, %v3944
    %v3946 = vpop.f32.mrb[0].mxu0
    %v3947 = vadd.f32 0.0, %v3946
    %3948 = vmatprep.mubr.bf16.mxu0 %v693
    %3949 = vmatmul.mubr.bf16.gmra.mrb[0].mxu0 %v692
    %v3950 = vpop.f32.mrb[0].mxu0
    %v3951 = vadd.f32 0.0, %v3950
    %v3952 = vpop.f32.mrb[0].mxu0
    %v3953 = vadd.f32 0.0, %v3952
    %v3954 = vpop.f32.mrb[0].mxu0
    %v3955 = vadd.f32 0.0, %v3954
    %v3956 = vpop.f32.mrb[0].mxu0
    %v3957 = vadd.f32 0.0, %v3956
    %3958 = vmatprep.mubr.bf16.mxu0 %v697
    %3959 = vmatmul.mubr.bf16.gmra.mrb[0].mxu0 %v696
    %v3960 = vpop.f32.mrb[0].mxu0
    %v3961 = vadd.f32 0.0, %v3960
    %v3962 = vpop.f32.mrb[0].mxu0
    %v3963 = vadd.f32 0.0, %v3962
    %v3964 = vpop.f32.mrb[0].mxu0
    %v3965 = vadd.f32 0.0, %v3964
    %v3966 = vpop.f32.mrb[0].mxu0
    %v3967 = vadd.f32 0.0, %v3966
    %3968 = vmatprep.mubr.bf16.mxu0 %v701
    %3969 = vmatmul.mubr.bf16.gmra.mrb[0].mxu0 %v700
    %v3970 = vpop.f32.mrb[0].mxu0
    %v3971 = vadd.f32 0.0, %v3970
    %v3972 = vpop.f32.mrb[0].mxu0
    %v3973 = vadd.f32 0.0, %v3972
    %v3974 = vpop.f32.mrb[0].mxu0
    %v3975 = vadd.f32 0.0, %v3974
    %v3976 = vpop.f32.mrb[0].mxu0
    %v3977 = vadd.f32 0.0, %v3976
    %3978 = vmatprep.mubr.bf16.mxu0 %v705
    %3979 = vmatmul.mubr.bf16.gmra.mrb[0].mxu0 %v704
    %v3980 = vpop.f32.mrb[0].mxu0
    %v3981 = vadd.f32 0.0, %v3980
    %v3982 = vpop.f32.mrb[0].mxu0
    %v3983 = vadd.f32 0.0, %v3982
    %v3984 = vpop.f32.mrb[0].mxu0
    %v3985 = vadd.f32 0.0, %v3984
    %v3986 = vpop.f32.mrb[0].mxu0
    %v3987 = vadd.f32 0.0, %v3986
    %3988 = vmatprep.mubr.bf16.mxu0 %v709
    %3989 = vmatmul.mubr.bf16.gmra.mrb[0].mxu0 %v708
    %v3990 = vpop.f32.mrb[0].mxu0
    %v3991 = vadd.f32 0.0, %v3990
    %v3992 = vpop.f32.mrb[0].mxu0
    %v3993 = vadd.f32 0.0, %v3992
    %v3994 = vpop.f32.mrb[0].mxu0
    %v3995 = vadd.f32 0.0, %v3994
    %v3996 = vpop.f32.mrb[0].mxu0
    %v3997 = vadd.f32 0.0, %v3996
    %3998 = vmatprep.mubr.bf16.mxu0 %v713
    %3999 = vmatmul.mubr.bf16.gmra.mrb[0].mxu0 %v712
    %v4000 = vpop.f32.mrb[0].mxu0
    %v4001 = vadd.f32 0.0, %v4000
    %v4002 = vpop.f32.mrb[0].mxu0
    %v4003 = vadd.f32 0.0, %v4002
    %v4004 = vpop.f32.mrb[0].mxu0
    %v4005 = vadd.f32 0.0, %v4004
    %v4006 = vpop.f32.mrb[0].mxu0
    %v4007 = vadd.f32 0.0, %v4006
    %4008 = vmatprep.mubr.bf16.mxu0 %v717
    %4009 = vmatmul.mubr.bf16.gmra.mrb[0].mxu0 %v716
    %v4010 = vpop.f32.mrb[0].mxu0
    %v4011 = vadd.f32 0.0, %v4010
    %v4012 = vpop.f32.mrb[0].mxu0
    %v4013 = vadd.f32 0.0, %v4012
    %v4014 = vpop.f32.mrb[0].mxu0
    %v4015 = vadd.f32 0.0, %v4014
    %v4016 = vpop.f32.mrb[0].mxu0
    %v4017 = vadd.f32 0.0, %v4016
    %4018 = vmatprep.mubr.bf16.mxu0 %v721
    %4019 = vmatmul.mubr.bf16.gmra.mrb[0].mxu0 %v720
    %v4020 = vpop.f32.mrb[0].mxu0
    %v4021 = vadd.f32 0.0, %v4020
    %v4022 = vpop.f32.mrb[0].mxu0
    %v4023 = vadd.f32 0.0, %v4022
    %v4024 = vpop.f32.mrb[0].mxu0
    %v4025 = vadd.f32 0.0, %v4024
    %v4026 = vpop.f32.mrb[0].mxu0
    %v4027 = vadd.f32 0.0, %v4026
    %4028 = vmatprep.mubr.bf16.mxu0 %v725
    %4029 = vmatmul.mubr.bf16.gmra.mrb[0].mxu0 %v724
    %v4030 = vpop.f32.mrb[0].mxu0
    %v4031 = vadd.f32 0.0, %v4030
    %v4032 = vpop.f32.mrb[0].mxu0
    %v4033 = vadd.f32 0.0, %v4032
    %v4034 = vpop.f32.mrb[0].mxu0
    %v4035 = vadd.f32 0.0, %v4034
    %v4036 = vpop.f32.mrb[0].mxu0
    %v4037 = vadd.f32 0.0, %v4036
    %4038 = vmatprep.mubr.bf16.mxu0 %v729
    %4039 = vmatmul.mubr.bf16.gmra.mrb[0].mxu0 %v728
    %v4040 = vpop.f32.mrb[0].mxu0
    %v4041 = vadd.f32 0.0, %v4040
    %v4042 = vpop.f32.mrb[0].mxu0
    %v4043 = vadd.f32 0.0, %v4042
    %v4044 = vpop.f32.mrb[0].mxu0
    %v4045 = vadd.f32 0.0, %v4044
    %v4046 = vpop.f32.mrb[0].mxu0
    %v4047 = vadd.f32 0.0, %v4046
    %4048 = vmatprep.mubr.bf16.mxu0 %v733
    %4049 = vmatmul.mubr.bf16.gmra.mrb[0].mxu0 %v732
    %v4050 = vpop.f32.mrb[0].mxu0
    %v4051 = vadd.f32 0.0, %v4050
    %v4052 = vpop.f32.mrb[0].mxu0
    %v4053 = vadd.f32 0.0, %v4052
    %v4054 = vpop.f32.mrb[0].mxu0
    %v4055 = vadd.f32 0.0, %v4054
    %v4056 = vpop.f32.mrb[0].mxu0
    %v4057 = vadd.f32 0.0, %v4056
    %4058 = vmatprep.mubr.bf16.mxu0 %v737
    %4059 = vmatmul.mubr.bf16.gmra.mrb[0].mxu0 %v736
    %v4060 = vpop.f32.mrb[0].mxu0
    %v4061 = vadd.f32 0.0, %v4060
    %v4062 = vpop.f32.mrb[0].mxu0
    %v4063 = vadd.f32 0.0, %v4062
    %v4064 = vpop.f32.mrb[0].mxu0
    %v4065 = vadd.f32 0.0, %v4064
    %v4066 = vpop.f32.mrb[0].mxu0
    %v4067 = vadd.f32 0.0, %v4066
    %4068 = vmatprep.mubr.bf16.mxu0 %v741
    %4069 = vmatmul.mubr.bf16.gmra.mrb[0].mxu0 %v740
    %v4070 = vpop.f32.mrb[0].mxu0
    %v4071 = vadd.f32 0.0, %v4070
    %v4072 = vpop.f32.mrb[0].mxu0
    %v4073 = vadd.f32 0.0, %v4072
    %v4074 = vpop.f32.mrb[0].mxu0
    %v4075 = vadd.f32 0.0, %v4074
    %v4076 = vpop.f32.mrb[0].mxu0
    %v4077 = vadd.f32 0.0, %v4076
    %4078 = vdwg.mxu0
    %4079 = vmatprep.subr.bf16.mxu0 %v2155
    %4080 = vmatpush1.bf16.xpose.msra.mxu0 %v2154
    %4081 = vmatprep.subr.bf16.mxu0 %v2159
    %4082 = vmatpush1.bf16.xpose.msra.mxu0 %v2158
    %4083 = vmatprep.subr.bf16.mxu0 %v2163
    %4084 = vmatpush1.bf16.xpose.msra.mxu0 %v2162
    %4085 = vmatprep.subr.bf16.mxu0 %v2167
    %4086 = vmatpush1.bf16.xpose.msra.mxu0 %v2166
    %4087 = vmatprep.subr.bf16.mxu0 %v2171
    %4088 = vmatpush1.bf16.xpose.msra.mxu0 %v2170
    %4089 = vmatprep.subr.bf16.mxu0 %v2175
    %4090 = vmatpush1.bf16.xpose.msra.mxu0 %v2174
    %4091 = vmatprep.subr.bf16.mxu0 %v2179
    %4092 = vmatpush1.bf16.xpose.msra.mxu0 %v2178
    %4093 = vmatprep.subr.bf16.mxu0 %v2183
    %4094 = vmatpush1.bf16.xpose.msra.mxu0 %v2182
    %4095 = vmatprep.subr.bf16.mxu0 %v2187
    %4096 = vmatpush1.bf16.xpose.msra.mxu0 %v2186
    %4097 = vmatprep.subr.bf16.mxu0 %v2191
    %4098 = vmatpush1.bf16.xpose.msra.mxu0 %v2190
    %4099 = vmatprep.subr.bf16.mxu0 %v2195
    %4100 = vmatpush1.bf16.xpose.msra.mxu0 %v2194
    %4101 = vmatprep.subr.bf16.mxu0 %v2199
    %4102 = vmatpush1.bf16.xpose.msra.mxu0 %v2198
    %4103 = vmatprep.subr.bf16.mxu0 %v2203
    %4104 = vmatpush1.bf16.xpose.msra.mxu0 %v2202
    %4105 = vmatprep.subr.bf16.mxu0 %v2207
    %4106 = vmatpush1.bf16.xpose.msra.mxu0 %v2206
    %4107 = vmatprep.subr.bf16.mxu0 %v2211
    %4108 = vmatpush1.bf16.xpose.msra.mxu0 %v2210
    %4109 = vmatprep.subr.bf16.mxu0 %v2215
    %4110 = vmatpush1.bf16.xpose.msra.mxu0 %v2214
    %4111 = vmatprep.mubr.bf16.mxu0 %v683
    %4112 = vmatmul.mubr.bf16.gmra.mrb[0].mxu0 %v682
    %v4113 = vpop.f32.mrb[0].mxu0
    %v4114 = vadd.f32 %v3921, %v4113
    %v4115 = vpop.f32.mrb[0].mxu0
    %v4116 = vadd.f32 %v3923, %v4115
    %v4117 = vpop.f32.mrb[0].mxu0
    %v4118 = vadd.f32 %v3925, %v4117
    %v4119 = vpop.f32.mrb[0].mxu0
    %v4120 = vadd.f32 %v3927, %v4119
    %4121 = vmatprep.mubr.bf16.mxu0 %v687
    %4122 = vmatmul.mubr.bf16.gmra.mrb[0].mxu0 %v686
    %v4123 = vpop.f32.mrb[0].mxu0
    %v4124 = vadd.f32 %v3931, %v4123
    %v4125 = vpop.f32.mrb[0].mxu0
    %v4126 = vadd.f32 %v3933, %v4125
    %v4127 = vpop.f32.mrb[0].mxu0
    %v4128 = vadd.f32 %v3935, %v4127
    %v4129 = vpop.f32.mrb[0].mxu0
    %v4130 = vadd.f32 %v3937, %v4129
    %4131 = vmatprep.mubr.bf16.mxu0 %v691
    %4132 = vmatmul.mubr.bf16.gmra.mrb[0].mxu0 %v690
    %v4133 = vpop.f32.mrb[0].mxu0
    %v4134 = vadd.f32 %v3941, %v4133
    %v4135 = vpop.f32.mrb[0].mxu0
    %v4136 = vadd.f32 %v3943, %v4135
    %v4137 = vpop.f32.mrb[0].mxu0
    %v4138 = vadd.f32 %v3945, %v4137
    %v4139 = vpop.f32.mrb[0].mxu0
    %v4140 = vadd.f32 %v3947, %v4139
    %4141 = vmatprep.mubr.bf16.mxu0 %v695
    %4142 = vmatmul.mubr.bf16.gmra.mrb[0].mxu0 %v694
    %v4143 = vpop.f32.mrb[0].mxu0
    %v4144 = vadd.f32 %v3951, %v4143
    %v4145 = vpop.f32.mrb[0].mxu0
    %v4146 = vadd.f32 %v3953, %v4145
    %v4147 = vpop.f32.mrb[0].mxu0
    %v4148 = vadd.f32 %v3955, %v4147
    %v4149 = vpop.f32.mrb[0].mxu0
    %v4150 = vadd.f32 %v3957, %v4149
    %4151 = vmatprep.mubr.bf16.mxu0 %v699
    %4152 = vmatmul.mubr.bf16.gmra.mrb[0].mxu0 %v698
    %v4153 = vpop.f32.mrb[0].mxu0
    %v4154 = vadd.f32 %v3961, %v4153
    %v4155 = vpop.f32.mrb[0].mxu0
    %v4156 = vadd.f32 %v3963, %v4155
    %v4157 = vpop.f32.mrb[0].mxu0
    %v4158 = vadd.f32 %v3965, %v4157
    %v4159 = vpop.f32.mrb[0].mxu0
    %v4160 = vadd.f32 %v3967, %v4159
    %4161 = vmatprep.mubr.bf16.mxu0 %v703
    %4162 = vmatmul.mubr.bf16.gmra.mrb[0].mxu0 %v702
    %v4163 = vpop.f32.mrb[0].mxu0
    %v4164 = vadd.f32 %v3971, %v4163
    %v4165 = vpop.f32.mrb[0].mxu0
    %v4166 = vadd.f32 %v3973, %v4165
    %v4167 = vpop.f32.mrb[0].mxu0
    %v4168 = vadd.f32 %v3975, %v4167
    %v4169 = vpop.f32.mrb[0].mxu0
    %v4170 = vadd.f32 %v3977, %v4169
    %4171 = vmatprep.mubr.bf16.mxu0 %v707
    %4172 = vmatmul.mubr.bf16.gmra.mrb[0].mxu0 %v706
    %v4173 = vpop.f32.mrb[0].mxu0
    %v4174 = vadd.f32 %v3981, %v4173
    %v4175 = vpop.f32.mrb[0].mxu0
    %v4176 = vadd.f32 %v3983, %v4175
    %v4177 = vpop.f32.mrb[0].mxu0
    %v4178 = vadd.f32 %v3985, %v4177
    %v4179 = vpop.f32.mrb[0].mxu0
    %v4180 = vadd.f32 %v3987, %v4179
    %4181 = vmatprep.mubr.bf16.mxu0 %v711
    %4182 = vmatmul.mubr.bf16.gmra.mrb[0].mxu0 %v710
    %v4183 = vpop.f32.mrb[0].mxu0
    %v4184 = vadd.f32 %v3991, %v4183
    %v4185 = vpop.f32.mrb[0].mxu0
    %v4186 = vadd.f32 %v3993, %v4185
    %v4187 = vpop.f32.mrb[0].mxu0
    %v4188 = vadd.f32 %v3995, %v4187
    %v4189 = vpop.f32.mrb[0].mxu0
    %v4190 = vadd.f32 %v3997, %v4189
    %4191 = vmatprep.mubr.bf16.mxu0 %v715
    %4192 = vmatmul.mubr.bf16.gmra.mrb[0].mxu0 %v714
    %v4193 = vpop.f32.mrb[0].mxu0
    %v4194 = vadd.f32 %v4001, %v4193
    %v4195 = vpop.f32.mrb[0].mxu0
    %v4196 = vadd.f32 %v4003, %v4195
    %v4197 = vpop.f32.mrb[0].mxu0
    %v4198 = vadd.f32 %v4005, %v4197
    %v4199 = vpop.f32.mrb[0].mxu0
    %v4200 = vadd.f32 %v4007, %v4199
    %4201 = vmatprep.mubr.bf16.mxu0 %v719
    %4202 = vmatmul.mubr.bf16.gmra.mrb[0].mxu0 %v718
    %v4203 = vpop.f32.mrb[0].mxu0
    %v4204 = vadd.f32 %v4011, %v4203
    %v4205 = vpop.f32.mrb[0].mxu0
    %v4206 = vadd.f32 %v4013, %v4205
    %v4207 = vpop.f32.mrb[0].mxu0
    %v4208 = vadd.f32 %v4015, %v4207
    %v4209 = vpop.f32.mrb[0].mxu0
    %v4210 = vadd.f32 %v4017, %v4209
    %4211 = vmatprep.mubr.bf16.mxu0 %v723
    %4212 = vmatmul.mubr.bf16.gmra.mrb[0].mxu0 %v722
    %v4213 = vpop.f32.mrb[0].mxu0
    %v4214 = vadd.f32 %v4021, %v4213
    %v4215 = vpop.f32.mrb[0].mxu0
    %v4216 = vadd.f32 %v4023, %v4215
    %v4217 = vpop.f32.mrb[0].mxu0
    %v4218 = vadd.f32 %v4025, %v4217
    %v4219 = vpop.f32.mrb[0].mxu0
    %v4220 = vadd.f32 %v4027, %v4219
    %4221 = vmatprep.mubr.bf16.mxu0 %v727
    %4222 = vmatmul.mubr.bf16.gmra.mrb[0].mxu0 %v726
    %v4223 = vpop.f32.mrb[0].mxu0
    %v4224 = vadd.f32 %v4031, %v4223
    %v4225 = vpop.f32.mrb[0].mxu0
    %v4226 = vadd.f32 %v4033, %v4225
    %v4227 = vpop.f32.mrb[0].mxu0
    %v4228 = vadd.f32 %v4035, %v4227
    %v4229 = vpop.f32.mrb[0].mxu0
    %v4230 = vadd.f32 %v4037, %v4229
    %4231 = vmatprep.mubr.bf16.mxu0 %v731
    %4232 = vmatmul.mubr.bf16.gmra.mrb[0].mxu0 %v730
    %v4233 = vpop.f32.mrb[0].mxu0
    %v4234 = vadd.f32 %v4041, %v4233
    %v4235 = vpop.f32.mrb[0].mxu0
    %v4236 = vadd.f32 %v4043, %v4235
    %v4237 = vpop.f32.mrb[0].mxu0
    %v4238 = vadd.f32 %v4045, %v4237
    %v4239 = vpop.f32.mrb[0].mxu0
    %v4240 = vadd.f32 %v4047, %v4239
    %4241 = vmatprep.mubr.bf16.mxu0 %v735
    %4242 = vmatmul.mubr.bf16.gmra.mrb[0].mxu0 %v734
    %v4243 = vpop.f32.mrb[0].mxu0
    %v4244 = vadd.f32 %v4051, %v4243
    %v4245 = vpop.f32.mrb[0].mxu0
    %v4246 = vadd.f32 %v4053, %v4245
    %v4247 = vpop.f32.mrb[0].mxu0
    %v4248 = vadd.f32 %v4055, %v4247
    %v4249 = vpop.f32.mrb[0].mxu0
    %v4250 = vadd.f32 %v4057, %v4249
    %4251 = vmatprep.mubr.bf16.mxu0 %v739
    %4252 = vmatmul.mubr.bf16.gmra.mrb[0].mxu0 %v738
    %v4253 = vpop.f32.mrb[0].mxu0
    %v4254 = vadd.f32 %v4061, %v4253
    %v4255 = vpop.f32.mrb[0].mxu0
    %v4256 = vadd.f32 %v4063, %v4255
    %v4257 = vpop.f32.mrb[0].mxu0
    %v4258 = vadd.f32 %v4065, %v4257
    %v4259 = vpop.f32.mrb[0].mxu0
    %v4260 = vadd.f32 %v4067, %v4259
    %4261 = vmatprep.mubr.bf16.mxu0 %v743
    %4262 = vmatmul.mubr.bf16.gmra.mrb[0].mxu0 %v742
    %v4263 = vpop.f32.mrb[0].mxu0
    %v4264 = vadd.f32 %v4071, %v4263
    %v4265 = vpop.f32.mrb[0].mxu0
    %v4266 = vadd.f32 %v4073, %v4265
    %v4267 = vpop.f32.mrb[0].mxu0
    %v4268 = vadd.f32 %v4075, %v4267
    %v4269 = vpop.f32.mrb[0].mxu0
    %v4270 = vadd.f32 %v4077, %v4269
    %4271 = vdwg.mxu0
    %4272 = vmatprep.subr.bf16.mxu0 %v2217
    %4273 = vmatpush1.bf16.xpose.msra.mxu0 %v2216
    %4274 = vmatprep.subr.bf16.mxu0 %v2221
    %4275 = vmatpush1.bf16.xpose.msra.mxu0 %v2220
    %4276 = vmatprep.subr.bf16.mxu0 %v2225
    %4277 = vmatpush1.bf16.xpose.msra.mxu0 %v2224
    %4278 = vmatprep.subr.bf16.mxu0 %v2229
    %4279 = vmatpush1.bf16.xpose.msra.mxu0 %v2228
    %4280 = vmatprep.subr.bf16.mxu0 %v2233
    %4281 = vmatpush1.bf16.xpose.msra.mxu0 %v2232
    %4282 = vmatprep.subr.bf16.mxu0 %v2237
    %4283 = vmatpush1.bf16.xpose.msra.mxu0 %v2236
    %4284 = vmatprep.subr.bf16.mxu0 %v2241
    %4285 = vmatpush1.bf16.xpose.msra.mxu0 %v2240
    %4286 = vmatprep.subr.bf16.mxu0 %v2245
    %4287 = vmatpush1.bf16.xpose.msra.mxu0 %v2244
    %4288 = vmatprep.subr.bf16.mxu0 %v2249
    %4289 = vmatpush1.bf16.xpose.msra.mxu0 %v2248
    %4290 = vmatprep.subr.bf16.mxu0 %v2253
    %4291 = vmatpush1.bf16.xpose.msra.mxu0 %v2252
    %4292 = vmatprep.subr.bf16.mxu0 %v2257
    %4293 = vmatpush1.bf16.xpose.msra.mxu0 %v2256
    %4294 = vmatprep.subr.bf16.mxu0 %v2261
    %4295 = vmatpush1.bf16.xpose.msra.mxu0 %v2260
    %4296 = vmatprep.subr.bf16.mxu0 %v2265
    %4297 = vmatpush1.bf16.xpose.msra.mxu0 %v2264
    %4298 = vmatprep.subr.bf16.mxu0 %v2269
    %4299 = vmatpush1.bf16.xpose.msra.mxu0 %v2268
    %4300 = vmatprep.subr.bf16.mxu0 %v2273
    %4301 = vmatpush1.bf16.xpose.msra.mxu0 %v2272
    %4302 = vmatprep.subr.bf16.mxu0 %v2277
    %4303 = vmatpush1.bf16.xpose.msra.mxu0 %v2276
    %4304 = vmatprep.mubr.bf16.mxu0 %v681
    %4305 = vmatmul.mubr.bf16.gmra.mrb[0].mxu0 %v680
    %v4306 = vpop.f32.mrb[0].mxu0
    %v4307 = vadd.f32 0.0, %v4306
    %v4308 = vpop.f32.mrb[0].mxu0
    %v4309 = vadd.f32 0.0, %v4308
    %v4310 = vpop.f32.mrb[0].mxu0
    %v4311 = vadd.f32 0.0, %v4310
    %v4312 = vpop.f32.mrb[0].mxu0
    %v4313 = vadd.f32 0.0, %v4312
    %4314 = vmatprep.mubr.bf16.mxu0 %v685
    %4315 = vmatmul.mubr.bf16.gmra.mrb[0].mxu0 %v684
    %v4316 = vpop.f32.mrb[0].mxu0
    %v4317 = vadd.f32 0.0, %v4316
    %v4318 = vpop.f32.mrb[0].mxu0
    %v4319 = vadd.f32 0.0, %v4318
    %v4320 = vpop.f32.mrb[0].mxu0
    %v4321 = vadd.f32 0.0, %v4320
    %v4322 = vpop.f32.mrb[0].mxu0
    %v4323 = vadd.f32 0.0, %v4322
    %4324 = vmatprep.mubr.bf16.mxu0 %v689
    %4325 = vmatmul.mubr.bf16.gmra.mrb[0].mxu0 %v688
    %v4326 = vpop.f32.mrb[0].mxu0
    %v4327 = vadd.f32 0.0, %v4326
    %v4328 = vpop.f32.mrb[0].mxu0
    %v4329 = vadd.f32 0.0, %v4328
    %v4330 = vpop.f32.mrb[0].mxu0
    %v4331 = vadd.f32 0.0, %v4330
    %v4332 = vpop.f32.mrb[0].mxu0
    %v4333 = vadd.f32 0.0, %v4332
    %4334 = vmatprep.mubr.bf16.mxu0 %v693
    %4335 = vmatmul.mubr.bf16.gmra.mrb[0].mxu0 %v692
    %v4336 = vpop.f32.mrb[0].mxu0
    %v4337 = vadd.f32 0.0, %v4336
    %v4338 = vpop.f32.mrb[0].mxu0
    %v4339 = vadd.f32 0.0, %v4338
    %v4340 = vpop.f32.mrb[0].mxu0
    %v4341 = vadd.f32 0.0, %v4340
    %v4342 = vpop.f32.mrb[0].mxu0
    %v4343 = vadd.f32 0.0, %v4342
    %4344 = vmatprep.mubr.bf16.mxu0 %v697
    %4345 = vmatmul.mubr.bf16.gmra.mrb[0].mxu0 %v696
    %v4346 = vpop.f32.mrb[0].mxu0
    %v4347 = vadd.f32 0.0, %v4346
    %v4348 = vpop.f32.mrb[0].mxu0
    %v4349 = vadd.f32 0.0, %v4348
    %v4350 = vpop.f32.mrb[0].mxu0
    %v4351 = vadd.f32 0.0, %v4350
    %v4352 = vpop.f32.mrb[0].mxu0
    %v4353 = vadd.f32 0.0, %v4352
    %4354 = vmatprep.mubr.bf16.mxu0 %v701
    %4355 = vmatmul.mubr.bf16.gmra.mrb[0].mxu0 %v700
    %v4356 = vpop.f32.mrb[0].mxu0
    %v4357 = vadd.f32 0.0, %v4356
    %v4358 = vpop.f32.mrb[0].mxu0
    %v4359 = vadd.f32 0.0, %v4358
    %v4360 = vpop.f32.mrb[0].mxu0
    %v4361 = vadd.f32 0.0, %v4360
    %v4362 = vpop.f32.mrb[0].mxu0
    %v4363 = vadd.f32 0.0, %v4362
    %4364 = vmatprep.mubr.bf16.mxu0 %v705
    %4365 = vmatmul.mubr.bf16.gmra.mrb[0].mxu0 %v704
    %v4366 = vpop.f32.mrb[0].mxu0
    %v4367 = vadd.f32 0.0, %v4366
    %v4368 = vpop.f32.mrb[0].mxu0
    %v4369 = vadd.f32 0.0, %v4368
    %v4370 = vpop.f32.mrb[0].mxu0
    %v4371 = vadd.f32 0.0, %v4370
    %v4372 = vpop.f32.mrb[0].mxu0
    %v4373 = vadd.f32 0.0, %v4372
    %4374 = vmatprep.mubr.bf16.mxu0 %v709
    %4375 = vmatmul.mubr.bf16.gmra.mrb[0].mxu0 %v708
    %v4376 = vpop.f32.mrb[0].mxu0
    %v4377 = vadd.f32 0.0, %v4376
    %v4378 = vpop.f32.mrb[0].mxu0
    %v4379 = vadd.f32 0.0, %v4378
    %v4380 = vpop.f32.mrb[0].mxu0
    %v4381 = vadd.f32 0.0, %v4380
    %v4382 = vpop.f32.mrb[0].mxu0
    %v4383 = vadd.f32 0.0, %v4382
    %4384 = vmatprep.mubr.bf16.mxu0 %v713
    %4385 = vmatmul.mubr.bf16.gmra.mrb[0].mxu0 %v712
    %v4386 = vpop.f32.mrb[0].mxu0
    %v4387 = vadd.f32 0.0, %v4386
    %v4388 = vpop.f32.mrb[0].mxu0
    %v4389 = vadd.f32 0.0, %v4388
    %v4390 = vpop.f32.mrb[0].mxu0
    %v4391 = vadd.f32 0.0, %v4390
    %v4392 = vpop.f32.mrb[0].mxu0
    %v4393 = vadd.f32 0.0, %v4392
    %4394 = vmatprep.mubr.bf16.mxu0 %v717
    %4395 = vmatmul.mubr.bf16.gmra.mrb[0].mxu0 %v716
    %v4396 = vpop.f32.mrb[0].mxu0
    %v4397 = vadd.f32 0.0, %v4396
    %v4398 = vpop.f32.mrb[0].mxu0
    %v4399 = vadd.f32 0.0, %v4398
    %v4400 = vpop.f32.mrb[0].mxu0
    %v4401 = vadd.f32 0.0, %v4400
    %v4402 = vpop.f32.mrb[0].mxu0
    %v4403 = vadd.f32 0.0, %v4402
    %4404 = vmatprep.mubr.bf16.mxu0 %v721
    %4405 = vmatmul.mubr.bf16.gmra.mrb[0].mxu0 %v720
    %v4406 = vpop.f32.mrb[0].mxu0
    %v4407 = vadd.f32 0.0, %v4406
    %v4408 = vpop.f32.mrb[0].mxu0
    %v4409 = vadd.f32 0.0, %v4408
    %v4410 = vpop.f32.mrb[0].mxu0
    %v4411 = vadd.f32 0.0, %v4410
    %v4412 = vpop.f32.mrb[0].mxu0
    %v4413 = vadd.f32 0.0, %v4412
    %4414 = vmatprep.mubr.bf16.mxu0 %v725
    %4415 = vmatmul.mubr.bf16.gmra.mrb[0].mxu0 %v724
    %v4416 = vpop.f32.mrb[0].mxu0
    %v4417 = vadd.f32 0.0, %v4416
    %v4418 = vpop.f32.mrb[0].mxu0
    %v4419 = vadd.f32 0.0, %v4418
    %v4420 = vpop.f32.mrb[0].mxu0
    %v4421 = vadd.f32 0.0, %v4420
    %v4422 = vpop.f32.mrb[0].mxu0
    %v4423 = vadd.f32 0.0, %v4422
    %4424 = vmatprep.mubr.bf16.mxu0 %v729
    %4425 = vmatmul.mubr.bf16.gmra.mrb[0].mxu0 %v728
    %v4426 = vpop.f32.mrb[0].mxu0
    %v4427 = vadd.f32 0.0, %v4426
    %v4428 = vpop.f32.mrb[0].mxu0
    %v4429 = vadd.f32 0.0, %v4428
    %v4430 = vpop.f32.mrb[0].mxu0
    %v4431 = vadd.f32 0.0, %v4430
    %v4432 = vpop.f32.mrb[0].mxu0
    %v4433 = vadd.f32 0.0, %v4432
    %4434 = vmatprep.mubr.bf16.mxu0 %v733
    %4435 = vmatmul.mubr.bf16.gmra.mrb[0].mxu0 %v732
    %v4436 = vpop.f32.mrb[0].mxu0
    %v4437 = vadd.f32 0.0, %v4436
    %v4438 = vpop.f32.mrb[0].mxu0
    %v4439 = vadd.f32 0.0, %v4438
    %v4440 = vpop.f32.mrb[0].mxu0
    %v4441 = vadd.f32 0.0, %v4440
    %v4442 = vpop.f32.mrb[0].mxu0
    %v4443 = vadd.f32 0.0, %v4442
    %4444 = vmatprep.mubr.bf16.mxu0 %v737
    %4445 = vmatmul.mubr.bf16.gmra.mrb[0].mxu0 %v736
    %v4446 = vpop.f32.mrb[0].mxu0
    %v4447 = vadd.f32 0.0, %v4446
    %v4448 = vpop.f32.mrb[0].mxu0
    %v4449 = vadd.f32 0.0, %v4448
    %v4450 = vpop.f32.mrb[0].mxu0
    %v4451 = vadd.f32 0.0, %v4450
    %v4452 = vpop.f32.mrb[0].mxu0
    %v4453 = vadd.f32 0.0, %v4452
    %4454 = vmatprep.mubr.bf16.mxu0 %v741
    %4455 = vmatmul.mubr.bf16.gmra.mrb[0].mxu0 %v740
    %v4456 = vpop.f32.mrb[0].mxu0
    %v4457 = vadd.f32 0.0, %v4456
    %v4458 = vpop.f32.mrb[0].mxu0
    %v4459 = vadd.f32 0.0, %v4458
    %v4460 = vpop.f32.mrb[0].mxu0
    %v4461 = vadd.f32 0.0, %v4460
    %v4462 = vpop.f32.mrb[0].mxu0
    %v4463 = vadd.f32 0.0, %v4462
    %4464 = vdwg.mxu0
    %4465 = vmatprep.subr.bf16.mxu0 %v2219
    %4466 = vmatpush1.bf16.xpose.msra.mxu0 %v2218
    %4467 = vmatprep.subr.bf16.mxu0 %v2223
    %4468 = vmatpush1.bf16.xpose.msra.mxu0 %v2222
    %4469 = vmatprep.subr.bf16.mxu0 %v2227
    %4470 = vmatpush1.bf16.xpose.msra.mxu0 %v2226
    %4471 = vmatprep.subr.bf16.mxu0 %v2231
    %4472 = vmatpush1.bf16.xpose.msra.mxu0 %v2230
    %4473 = vmatprep.subr.bf16.mxu0 %v2235
    %4474 = vmatpush1.bf16.xpose.msra.mxu0 %v2234
    %4475 = vmatprep.subr.bf16.mxu0 %v2239
    %4476 = vmatpush1.bf16.xpose.msra.mxu0 %v2238
    %4477 = vmatprep.subr.bf16.mxu0 %v2243
    %4478 = vmatpush1.bf16.xpose.msra.mxu0 %v2242
    %4479 = vmatprep.subr.bf16.mxu0 %v2247
    %4480 = vmatpush1.bf16.xpose.msra.mxu0 %v2246
    %4481 = vmatprep.subr.bf16.mxu0 %v2251
    %4482 = vmatpush1.bf16.xpose.msra.mxu0 %v2250
    %4483 = vmatprep.subr.bf16.mxu0 %v2255
    %4484 = vmatpush1.bf16.xpose.msra.mxu0 %v2254
    %4485 = vmatprep.subr.bf16.mxu0 %v2259
    %4486 = vmatpush1.bf16.xpose.msra.mxu0 %v2258
    %4487 = vmatprep.subr.bf16.mxu0 %v2263
    %4488 = vmatpush1.bf16.xpose.msra.mxu0 %v2262
    %4489 = vmatprep.subr.bf16.mxu0 %v2267
    %4490 = vmatpush1.bf16.xpose.msra.mxu0 %v2266
    %4491 = vmatprep.subr.bf16.mxu0 %v2271
    %4492 = vmatpush1.bf16.xpose.msra.mxu0 %v2270
    %4493 = vmatprep.subr.bf16.mxu0 %v2275
    %4494 = vmatpush1.bf16.xpose.msra.mxu0 %v2274
    %4495 = vmatprep.subr.bf16.mxu0 %v2279
    %4496 = vmatpush1.bf16.xpose.msra.mxu0 %v2278
    %4497 = vmatprep.mubr.bf16.mxu0 %v683
    %4498 = vmatmul.mubr.bf16.gmra.mrb[0].mxu0 %v682
    %v4499 = vpop.f32.mrb[0].mxu0
    %v4500 = vadd.f32 %v4307, %v4499
    %v4501 = vpop.f32.mrb[0].mxu0
    %v4502 = vadd.f32 %v4309, %v4501
    %v4503 = vpop.f32.mrb[0].mxu0
    %v4504 = vadd.f32 %v4311, %v4503
    %v4505 = vpop.f32.mrb[0].mxu0
    %v4506 = vadd.f32 %v4313, %v4505
    %4507 = vmatprep.mubr.bf16.mxu0 %v687
    %4508 = vmatmul.mubr.bf16.gmra.mrb[0].mxu0 %v686
    %v4509 = vpop.f32.mrb[0].mxu0
    %v4510 = vadd.f32 %v4317, %v4509
    %v4511 = vpop.f32.mrb[0].mxu0
    %v4512 = vadd.f32 %v4319, %v4511
    %v4513 = vpop.f32.mrb[0].mxu0
    %v4514 = vadd.f32 %v4321, %v4513
    %v4515 = vpop.f32.mrb[0].mxu0
    %v4516 = vadd.f32 %v4323, %v4515
    %4517 = vmatprep.mubr.bf16.mxu0 %v691
    %4518 = vmatmul.mubr.bf16.gmra.mrb[0].mxu0 %v690
    %v4519 = vpop.f32.mrb[0].mxu0
    %v4520 = vadd.f32 %v4327, %v4519
    %v4521 = vpop.f32.mrb[0].mxu0
    %v4522 = vadd.f32 %v4329, %v4521
    %v4523 = vpop.f32.mrb[0].mxu0
    %v4524 = vadd.f32 %v4331, %v4523
    %v4525 = vpop.f32.mrb[0].mxu0
    %v4526 = vadd.f32 %v4333, %v4525
    %4527 = vmatprep.mubr.bf16.mxu0 %v695
    %4528 = vmatmul.mubr.bf16.gmra.mrb[0].mxu0 %v694
    %v4529 = vpop.f32.mrb[0].mxu0
    %v4530 = vadd.f32 %v4337, %v4529
    %v4531 = vpop.f32.mrb[0].mxu0
    %v4532 = vadd.f32 %v4339, %v4531
    %v4533 = vpop.f32.mrb[0].mxu0
    %v4534 = vadd.f32 %v4341, %v4533
    %v4535 = vpop.f32.mrb[0].mxu0
    %v4536 = vadd.f32 %v4343, %v4535
    %4537 = vmatprep.mubr.bf16.mxu0 %v699
    %4538 = vmatmul.mubr.bf16.gmra.mrb[0].mxu0 %v698
    %v4539 = vpop.f32.mrb[0].mxu0
    %v4540 = vadd.f32 %v4347, %v4539
    %v4541 = vpop.f32.mrb[0].mxu0
    %v4542 = vadd.f32 %v4349, %v4541
    %v4543 = vpop.f32.mrb[0].mxu0
    %v4544 = vadd.f32 %v4351, %v4543
    %v4545 = vpop.f32.mrb[0].mxu0
    %v4546 = vadd.f32 %v4353, %v4545
    %4547 = vmatprep.mubr.bf16.mxu0 %v703
    %4548 = vmatmul.mubr.bf16.gmra.mrb[0].mxu0 %v702
    %v4549 = vpop.f32.mrb[0].mxu0
    %v4550 = vadd.f32 %v4357, %v4549
    %v4551 = vpop.f32.mrb[0].mxu0
    %v4552 = vadd.f32 %v4359, %v4551
    %v4553 = vpop.f32.mrb[0].mxu0
    %v4554 = vadd.f32 %v4361, %v4553
    %v4555 = vpop.f32.mrb[0].mxu0
    %v4556 = vadd.f32 %v4363, %v4555
    %4557 = vmatprep.mubr.bf16.mxu0 %v707
    %4558 = vmatmul.mubr.bf16.gmra.mrb[0].mxu0 %v706
    %v4559 = vpop.f32.mrb[0].mxu0
    %v4560 = vadd.f32 %v4367, %v4559
    %v4561 = vpop.f32.mrb[0].mxu0
    %v4562 = vadd.f32 %v4369, %v4561
    %v4563 = vpop.f32.mrb[0].mxu0
    %v4564 = vadd.f32 %v4371, %v4563
    %v4565 = vpop.f32.mrb[0].mxu0
    %v4566 = vadd.f32 %v4373, %v4565
    %4567 = vmatprep.mubr.bf16.mxu0 %v711
    %4568 = vmatmul.mubr.bf16.gmra.mrb[0].mxu0 %v710
    %v4569 = vpop.f32.mrb[0].mxu0
    %v4570 = vadd.f32 %v4377, %v4569
    %v4571 = vpop.f32.mrb[0].mxu0
    %v4572 = vadd.f32 %v4379, %v4571
    %v4573 = vpop.f32.mrb[0].mxu0
    %v4574 = vadd.f32 %v4381, %v4573
    %v4575 = vpop.f32.mrb[0].mxu0
    %v4576 = vadd.f32 %v4383, %v4575
    %4577 = vmatprep.mubr.bf16.mxu0 %v715
    %4578 = vmatmul.mubr.bf16.gmra.mrb[0].mxu0 %v714
    %v4579 = vpop.f32.mrb[0].mxu0
    %v4580 = vadd.f32 %v4387, %v4579
    %v4581 = vpop.f32.mrb[0].mxu0
    %v4582 = vadd.f32 %v4389, %v4581
    %v4583 = vpop.f32.mrb[0].mxu0
    %v4584 = vadd.f32 %v4391, %v4583
    %v4585 = vpop.f32.mrb[0].mxu0
    %v4586 = vadd.f32 %v4393, %v4585
    %4587 = vmatprep.mubr.bf16.mxu0 %v719
    %4588 = vmatmul.mubr.bf16.gmra.mrb[0].mxu0 %v718
    %v4589 = vpop.f32.mrb[0].mxu0
    %v4590 = vadd.f32 %v4397, %v4589
    %v4591 = vpop.f32.mrb[0].mxu0
    %v4592 = vadd.f32 %v4399, %v4591
    %v4593 = vpop.f32.mrb[0].mxu0
    %v4594 = vadd.f32 %v4401, %v4593
    %v4595 = vpop.f32.mrb[0].mxu0
    %v4596 = vadd.f32 %v4403, %v4595
    %4597 = vmatprep.mubr.bf16.mxu0 %v723
    %4598 = vmatmul.mubr.bf16.gmra.mrb[0].mxu0 %v722
    %v4599 = vpop.f32.mrb[0].mxu0
    %v4600 = vadd.f32 %v4407, %v4599
    %v4601 = vpop.f32.mrb[0].mxu0
    %v4602 = vadd.f32 %v4409, %v4601
    %v4603 = vpop.f32.mrb[0].mxu0
    %v4604 = vadd.f32 %v4411, %v4603
    %v4605 = vpop.f32.mrb[0].mxu0
    %v4606 = vadd.f32 %v4413, %v4605
    %4607 = vmatprep.mubr.bf16.mxu0 %v727
    %4608 = vmatmul.mubr.bf16.gmra.mrb[0].mxu0 %v726
    %v4609 = vpop.f32.mrb[0].mxu0
    %v4610 = vadd.f32 %v4417, %v4609
    %v4611 = vpop.f32.mrb[0].mxu0
    %v4612 = vadd.f32 %v4419, %v4611
    %v4613 = vpop.f32.mrb[0].mxu0
    %v4614 = vadd.f32 %v4421, %v4613
    %v4615 = vpop.f32.mrb[0].mxu0
    %v4616 = vadd.f32 %v4423, %v4615
    %4617 = vmatprep.mubr.bf16.mxu0 %v731
    %4618 = vmatmul.mubr.bf16.gmra.mrb[0].mxu0 %v730
    %v4619 = vpop.f32.mrb[0].mxu0
    %v4620 = vadd.f32 %v4427, %v4619
    %v4621 = vpop.f32.mrb[0].mxu0
    %v4622 = vadd.f32 %v4429, %v4621
    %v4623 = vpop.f32.mrb[0].mxu0
    %v4624 = vadd.f32 %v4431, %v4623
    %v4625 = vpop.f32.mrb[0].mxu0
    %v4626 = vadd.f32 %v4433, %v4625
    %4627 = vmatprep.mubr.bf16.mxu0 %v735
    %4628 = vmatmul.mubr.bf16.gmra.mrb[0].mxu0 %v734
    %v4629 = vpop.f32.mrb[0].mxu0
    %v4630 = vadd.f32 %v4437, %v4629
    %v4631 = vpop.f32.mrb[0].mxu0
    %v4632 = vadd.f32 %v4439, %v4631
    %v4633 = vpop.f32.mrb[0].mxu0
    %v4634 = vadd.f32 %v4441, %v4633
    %v4635 = vpop.f32.mrb[0].mxu0
    %v4636 = vadd.f32 %v4443, %v4635
    %4637 = vmatprep.mubr.bf16.mxu0 %v739
    %4638 = vmatmul.mubr.bf16.gmra.mrb[0].mxu0 %v738
    %v4639 = vpop.f32.mrb[0].mxu0
    %v4640 = vadd.f32 %v4447, %v4639
    %v4641 = vpop.f32.mrb[0].mxu0
    %v4642 = vadd.f32 %v4449, %v4641
    %v4643 = vpop.f32.mrb[0].mxu0
    %v4644 = vadd.f32 %v4451, %v4643
    %v4645 = vpop.f32.mrb[0].mxu0
    %v4646 = vadd.f32 %v4453, %v4645
    %4647 = vmatprep.mubr.bf16.mxu0 %v743
    %4648 = vmatmul.mubr.bf16.gmra.mrb[0].mxu0 %v742
    %v4649 = vpop.f32.mrb[0].mxu0
    %v4650 = vadd.f32 %v4457, %v4649
    %v4651 = vpop.f32.mrb[0].mxu0
    %v4652 = vadd.f32 %v4459, %v4651
    %v4653 = vpop.f32.mrb[0].mxu0
    %v4654 = vadd.f32 %v4461, %v4653
    %v4655 = vpop.f32.mrb[0].mxu0
    %v4656 = vadd.f32 %v4463, %v4655
    %4657 = vdwg.mxu0
    %4658 = vmatprep.subr.bf16.mxu0 %v2281
    %4659 = vmatpush1.bf16.xpose.msra.mxu0 %v2280
    %4660 = vmatprep.subr.bf16.mxu0 %v2285
    %4661 = vmatpush1.bf16.xpose.msra.mxu0 %v2284
    %4662 = vmatprep.subr.bf16.mxu0 %v2289
    %4663 = vmatpush1.bf16.xpose.msra.mxu0 %v2288
    %4664 = vmatprep.subr.bf16.mxu0 %v2293
    %4665 = vmatpush1.bf16.xpose.msra.mxu0 %v2292
    %4666 = vmatprep.subr.bf16.mxu0 %v2297
    %4667 = vmatpush1.bf16.xpose.msra.mxu0 %v2296
    %4668 = vmatprep.subr.bf16.mxu0 %v2301
    %4669 = vmatpush1.bf16.xpose.msra.mxu0 %v2300
    %4670 = vmatprep.subr.bf16.mxu0 %v2305
    %4671 = vmatpush1.bf16.xpose.msra.mxu0 %v2304
    %4672 = vmatprep.subr.bf16.mxu0 %v2309
    %4673 = vmatpush1.bf16.xpose.msra.mxu0 %v2308
    %4674 = vmatprep.subr.bf16.mxu0 %v2313
    %4675 = vmatpush1.bf16.xpose.msra.mxu0 %v2312
    %4676 = vmatprep.subr.bf16.mxu0 %v2317
    %4677 = vmatpush1.bf16.xpose.msra.mxu0 %v2316
    %4678 = vmatprep.subr.bf16.mxu0 %v2321
    %4679 = vmatpush1.bf16.xpose.msra.mxu0 %v2320
    %4680 = vmatprep.subr.bf16.mxu0 %v2325
    %4681 = vmatpush1.bf16.xpose.msra.mxu0 %v2324
    %4682 = vmatprep.subr.bf16.mxu0 %v2329
    %4683 = vmatpush1.bf16.xpose.msra.mxu0 %v2328
    %4684 = vmatprep.subr.bf16.mxu0 %v2333
    %4685 = vmatpush1.bf16.xpose.msra.mxu0 %v2332
    %4686 = vmatprep.subr.bf16.mxu0 %v2337
    %4687 = vmatpush1.bf16.xpose.msra.mxu0 %v2336
    %4688 = vmatprep.subr.bf16.mxu0 %v2341
    %4689 = vmatpush1.bf16.xpose.msra.mxu0 %v2340
    %4690 = vmatprep.mubr.bf16.mxu0 %v681
    %4691 = vmatmul.mubr.bf16.gmra.mrb[0].mxu0 %v680
    %v4692 = vpop.f32.mrb[0].mxu0
    %v4693 = vadd.f32 0.0, %v4692
    %v4694 = vpop.f32.mrb[0].mxu0
    %v4695 = vadd.f32 0.0, %v4694
    %v4696 = vpop.f32.mrb[0].mxu0
    %v4697 = vadd.f32 0.0, %v4696
    %v4698 = vpop.f32.mrb[0].mxu0
    %v4699 = vadd.f32 0.0, %v4698
    %4700 = vmatprep.mubr.bf16.mxu0 %v685
    %4701 = vmatmul.mubr.bf16.gmra.mrb[0].mxu0 %v684
    %v4702 = vpop.f32.mrb[0].mxu0
    %v4703 = vadd.f32 0.0, %v4702
    %v4704 = vpop.f32.mrb[0].mxu0
    %v4705 = vadd.f32 0.0, %v4704
    %v4706 = vpop.f32.mrb[0].mxu0
    %v4707 = vadd.f32 0.0, %v4706
    %v4708 = vpop.f32.mrb[0].mxu0
    %v4709 = vadd.f32 0.0, %v4708
    %4710 = vmatprep.mubr.bf16.mxu0 %v689
    %4711 = vmatmul.mubr.bf16.gmra.mrb[0].mxu0 %v688
    %v4712 = vpop.f32.mrb[0].mxu0
    %v4713 = vadd.f32 0.0, %v4712
    %v4714 = vpop.f32.mrb[0].mxu0
    %v4715 = vadd.f32 0.0, %v4714
    %v4716 = vpop.f32.mrb[0].mxu0
    %v4717 = vadd.f32 0.0, %v4716
    %v4718 = vpop.f32.mrb[0].mxu0
    %v4719 = vadd.f32 0.0, %v4718
    %4720 = vmatprep.mubr.bf16.mxu0 %v693
    %4721 = vmatmul.mubr.bf16.gmra.mrb[0].mxu0 %v692
    %v4722 = vpop.f32.mrb[0].mxu0
    %v4723 = vadd.f32 0.0, %v4722
    %v4724 = vpop.f32.mrb[0].mxu0
    %v4725 = vadd.f32 0.0, %v4724
    %v4726 = vpop.f32.mrb[0].mxu0
    %v4727 = vadd.f32 0.0, %v4726
    %v4728 = vpop.f32.mrb[0].mxu0
    %v4729 = vadd.f32 0.0, %v4728
    %4730 = vmatprep.mubr.bf16.mxu0 %v697
    %4731 = vmatmul.mubr.bf16.gmra.mrb[0].mxu0 %v696
    %v4732 = vpop.f32.mrb[0].mxu0
    %v4733 = vadd.f32 0.0, %v4732
    %v4734 = vpop.f32.mrb[0].mxu0
    %v4735 = vadd.f32 0.0, %v4734
    %v4736 = vpop.f32.mrb[0].mxu0
    %v4737 = vadd.f32 0.0, %v4736
    %v4738 = vpop.f32.mrb[0].mxu0
    %v4739 = vadd.f32 0.0, %v4738
    %4740 = vmatprep.mubr.bf16.mxu0 %v701
    %4741 = vmatmul.mubr.bf16.gmra.mrb[0].mxu0 %v700
    %v4742 = vpop.f32.mrb[0].mxu0
    %v4743 = vadd.f32 0.0, %v4742
    %v4744 = vpop.f32.mrb[0].mxu0
    %v4745 = vadd.f32 0.0, %v4744
    %v4746 = vpop.f32.mrb[0].mxu0
    %v4747 = vadd.f32 0.0, %v4746
    %v4748 = vpop.f32.mrb[0].mxu0
    %v4749 = vadd.f32 0.0, %v4748
    %4750 = vmatprep.mubr.bf16.mxu0 %v705
    %4751 = vmatmul.mubr.bf16.gmra.mrb[0].mxu0 %v704
    %v4752 = vpop.f32.mrb[0].mxu0
    %v4753 = vadd.f32 0.0, %v4752
    %v4754 = vpop.f32.mrb[0].mxu0
    %v4755 = vadd.f32 0.0, %v4754
    %v4756 = vpop.f32.mrb[0].mxu0
    %v4757 = vadd.f32 0.0, %v4756
    %v4758 = vpop.f32.mrb[0].mxu0
    %v4759 = vadd.f32 0.0, %v4758
    %4760 = vmatprep.mubr.bf16.mxu0 %v709
    %4761 = vmatmul.mubr.bf16.gmra.mrb[0].mxu0 %v708
    %v4762 = vpop.f32.mrb[0].mxu0
    %v4763 = vadd.f32 0.0, %v4762
    %v4764 = vpop.f32.mrb[0].mxu0
    %v4765 = vadd.f32 0.0, %v4764
    %v4766 = vpop.f32.mrb[0].mxu0
    %v4767 = vadd.f32 0.0, %v4766
    %v4768 = vpop.f32.mrb[0].mxu0
    %v4769 = vadd.f32 0.0, %v4768
    %4770 = vmatprep.mubr.bf16.mxu0 %v713
    %4771 = vmatmul.mubr.bf16.gmra.mrb[0].mxu0 %v712
    %v4772 = vpop.f32.mrb[0].mxu0
    %v4773 = vadd.f32 0.0, %v4772
    %v4774 = vpop.f32.mrb[0].mxu0
    %v4775 = vadd.f32 0.0, %v4774
    %v4776 = vpop.f32.mrb[0].mxu0
    %v4777 = vadd.f32 0.0, %v4776
    %v4778 = vpop.f32.mrb[0].mxu0
    %v4779 = vadd.f32 0.0, %v4778
    %4780 = vmatprep.mubr.bf16.mxu0 %v717
    %4781 = vmatmul.mubr.bf16.gmra.mrb[0].mxu0 %v716
    %v4782 = vpop.f32.mrb[0].mxu0
    %v4783 = vadd.f32 0.0, %v4782
    %v4784 = vpop.f32.mrb[0].mxu0
    %v4785 = vadd.f32 0.0, %v4784
    %v4786 = vpop.f32.mrb[0].mxu0
    %v4787 = vadd.f32 0.0, %v4786
    %v4788 = vpop.f32.mrb[0].mxu0
    %v4789 = vadd.f32 0.0, %v4788
    %4790 = vmatprep.mubr.bf16.mxu0 %v721
    %4791 = vmatmul.mubr.bf16.gmra.mrb[0].mxu0 %v720
    %v4792 = vpop.f32.mrb[0].mxu0
    %v4793 = vadd.f32 0.0, %v4792
    %v4794 = vpop.f32.mrb[0].mxu0
    %v4795 = vadd.f32 0.0, %v4794
    %v4796 = vpop.f32.mrb[0].mxu0
    %v4797 = vadd.f32 0.0, %v4796
    %v4798 = vpop.f32.mrb[0].mxu0
    %v4799 = vadd.f32 0.0, %v4798
    %4800 = vmatprep.mubr.bf16.mxu0 %v725
    %4801 = vmatmul.mubr.bf16.gmra.mrb[0].mxu0 %v724
    %v4802 = vpop.f32.mrb[0].mxu0
    %v4803 = vadd.f32 0.0, %v4802
    %v4804 = vpop.f32.mrb[0].mxu0
    %v4805 = vadd.f32 0.0, %v4804
    %v4806 = vpop.f32.mrb[0].mxu0
    %v4807 = vadd.f32 0.0, %v4806
    %v4808 = vpop.f32.mrb[0].mxu0
    %v4809 = vadd.f32 0.0, %v4808
    %4810 = vmatprep.mubr.bf16.mxu0 %v729
    %4811 = vmatmul.mubr.bf16.gmra.mrb[0].mxu0 %v728
    %v4812 = vpop.f32.mrb[0].mxu0
    %v4813 = vadd.f32 0.0, %v4812
    %v4814 = vpop.f32.mrb[0].mxu0
    %v4815 = vadd.f32 0.0, %v4814
    %v4816 = vpop.f32.mrb[0].mxu0
    %v4817 = vadd.f32 0.0, %v4816
    %v4818 = vpop.f32.mrb[0].mxu0
    %v4819 = vadd.f32 0.0, %v4818
    %4820 = vmatprep.mubr.bf16.mxu0 %v733
    %4821 = vmatmul.mubr.bf16.gmra.mrb[0].mxu0 %v732
    %v4822 = vpop.f32.mrb[0].mxu0
    %v4823 = vadd.f32 0.0, %v4822
    %v4824 = vpop.f32.mrb[0].mxu0
    %v4825 = vadd.f32 0.0, %v4824
    %v4826 = vpop.f32.mrb[0].mxu0
    %v4827 = vadd.f32 0.0, %v4826
    %v4828 = vpop.f32.mrb[0].mxu0
    %v4829 = vadd.f32 0.0, %v4828
    %4830 = vmatprep.mubr.bf16.mxu0 %v737
    %4831 = vmatmul.mubr.bf16.gmra.mrb[0].mxu0 %v736
    %v4832 = vpop.f32.mrb[0].mxu0
    %v4833 = vadd.f32 0.0, %v4832
    %v4834 = vpop.f32.mrb[0].mxu0
    %v4835 = vadd.f32 0.0, %v4834
    %v4836 = vpop.f32.mrb[0].mxu0
    %v4837 = vadd.f32 0.0, %v4836
    %v4838 = vpop.f32.mrb[0].mxu0
    %v4839 = vadd.f32 0.0, %v4838
    %4840 = vmatprep.mubr.bf16.mxu0 %v741
    %4841 = vmatmul.mubr.bf16.gmra.mrb[0].mxu0 %v740
    %v4842 = vpop.f32.mrb[0].mxu0
    %v4843 = vadd.f32 0.0, %v4842
    %v4844 = vpop.f32.mrb[0].mxu0
    %v4845 = vadd.f32 0.0, %v4844
    %v4846 = vpop.f32.mrb[0].mxu0
    %v4847 = vadd.f32 0.0, %v4846
    %v4848 = vpop.f32.mrb[0].mxu0
    %v4849 = vadd.f32 0.0, %v4848
    %4850 = vdwg.mxu0
    %4851 = vmatprep.subr.bf16.mxu0 %v2283
    %4852 = vmatpush1.bf16.xpose.msra.mxu0 %v2282
    %4853 = vmatprep.subr.bf16.mxu0 %v2287
    %4854 = vmatpush1.bf16.xpose.msra.mxu0 %v2286
    %4855 = vmatprep.subr.bf16.mxu0 %v2291
    %4856 = vmatpush1.bf16.xpose.msra.mxu0 %v2290
    %4857 = vmatprep.subr.bf16.mxu0 %v2295
    %4858 = vmatpush1.bf16.xpose.msra.mxu0 %v2294
    %4859 = vmatprep.subr.bf16.mxu0 %v2299
    %4860 = vmatpush1.bf16.xpose.msra.mxu0 %v2298
    %4861 = vmatprep.subr.bf16.mxu0 %v2303
    %4862 = vmatpush1.bf16.xpose.msra.mxu0 %v2302
    %4863 = vmatprep.subr.bf16.mxu0 %v2307
    %4864 = vmatpush1.bf16.xpose.msra.mxu0 %v2306
    %4865 = vmatprep.subr.bf16.mxu0 %v2311
    %4866 = vmatpush1.bf16.xpose.msra.mxu0 %v2310
    %4867 = vmatprep.subr.bf16.mxu0 %v2315
    %4868 = vmatpush1.bf16.xpose.msra.mxu0 %v2314
    %4869 = vmatprep.subr.bf16.mxu0 %v2319
    %4870 = vmatpush1.bf16.xpose.msra.mxu0 %v2318
    %4871 = vmatprep.subr.bf16.mxu0 %v2323
    %4872 = vmatpush1.bf16.xpose.msra.mxu0 %v2322
    %4873 = vmatprep.subr.bf16.mxu0 %v2327
    %4874 = vmatpush1.bf16.xpose.msra.mxu0 %v2326
    %4875 = vmatprep.subr.bf16.mxu0 %v2331
    %4876 = vmatpush1.bf16.xpose.msra.mxu0 %v2330
    %4877 = vmatprep.subr.bf16.mxu0 %v2335
    %4878 = vmatpush1.bf16.xpose.msra.mxu0 %v2334
    %4879 = vmatprep.subr.bf16.mxu0 %v2339
    %4880 = vmatpush1.bf16.xpose.msra.mxu0 %v2338
    %4881 = vmatprep.subr.bf16.mxu0 %v2343
    %4882 = vmatpush1.bf16.xpose.msra.mxu0 %v2342
    %4883 = vmatprep.mubr.bf16.mxu0 %v683
    %4884 = vmatmul.mubr.bf16.gmra.mrb[0].mxu0 %v682
    %v4885 = vpop.f32.mrb[0].mxu0
    %v4886 = vadd.f32 %v4693, %v4885
    %v4887 = vpop.f32.mrb[0].mxu0
    %v4888 = vadd.f32 %v4695, %v4887
    %v4889 = vpop.f32.mrb[0].mxu0
    %v4890 = vadd.f32 %v4697, %v4889
    %v4891 = vpop.f32.mrb[0].mxu0
    %v4892 = vadd.f32 %v4699, %v4891
    %4893 = vmatprep.mubr.bf16.mxu0 %v687
    %4894 = vmatmul.mubr.bf16.gmra.mrb[0].mxu0 %v686
    %v4895 = vpop.f32.mrb[0].mxu0
    %v4896 = vadd.f32 %v4703, %v4895
    %v4897 = vpop.f32.mrb[0].mxu0
    %v4898 = vadd.f32 %v4705, %v4897
    %v4899 = vpop.f32.mrb[0].mxu0
    %v4900 = vadd.f32 %v4707, %v4899
    %v4901 = vpop.f32.mrb[0].mxu0
    %v4902 = vadd.f32 %v4709, %v4901
    %4903 = vmatprep.mubr.bf16.mxu0 %v691
    %4904 = vmatmul.mubr.bf16.gmra.mrb[0].mxu0 %v690
    %v4905 = vpop.f32.mrb[0].mxu0
    %v4906 = vadd.f32 %v4713, %v4905
    %v4907 = vpop.f32.mrb[0].mxu0
    %v4908 = vadd.f32 %v4715, %v4907
    %v4909 = vpop.f32.mrb[0].mxu0
    %v4910 = vadd.f32 %v4717, %v4909
    %v4911 = vpop.f32.mrb[0].mxu0
    %v4912 = vadd.f32 %v4719, %v4911
    %4913 = vmatprep.mubr.bf16.mxu0 %v695
    %4914 = vmatmul.mubr.bf16.gmra.mrb[0].mxu0 %v694
    %v4915 = vpop.f32.mrb[0].mxu0
    %v4916 = vadd.f32 %v4723, %v4915
    %v4917 = vpop.f32.mrb[0].mxu0
    %v4918 = vadd.f32 %v4725, %v4917
    %v4919 = vpop.f32.mrb[0].mxu0
    %v4920 = vadd.f32 %v4727, %v4919
    %v4921 = vpop.f32.mrb[0].mxu0
    %v4922 = vadd.f32 %v4729, %v4921
    %4923 = vmatprep.mubr.bf16.mxu0 %v699
    %4924 = vmatmul.mubr.bf16.gmra.mrb[0].mxu0 %v698
    %v4925 = vpop.f32.mrb[0].mxu0
    %v4926 = vadd.f32 %v4733, %v4925
    %v4927 = vpop.f32.mrb[0].mxu0
    %v4928 = vadd.f32 %v4735, %v4927
    %v4929 = vpop.f32.mrb[0].mxu0
    %v4930 = vadd.f32 %v4737, %v4929
    %v4931 = vpop.f32.mrb[0].mxu0
    %v4932 = vadd.f32 %v4739, %v4931
    %4933 = vmatprep.mubr.bf16.mxu0 %v703
    %4934 = vmatmul.mubr.bf16.gmra.mrb[0].mxu0 %v702
    %v4935 = vpop.f32.mrb[0].mxu0
    %v4936 = vadd.f32 %v4743, %v4935
    %v4937 = vpop.f32.mrb[0].mxu0
    %v4938 = vadd.f32 %v4745, %v4937
    %v4939 = vpop.f32.mrb[0].mxu0
    %v4940 = vadd.f32 %v4747, %v4939
    %v4941 = vpop.f32.mrb[0].mxu0
    %v4942 = vadd.f32 %v4749, %v4941
    %4943 = vmatprep.mubr.bf16.mxu0 %v707
    %4944 = vmatmul.mubr.bf16.gmra.mrb[0].mxu0 %v706
    %v4945 = vpop.f32.mrb[0].mxu0
    %v4946 = vadd.f32 %v4753, %v4945
    %v4947 = vpop.f32.mrb[0].mxu0
    %v4948 = vadd.f32 %v4755, %v4947
    %v4949 = vpop.f32.mrb[0].mxu0
    %v4950 = vadd.f32 %v4757, %v4949
    %v4951 = vpop.f32.mrb[0].mxu0
    %v4952 = vadd.f32 %v4759, %v4951
    %4953 = vmatprep.mubr.bf16.mxu0 %v711
    %4954 = vmatmul.mubr.bf16.gmra.mrb[0].mxu0 %v710
    %v4955 = vpop.f32.mrb[0].mxu0
    %v4956 = vadd.f32 %v4763, %v4955
    %v4957 = vpop.f32.mrb[0].mxu0
    %v4958 = vadd.f32 %v4765, %v4957
    %v4959 = vpop.f32.mrb[0].mxu0
    %v4960 = vadd.f32 %v4767, %v4959
    %v4961 = vpop.f32.mrb[0].mxu0
    %v4962 = vadd.f32 %v4769, %v4961
    %4963 = vmatprep.mubr.bf16.mxu0 %v715
    %4964 = vmatmul.mubr.bf16.gmra.mrb[0].mxu0 %v714
    %v4965 = vpop.f32.mrb[0].mxu0
    %v4966 = vadd.f32 %v4773, %v4965
    %v4967 = vpop.f32.mrb[0].mxu0
    %v4968 = vadd.f32 %v4775, %v4967
    %v4969 = vpop.f32.mrb[0].mxu0
    %v4970 = vadd.f32 %v4777, %v4969
    %v4971 = vpop.f32.mrb[0].mxu0
    %v4972 = vadd.f32 %v4779, %v4971
    %4973 = vmatprep.mubr.bf16.mxu0 %v719
    %4974 = vmatmul.mubr.bf16.gmra.mrb[0].mxu0 %v718
    %v4975 = vpop.f32.mrb[0].mxu0
    %v4976 = vadd.f32 %v4783, %v4975
    %v4977 = vpop.f32.mrb[0].mxu0
    %v4978 = vadd.f32 %v4785, %v4977
    %v4979 = vpop.f32.mrb[0].mxu0
    %v4980 = vadd.f32 %v4787, %v4979
    %v4981 = vpop.f32.mrb[0].mxu0
    %v4982 = vadd.f32 %v4789, %v4981
    %4983 = vmatprep.mubr.bf16.mxu0 %v723
    %4984 = vmatmul.mubr.bf16.gmra.mrb[0].mxu0 %v722
    %v4985 = vpop.f32.mrb[0].mxu0
    %v4986 = vadd.f32 %v4793, %v4985
    %v4987 = vpop.f32.mrb[0].mxu0
    %v4988 = vadd.f32 %v4795, %v4987
    %v4989 = vpop.f32.mrb[0].mxu0
    %v4990 = vadd.f32 %v4797, %v4989
    %v4991 = vpop.f32.mrb[0].mxu0
    %v4992 = vadd.f32 %v4799, %v4991
    %4993 = vmatprep.mubr.bf16.mxu0 %v727
    %4994 = vmatmul.mubr.bf16.gmra.mrb[0].mxu0 %v726
    %v4995 = vpop.f32.mrb[0].mxu0
    %v4996 = vadd.f32 %v4803, %v4995
    %v4997 = vpop.f32.mrb[0].mxu0
    %v4998 = vadd.f32 %v4805, %v4997
    %v4999 = vpop.f32.mrb[0].mxu0
    %v5000 = vadd.f32 %v4807, %v4999
    %v5001 = vpop.f32.mrb[0].mxu0
    %v5002 = vadd.f32 %v4809, %v5001
    %5003 = vmatprep.mubr.bf16.mxu0 %v731
    %5004 = vmatmul.mubr.bf16.gmra.mrb[0].mxu0 %v730
    %v5005 = vpop.f32.mrb[0].mxu0
    %v5006 = vadd.f32 %v4813, %v5005
    %v5007 = vpop.f32.mrb[0].mxu0
    %v5008 = vadd.f32 %v4815, %v5007
    %v5009 = vpop.f32.mrb[0].mxu0
    %v5010 = vadd.f32 %v4817, %v5009
    %v5011 = vpop.f32.mrb[0].mxu0
    %v5012 = vadd.f32 %v4819, %v5011
    %5013 = vmatprep.mubr.bf16.mxu0 %v735
    %5014 = vmatmul.mubr.bf16.gmra.mrb[0].mxu0 %v734
    %v5015 = vpop.f32.mrb[0].mxu0
    %v5016 = vadd.f32 %v4823, %v5015
    %v5017 = vpop.f32.mrb[0].mxu0
    %v5018 = vadd.f32 %v4825, %v5017
    %v5019 = vpop.f32.mrb[0].mxu0
    %v5020 = vadd.f32 %v4827, %v5019
    %v5021 = vpop.f32.mrb[0].mxu0
    %v5022 = vadd.f32 %v4829, %v5021
    %5023 = vmatprep.mubr.bf16.mxu0 %v739
    %5024 = vmatmul.mubr.bf16.gmra.mrb[0].mxu0 %v738
    %v5025 = vpop.f32.mrb[0].mxu0
    %v5026 = vadd.f32 %v4833, %v5025
    %v5027 = vpop.f32.mrb[0].mxu0
    %v5028 = vadd.f32 %v4835, %v5027
    %v5029 = vpop.f32.mrb[0].mxu0
    %v5030 = vadd.f32 %v4837, %v5029
    %v5031 = vpop.f32.mrb[0].mxu0
    %v5032 = vadd.f32 %v4839, %v5031
    %5033 = vmatprep.mubr.bf16.mxu0 %v743
    %5034 = vmatmul.mubr.bf16.gmra.mrb[0].mxu0 %v742
    %v5035 = vpop.f32.mrb[0].mxu0
    %v5036 = vadd.f32 %v4843, %v5035
    %v5037 = vpop.f32.mrb[0].mxu0
    %v5038 = vadd.f32 %v4845, %v5037
    %v5039 = vpop.f32.mrb[0].mxu0
    %v5040 = vadd.f32 %v4847, %v5039
    %v5041 = vpop.f32.mrb[0].mxu0
    %v5042 = vadd.f32 %v4849, %v5041
    %5043 = vdwg.mxu0
    %v5044 = vpack.c.bf16 %v2960, %v2956
    %v5045 = vpack.c.bf16 %v2962, %v2958
    %v5046 = vpack.c.bf16 %v3346, %v3342
    %v5047 = vpack.c.bf16 %v3348, %v3344
    %v5048 = vpack.c.bf16 %v3732, %v3728
    %v5049 = vpack.c.bf16 %v3734, %v3730
    %v5050 = vpack.c.bf16 %v4118, %v4114
    %v5051 = vpack.c.bf16 %v4120, %v4116
    %v5052 = vpack.c.bf16 %v4504, %v4500
    %v5053 = vpack.c.bf16 %v4506, %v4502
    %v5054 = vpack.c.bf16 %v4890, %v4886
    %v5055 = vpack.c.bf16 %v4892, %v4888
    %v5056 = vpack.c.bf16 %v2970, %v2966
    %v5057 = vpack.c.bf16 %v2972, %v2968
    %v5058 = vpack.c.bf16 %v3356, %v3352
    %v5059 = vpack.c.bf16 %v3358, %v3354
    %v5060 = vpack.c.bf16 %v3742, %v3738
    %v5061 = vpack.c.bf16 %v3744, %v3740
    %v5062 = vpack.c.bf16 %v4128, %v4124
    %v5063 = vpack.c.bf16 %v4130, %v4126
    %v5064 = vpack.c.bf16 %v4514, %v4510
    %v5065 = vpack.c.bf16 %v4516, %v4512
    %v5066 = vpack.c.bf16 %v4900, %v4896
    %v5067 = vpack.c.bf16 %v4902, %v4898
    %v5068 = vpack.c.bf16 %v2980, %v2976
    %v5069 = vpack.c.bf16 %v2982, %v2978
    %v5070 = vpack.c.bf16 %v3366, %v3362
    %v5071 = vpack.c.bf16 %v3368, %v3364
    %v5072 = vpack.c.bf16 %v3752, %v3748
    %v5073 = vpack.c.bf16 %v3754, %v3750
    %v5074 = vpack.c.bf16 %v4138, %v4134
    %v5075 = vpack.c.bf16 %v4140, %v4136
    %v5076 = vpack.c.bf16 %v4524, %v4520
    %v5077 = vpack.c.bf16 %v4526, %v4522
    %v5078 = vpack.c.bf16 %v4910, %v4906
    %v5079 = vpack.c.bf16 %v4912, %v4908
    %v5080 = vpack.c.bf16 %v2990, %v2986
    %v5081 = vpack.c.bf16 %v2992, %v2988
    %v5082 = vpack.c.bf16 %v3376, %v3372
    %v5083 = vpack.c.bf16 %v3378, %v3374
    %v5084 = vpack.c.bf16 %v3762, %v3758
    %v5085 = vpack.c.bf16 %v3764, %v3760
    %v5086 = vpack.c.bf16 %v4148, %v4144
    %v5087 = vpack.c.bf16 %v4150, %v4146
    %v5088 = vpack.c.bf16 %v4534, %v4530
    %v5089 = vpack.c.bf16 %v4536, %v4532
    %v5090 = vpack.c.bf16 %v4920, %v4916
    %v5091 = vpack.c.bf16 %v4922, %v4918
    %v5092 = vpack.c.bf16 %v3000, %v2996
    %v5093 = vpack.c.bf16 %v3002, %v2998
    %v5094 = vpack.c.bf16 %v3386, %v3382
    %v5095 = vpack.c.bf16 %v3388, %v3384
    %v5096 = vpack.c.bf16 %v3772, %v3768
    %v5097 = vpack.c.bf16 %v3774, %v3770
    %v5098 = vpack.c.bf16 %v4158, %v4154
    %v5099 = vpack.c.bf16 %v4160, %v4156
    %v5100 = vpack.c.bf16 %v4544, %v4540
    %v5101 = vpack.c.bf16 %v4546, %v4542
    %v5102 = vpack.c.bf16 %v4930, %v4926
    %v5103 = vpack.c.bf16 %v4932, %v4928
    %v5104 = vpack.c.bf16 %v3010, %v3006
    %v5105 = vpack.c.bf16 %v3012, %v3008
    %v5106 = vpack.c.bf16 %v3396, %v3392
    %v5107 = vpack.c.bf16 %v3398, %v3394
    %v5108 = vpack.c.bf16 %v3782, %v3778
    %v5109 = vpack.c.bf16 %v3784, %v3780
    %v5110 = vpack.c.bf16 %v4168, %v4164
    %v5111 = vpack.c.bf16 %v4170, %v4166
    %v5112 = vpack.c.bf16 %v4554, %v4550
    %v5113 = vpack.c.bf16 %v4556, %v4552
    %v5114 = vpack.c.bf16 %v4940, %v4936
    %v5115 = vpack.c.bf16 %v4942, %v4938
    %v5116 = vpack.c.bf16 %v3020, %v3016
    %v5117 = vpack.c.bf16 %v3022, %v3018
    %v5118 = vpack.c.bf16 %v3406, %v3402
    %v5119 = vpack.c.bf16 %v3408, %v3404
    %v5120 = vpack.c.bf16 %v3792, %v3788
    %v5121 = vpack.c.bf16 %v3794, %v3790
    %v5122 = vpack.c.bf16 %v4178, %v4174
    %v5123 = vpack.c.bf16 %v4180, %v4176
    %v5124 = vpack.c.bf16 %v4564, %v4560
    %v5125 = vpack.c.bf16 %v4566, %v4562
    %v5126 = vpack.c.bf16 %v4950, %v4946
    %v5127 = vpack.c.bf16 %v4952, %v4948
    %v5128 = vpack.c.bf16 %v3030, %v3026
    %v5129 = vpack.c.bf16 %v3032, %v3028
    %v5130 = vpack.c.bf16 %v3416, %v3412
    %v5131 = vpack.c.bf16 %v3418, %v3414
    %v5132 = vpack.c.bf16 %v3802, %v3798
    %v5133 = vpack.c.bf16 %v3804, %v3800
    %v5134 = vpack.c.bf16 %v4188, %v4184
    %v5135 = vpack.c.bf16 %v4190, %v4186
    %v5136 = vpack.c.bf16 %v4574, %v4570
    %v5137 = vpack.c.bf16 %v4576, %v4572
    %v5138 = vpack.c.bf16 %v4960, %v4956
    %v5139 = vpack.c.bf16 %v4962, %v4958
    %v5140 = vpack.c.bf16 %v3040, %v3036
    %v5141 = vpack.c.bf16 %v3042, %v3038
    %v5142 = vpack.c.bf16 %v3426, %v3422
    %v5143 = vpack.c.bf16 %v3428, %v3424
    %v5144 = vpack.c.bf16 %v3812, %v3808
    %v5145 = vpack.c.bf16 %v3814, %v3810
    %v5146 = vpack.c.bf16 %v4198, %v4194
    %v5147 = vpack.c.bf16 %v4200, %v4196
    %v5148 = vpack.c.bf16 %v4584, %v4580
    %v5149 = vpack.c.bf16 %v4586, %v4582
    %v5150 = vpack.c.bf16 %v4970, %v4966
    %v5151 = vpack.c.bf16 %v4972, %v4968
    %v5152 = vpack.c.bf16 %v3050, %v3046
    %v5153 = vpack.c.bf16 %v3052, %v3048
    %v5154 = vpack.c.bf16 %v3436, %v3432
    %v5155 = vpack.c.bf16 %v3438, %v3434
    %v5156 = vpack.c.bf16 %v3822, %v3818
    %v5157 = vpack.c.bf16 %v3824, %v3820
    %v5158 = vpack.c.bf16 %v4208, %v4204
    %v5159 = vpack.c.bf16 %v4210, %v4206
    %v5160 = vpack.c.bf16 %v4594, %v4590
    %v5161 = vpack.c.bf16 %v4596, %v4592
    %v5162 = vpack.c.bf16 %v4980, %v4976
    %v5163 = vpack.c.bf16 %v4982, %v4978
    %v5164 = vpack.c.bf16 %v3060, %v3056
    %v5165 = vpack.c.bf16 %v3062, %v3058
    %v5166 = vpack.c.bf16 %v3446, %v3442
    %v5167 = vpack.c.bf16 %v3448, %v3444
    %v5168 = vpack.c.bf16 %v3832, %v3828
    %v5169 = vpack.c.bf16 %v3834, %v3830
    %v5170 = vpack.c.bf16 %v4218, %v4214
    %v5171 = vpack.c.bf16 %v4220, %v4216
    %v5172 = vpack.c.bf16 %v4604, %v4600
    %v5173 = vpack.c.bf16 %v4606, %v4602
    %v5174 = vpack.c.bf16 %v4990, %v4986
    %v5175 = vpack.c.bf16 %v4992, %v4988
    %v5176 = vpack.c.bf16 %v3070, %v3066
    %v5177 = vpack.c.bf16 %v3072, %v3068
    %v5178 = vpack.c.bf16 %v3456, %v3452
    %v5179 = vpack.c.bf16 %v3458, %v3454
    %v5180 = vpack.c.bf16 %v3842, %v3838
    %v5181 = vpack.c.bf16 %v3844, %v3840
    %v5182 = vpack.c.bf16 %v4228, %v4224
    %v5183 = vpack.c.bf16 %v4230, %v4226
    %v5184 = vpack.c.bf16 %v4614, %v4610
    %v5185 = vpack.c.bf16 %v4616, %v4612
    %v5186 = vpack.c.bf16 %v5000, %v4996
    %v5187 = vpack.c.bf16 %v5002, %v4998
    %v5188 = vpack.c.bf16 %v3080, %v3076
    %v5189 = vpack.c.bf16 %v3082, %v3078
    %v5190 = vpack.c.bf16 %v3466, %v3462
    %v5191 = vpack.c.bf16 %v3468, %v3464
    %v5192 = vpack.c.bf16 %v3852, %v3848
    %v5193 = vpack.c.bf16 %v3854, %v3850
    %v5194 = vpack.c.bf16 %v4238, %v4234
    %v5195 = vpack.c.bf16 %v4240, %v4236
    %v5196 = vpack.c.bf16 %v4624, %v4620
    %v5197 = vpack.c.bf16 %v4626, %v4622
    %v5198 = vpack.c.bf16 %v5010, %v5006
    %v5199 = vpack.c.bf16 %v5012, %v5008
    %v5200 = vpack.c.bf16 %v3090, %v3086
    %v5201 = vpack.c.bf16 %v3092, %v3088
    %v5202 = vpack.c.bf16 %v3476, %v3472
    %v5203 = vpack.c.bf16 %v3478, %v3474
    %v5204 = vpack.c.bf16 %v3862, %v3858
    %v5205 = vpack.c.bf16 %v3864, %v3860
    %v5206 = vpack.c.bf16 %v4248, %v4244
    %v5207 = vpack.c.bf16 %v4250, %v4246
    %v5208 = vpack.c.bf16 %v4634, %v4630
    %v5209 = vpack.c.bf16 %v4636, %v4632
    %v5210 = vpack.c.bf16 %v5020, %v5016
    %v5211 = vpack.c.bf16 %v5022, %v5018
    %v5212 = vpack.c.bf16 %v3100, %v3096
    %v5213 = vpack.c.bf16 %v3102, %v3098
    %v5214 = vpack.c.bf16 %v3486, %v3482
    %v5215 = vpack.c.bf16 %v3488, %v3484
    %v5216 = vpack.c.bf16 %v3872, %v3868
    %v5217 = vpack.c.bf16 %v3874, %v3870
    %v5218 = vpack.c.bf16 %v4258, %v4254
    %v5219 = vpack.c.bf16 %v4260, %v4256
    %v5220 = vpack.c.bf16 %v4644, %v4640
    %v5221 = vpack.c.bf16 %v4646, %v4642
    %v5222 = vpack.c.bf16 %v5030, %v5026
    %v5223 = vpack.c.bf16 %v5032, %v5028
    %v5224 = vpack.c.bf16 %v3110, %v3106
    %v5225 = vpack.c.bf16 %v3112, %v3108
    %v5226 = vpack.c.bf16 %v3496, %v3492
    %v5227 = vpack.c.bf16 %v3498, %v3494
    %v5228 = vpack.c.bf16 %v3882, %v3878
    %v5229 = vpack.c.bf16 %v3884, %v3880
    %v5230 = vpack.c.bf16 %v4268, %v4264
    %v5231 = vpack.c.bf16 %v4270, %v4266
    %v5232 = vpack.c.bf16 %v4654, %v4650
    %v5233 = vpack.c.bf16 %v4656, %v4652
    %v5234 = vpack.c.bf16 %v5040, %v5036
    %v5235 = vpack.c.bf16 %v5042, %v5038
    %v5428 = vunpack.c.l.b16 %v5044
    %v5429 = vunpack.c.l.b16 %v5045
    %v5430 = vunpack.c.l.b16 %v5046
    %v5431 = vunpack.c.l.b16 %v5047
    %v5432 = vunpack.c.l.b16 %v5048
    %v5433 = vunpack.c.l.b16 %v5049
    %v5434 = vunpack.c.l.b16 %v5050
    %v5435 = vunpack.c.l.b16 %v5051
    %v5436 = vunpack.c.l.b16 %v5052
    %v5437 = vunpack.c.l.b16 %v5053
    %v5438 = vunpack.c.l.b16 %v5054
    %v5439 = vunpack.c.l.b16 %v5055
    %v5440 = vunpack.c.h.b16 %v5044
    %v5441 = vunpack.c.h.b16 %v5045
    %v5442 = vunpack.c.h.b16 %v5046
    %v5443 = vunpack.c.h.b16 %v5047
    %v5444 = vunpack.c.h.b16 %v5048
    %v5445 = vunpack.c.h.b16 %v5049
    %v5446 = vunpack.c.h.b16 %v5050
    %v5447 = vunpack.c.h.b16 %v5051
    %v5448 = vunpack.c.h.b16 %v5052
    %v5449 = vunpack.c.h.b16 %v5053
    %v5450 = vunpack.c.h.b16 %v5054
    %v5451 = vunpack.c.h.b16 %v5055
    %v5452 = vunpack.c.l.b16 %v5056
    %v5453 = vunpack.c.l.b16 %v5057
    %v5454 = vunpack.c.l.b16 %v5058
    %v5455 = vunpack.c.l.b16 %v5059
    %v5456 = vunpack.c.l.b16 %v5060
    %v5457 = vunpack.c.l.b16 %v5061
    %v5458 = vunpack.c.l.b16 %v5062
    %v5459 = vunpack.c.l.b16 %v5063
    %v5460 = vunpack.c.l.b16 %v5064
    %v5461 = vunpack.c.l.b16 %v5065
    %v5462 = vunpack.c.l.b16 %v5066
    %v5463 = vunpack.c.l.b16 %v5067
    %v5464 = vunpack.c.h.b16 %v5056
    %v5465 = vunpack.c.h.b16 %v5057
    %v5466 = vunpack.c.h.b16 %v5058
    %v5467 = vunpack.c.h.b16 %v5059
    %v5468 = vunpack.c.h.b16 %v5060
    %v5469 = vunpack.c.h.b16 %v5061
    %v5470 = vunpack.c.h.b16 %v5062
    %v5471 = vunpack.c.h.b16 %v5063
    %v5472 = vunpack.c.h.b16 %v5064
    %v5473 = vunpack.c.h.b16 %v5065
    %v5474 = vunpack.c.h.b16 %v5066
    %v5475 = vunpack.c.h.b16 %v5067
    %v5476 = vunpack.c.l.b16 %v5068
    %v5477 = vunpack.c.l.b16 %v5069
    %v5478 = vunpack.c.l.b16 %v5070
    %v5479 = vunpack.c.l.b16 %v5071
    %v5480 = vunpack.c.l.b16 %v5072
    %v5481 = vunpack.c.l.b16 %v5073
    %v5482 = vunpack.c.l.b16 %v5074
    %v5483 = vunpack.c.l.b16 %v5075
    %v5484 = vunpack.c.l.b16 %v5076
    %v5485 = vunpack.c.l.b16 %v5077
    %v5486 = vunpack.c.l.b16 %v5078
    %v5487 = vunpack.c.l.b16 %v5079
    %v5488 = vunpack.c.h.b16 %v5068
    %v5489 = vunpack.c.h.b16 %v5069
    %v5490 = vunpack.c.h.b16 %v5070
    %v5491 = vunpack.c.h.b16 %v5071
    %v5492 = vunpack.c.h.b16 %v5072
    %v5493 = vunpack.c.h.b16 %v5073
    %v5494 = vunpack.c.h.b16 %v5074
    %v5495 = vunpack.c.h.b16 %v5075
    %v5496 = vunpack.c.h.b16 %v5076
    %v5497 = vunpack.c.h.b16 %v5077
    %v5498 = vunpack.c.h.b16 %v5078
    %v5499 = vunpack.c.h.b16 %v5079
    %v5500 = vunpack.c.l.b16 %v5080
    %v5501 = vunpack.c.l.b16 %v5081
    %v5502 = vunpack.c.l.b16 %v5082
    %v5503 = vunpack.c.l.b16 %v5083
    %v5504 = vunpack.c.l.b16 %v5084
    %v5505 = vunpack.c.l.b16 %v5085
    %v5506 = vunpack.c.l.b16 %v5086
    %v5507 = vunpack.c.l.b16 %v5087
    %v5508 = vunpack.c.l.b16 %v5088
    %v5509 = vunpack.c.l.b16 %v5089
    %v5510 = vunpack.c.l.b16 %v5090
    %v5511 = vunpack.c.l.b16 %v5091
    %v5512 = vunpack.c.h.b16 %v5080
    %v5513 = vunpack.c.h.b16 %v5081
    %v5514 = vunpack.c.h.b16 %v5082
    %v5515 = vunpack.c.h.b16 %v5083
    %v5516 = vunpack.c.h.b16 %v5084
    %v5517 = vunpack.c.h.b16 %v5085
    %v5518 = vunpack.c.h.b16 %v5086
    %v5519 = vunpack.c.h.b16 %v5087
    %v5520 = vunpack.c.h.b16 %v5088
    %v5521 = vunpack.c.h.b16 %v5089
    %v5522 = vunpack.c.h.b16 %v5090
    %v5523 = vunpack.c.h.b16 %v5091
    %v5524 = vunpack.c.l.b16 %v5092
    %v5525 = vunpack.c.l.b16 %v5093
    %v5526 = vunpack.c.l.b16 %v5094
    %v5527 = vunpack.c.l.b16 %v5095
    %v5528 = vunpack.c.l.b16 %v5096
    %v5529 = vunpack.c.l.b16 %v5097
    %v5530 = vunpack.c.l.b16 %v5098
    %v5531 = vunpack.c.l.b16 %v5099
    %v5532 = vunpack.c.l.b16 %v5100
    %v5533 = vunpack.c.l.b16 %v5101
    %v5534 = vunpack.c.l.b16 %v5102
    %v5535 = vunpack.c.l.b16 %v5103
    %v5536 = vunpack.c.h.b16 %v5092
    %v5537 = vunpack.c.h.b16 %v5093
    %v5538 = vunpack.c.h.b16 %v5094
    %v5539 = vunpack.c.h.b16 %v5095
    %v5540 = vunpack.c.h.b16 %v5096
    %v5541 = vunpack.c.h.b16 %v5097
    %v5542 = vunpack.c.h.b16 %v5098
    %v5543 = vunpack.c.h.b16 %v5099
    %v5544 = vunpack.c.h.b16 %v5100
    %v5545 = vunpack.c.h.b16 %v5101
    %v5546 = vunpack.c.h.b16 %v5102
    %v5547 = vunpack.c.h.b16 %v5103
    %v5548 = vunpack.c.l.b16 %v5104
    %v5549 = vunpack.c.l.b16 %v5105
    %v5550 = vunpack.c.l.b16 %v5106
    %v5551 = vunpack.c.l.b16 %v5107
    %v5552 = vunpack.c.l.b16 %v5108
    %v5553 = vunpack.c.l.b16 %v5109
    %v5554 = vunpack.c.l.b16 %v5110
    %v5555 = vunpack.c.l.b16 %v5111
    %v5556 = vunpack.c.l.b16 %v5112
    %v5557 = vunpack.c.l.b16 %v5113
    %v5558 = vunpack.c.l.b16 %v5114
    %v5559 = vunpack.c.l.b16 %v5115
    %v5560 = vunpack.c.h.b16 %v5104
    %v5561 = vunpack.c.h.b16 %v5105
    %v5562 = vunpack.c.h.b16 %v5106
    %v5563 = vunpack.c.h.b16 %v5107
    %v5564 = vunpack.c.h.b16 %v5108
    %v5565 = vunpack.c.h.b16 %v5109
    %v5566 = vunpack.c.h.b16 %v5110
    %v5567 = vunpack.c.h.b16 %v5111
    %v5568 = vunpack.c.h.b16 %v5112
    %v5569 = vunpack.c.h.b16 %v5113
    %v5570 = vunpack.c.h.b16 %v5114
    %v5571 = vunpack.c.h.b16 %v5115
    %v5572 = vunpack.c.l.b16 %v5116
    %v5573 = vunpack.c.l.b16 %v5117
    %v5574 = vunpack.c.l.b16 %v5118
    %v5575 = vunpack.c.l.b16 %v5119
    %v5576 = vunpack.c.l.b16 %v5120
    %v5577 = vunpack.c.l.b16 %v5121
    %v5578 = vunpack.c.l.b16 %v5122
    %v5579 = vunpack.c.l.b16 %v5123
    %v5580 = vunpack.c.l.b16 %v5124
    %v5581 = vunpack.c.l.b16 %v5125
    %v5582 = vunpack.c.l.b16 %v5126
    %v5583 = vunpack.c.l.b16 %v5127
    %v5584 = vunpack.c.h.b16 %v5116
    %v5585 = vunpack.c.h.b16 %v5117
    %v5586 = vunpack.c.h.b16 %v5118
    %v5587 = vunpack.c.h.b16 %v5119
    %v5588 = vunpack.c.h.b16 %v5120
    %v5589 = vunpack.c.h.b16 %v5121
    %v5590 = vunpack.c.h.b16 %v5122
    %v5591 = vunpack.c.h.b16 %v5123
    %v5592 = vunpack.c.h.b16 %v5124
    %v5593 = vunpack.c.h.b16 %v5125
    %v5594 = vunpack.c.h.b16 %v5126
    %v5595 = vunpack.c.h.b16 %v5127
    %v5596 = vunpack.c.l.b16 %v5128
    %v5597 = vunpack.c.l.b16 %v5129
    %v5598 = vunpack.c.l.b16 %v5130
    %v5599 = vunpack.c.l.b16 %v5131
    %v5600 = vunpack.c.l.b16 %v5132
    %v5601 = vunpack.c.l.b16 %v5133
    %v5602 = vunpack.c.l.b16 %v5134
    %v5603 = vunpack.c.l.b16 %v5135
    %v5604 = vunpack.c.l.b16 %v5136
    %v5605 = vunpack.c.l.b16 %v5137
    %v5606 = vunpack.c.l.b16 %v5138
    %v5607 = vunpack.c.l.b16 %v5139
    %v5608 = vunpack.c.h.b16 %v5128
    %v5609 = vunpack.c.h.b16 %v5129
    %v5610 = vunpack.c.h.b16 %v5130
    %v5611 = vunpack.c.h.b16 %v5131
    %v5612 = vunpack.c.h.b16 %v5132
    %v5613 = vunpack.c.h.b16 %v5133
    %v5614 = vunpack.c.h.b16 %v5134
    %v5615 = vunpack.c.h.b16 %v5135
    %v5616 = vunpack.c.h.b16 %v5136
    %v5617 = vunpack.c.h.b16 %v5137
    %v5618 = vunpack.c.h.b16 %v5138
    %v5619 = vunpack.c.h.b16 %v5139
    %v5620 = vunpack.c.l.b16 %v5140
    %v5621 = vunpack.c.l.b16 %v5141
    %v5622 = vunpack.c.l.b16 %v5142
    %v5623 = vunpack.c.l.b16 %v5143
    %v5624 = vunpack.c.l.b16 %v5144
    %v5625 = vunpack.c.l.b16 %v5145
    %v5626 = vunpack.c.l.b16 %v5146
    %v5627 = vunpack.c.l.b16 %v5147
    %v5628 = vunpack.c.l.b16 %v5148
    %v5629 = vunpack.c.l.b16 %v5149
    %v5630 = vunpack.c.l.b16 %v5150
    %v5631 = vunpack.c.l.b16 %v5151
    %v5632 = vunpack.c.h.b16 %v5140
    %v5633 = vunpack.c.h.b16 %v5141
    %v5634 = vunpack.c.h.b16 %v5142
    %v5635 = vunpack.c.h.b16 %v5143
    %v5636 = vunpack.c.h.b16 %v5144
    %v5637 = vunpack.c.h.b16 %v5145
    %v5638 = vunpack.c.h.b16 %v5146
    %v5639 = vunpack.c.h.b16 %v5147
    %v5640 = vunpack.c.h.b16 %v5148
    %v5641 = vunpack.c.h.b16 %v5149
    %v5642 = vunpack.c.h.b16 %v5150
    %v5643 = vunpack.c.h.b16 %v5151
    %v5644 = vunpack.c.l.b16 %v5152
    %v5645 = vunpack.c.l.b16 %v5153
    %v5646 = vunpack.c.l.b16 %v5154
    %v5647 = vunpack.c.l.b16 %v5155
    %v5648 = vunpack.c.l.b16 %v5156
    %v5649 = vunpack.c.l.b16 %v5157
    %v5650 = vunpack.c.l.b16 %v5158
    %v5651 = vunpack.c.l.b16 %v5159
    %v5652 = vunpack.c.l.b16 %v5160
    %v5653 = vunpack.c.l.b16 %v5161
    %v5654 = vunpack.c.l.b16 %v5162
    %v5655 = vunpack.c.l.b16 %v5163
    %v5656 = vunpack.c.h.b16 %v5152
    %v5657 = vunpack.c.h.b16 %v5153
    %v5658 = vunpack.c.h.b16 %v5154
    %v5659 = vunpack.c.h.b16 %v5155
    %v5660 = vunpack.c.h.b16 %v5156
    %v5661 = vunpack.c.h.b16 %v5157
    %v5662 = vunpack.c.h.b16 %v5158
    %v5663 = vunpack.c.h.b16 %v5159
    %v5664 = vunpack.c.h.b16 %v5160
    %v5665 = vunpack.c.h.b16 %v5161
    %v5666 = vunpack.c.h.b16 %v5162
    %v5667 = vunpack.c.h.b16 %v5163
    %v5668 = vunpack.c.l.b16 %v5164
    %v5669 = vunpack.c.l.b16 %v5165
    %v5670 = vunpack.c.l.b16 %v5166
    %v5671 = vunpack.c.l.b16 %v5167
    %v5672 = vunpack.c.l.b16 %v5168
    %v5673 = vunpack.c.l.b16 %v5169
    %v5674 = vunpack.c.l.b16 %v5170
    %v5675 = vunpack.c.l.b16 %v5171
    %v5676 = vunpack.c.l.b16 %v5172
    %v5677 = vunpack.c.l.b16 %v5173
    %v5678 = vunpack.c.l.b16 %v5174
    %v5679 = vunpack.c.l.b16 %v5175
    %v5680 = vunpack.c.h.b16 %v5164
    %v5681 = vunpack.c.h.b16 %v5165
    %v5682 = vunpack.c.h.b16 %v5166
    %v5683 = vunpack.c.h.b16 %v5167
    %v5684 = vunpack.c.h.b16 %v5168
    %v5685 = vunpack.c.h.b16 %v5169
    %v5686 = vunpack.c.h.b16 %v5170
    %v5687 = vunpack.c.h.b16 %v5171
    %v5688 = vunpack.c.h.b16 %v5172
    %v5689 = vunpack.c.h.b16 %v5173
    %v5690 = vunpack.c.h.b16 %v5174
    %v5691 = vunpack.c.h.b16 %v5175
    %v5692 = vunpack.c.l.b16 %v5176
    %v5693 = vunpack.c.l.b16 %v5177
    %v5694 = vunpack.c.l.b16 %v5178
    %v5695 = vunpack.c.l.b16 %v5179
    %v5696 = vunpack.c.l.b16 %v5180
    %v5697 = vunpack.c.l.b16 %v5181
    %v5698 = vunpack.c.l.b16 %v5182
    %v5699 = vunpack.c.l.b16 %v5183
    %v5700 = vunpack.c.l.b16 %v5184
    %v5701 = vunpack.c.l.b16 %v5185
    %v5702 = vunpack.c.l.b16 %v5186
    %v5703 = vunpack.c.l.b16 %v5187
    %v5704 = vunpack.c.h.b16 %v5176
    %v5705 = vunpack.c.h.b16 %v5177
    %v5706 = vunpack.c.h.b16 %v5178
    %v5707 = vunpack.c.h.b16 %v5179
    %v5708 = vunpack.c.h.b16 %v5180
    %v5709 = vunpack.c.h.b16 %v5181
    %v5710 = vunpack.c.h.b16 %v5182
    %v5711 = vunpack.c.h.b16 %v5183
    %v5712 = vunpack.c.h.b16 %v5184
    %v5713 = vunpack.c.h.b16 %v5185
    %v5714 = vunpack.c.h.b16 %v5186
    %v5715 = vunpack.c.h.b16 %v5187
    %v5716 = vunpack.c.l.b16 %v5188
    %v5717 = vunpack.c.l.b16 %v5189
    %v5718 = vunpack.c.l.b16 %v5190
    %v5719 = vunpack.c.l.b16 %v5191
    %v5720 = vunpack.c.l.b16 %v5192
    %v5721 = vunpack.c.l.b16 %v5193
    %v5722 = vunpack.c.l.b16 %v5194
    %v5723 = vunpack.c.l.b16 %v5195
    %v5724 = vunpack.c.l.b16 %v5196
    %v5725 = vunpack.c.l.b16 %v5197
    %v5726 = vunpack.c.l.b16 %v5198
    %v5727 = vunpack.c.l.b16 %v5199
    %v5728 = vunpack.c.h.b16 %v5188
    %v5729 = vunpack.c.h.b16 %v5189
    %v5730 = vunpack.c.h.b16 %v5190
    %v5731 = vunpack.c.h.b16 %v5191
    %v5732 = vunpack.c.h.b16 %v5192
    %v5733 = vunpack.c.h.b16 %v5193
    %v5734 = vunpack.c.h.b16 %v5194
    %v5735 = vunpack.c.h.b16 %v5195
    %v5736 = vunpack.c.h.b16 %v5196
    %v5737 = vunpack.c.h.b16 %v5197
    %v5738 = vunpack.c.h.b16 %v5198
    %v5739 = vunpack.c.h.b16 %v5199
    %v5740 = vunpack.c.l.b16 %v5200
    %v5741 = vunpack.c.l.b16 %v5201
    %v5742 = vunpack.c.l.b16 %v5202
    %v5743 = vunpack.c.l.b16 %v5203
    %v5744 = vunpack.c.l.b16 %v5204
    %v5745 = vunpack.c.l.b16 %v5205
    %v5746 = vunpack.c.l.b16 %v5206
    %v5747 = vunpack.c.l.b16 %v5207
    %v5748 = vunpack.c.l.b16 %v5208
    %v5749 = vunpack.c.l.b16 %v5209
    %v5750 = vunpack.c.l.b16 %v5210
    %v5751 = vunpack.c.l.b16 %v5211
    %v5752 = vunpack.c.h.b16 %v5200
    %v5753 = vunpack.c.h.b16 %v5201
    %v5754 = vunpack.c.h.b16 %v5202
    %v5755 = vunpack.c.h.b16 %v5203
    %v5756 = vunpack.c.h.b16 %v5204
    %v5757 = vunpack.c.h.b16 %v5205
    %v5758 = vunpack.c.h.b16 %v5206
    %v5759 = vunpack.c.h.b16 %v5207
    %v5760 = vunpack.c.h.b16 %v5208
    %v5761 = vunpack.c.h.b16 %v5209
    %v5762 = vunpack.c.h.b16 %v5210
    %v5763 = vunpack.c.h.b16 %v5211
    %v5764 = vunpack.c.l.b16 %v5212
    %v5765 = vunpack.c.l.b16 %v5213
    %v5766 = vunpack.c.l.b16 %v5214
    %v5767 = vunpack.c.l.b16 %v5215
    %v5768 = vunpack.c.l.b16 %v5216
    %v5769 = vunpack.c.l.b16 %v5217
    %v5770 = vunpack.c.l.b16 %v5218
    %v5771 = vunpack.c.l.b16 %v5219
    %v5772 = vunpack.c.l.b16 %v5220
    %v5773 = vunpack.c.l.b16 %v5221
    %v5774 = vunpack.c.l.b16 %v5222
    %v5775 = vunpack.c.l.b16 %v5223
    %v5776 = vunpack.c.h.b16 %v5212
    %v5777 = vunpack.c.h.b16 %v5213
    %v5778 = vunpack.c.h.b16 %v5214
    %v5779 = vunpack.c.h.b16 %v5215
    %v5780 = vunpack.c.h.b16 %v5216
    %v5781 = vunpack.c.h.b16 %v5217
    %v5782 = vunpack.c.h.b16 %v5218
    %v5783 = vunpack.c.h.b16 %v5219
    %v5784 = vunpack.c.h.b16 %v5220
    %v5785 = vunpack.c.h.b16 %v5221
    %v5786 = vunpack.c.h.b16 %v5222
    %v5787 = vunpack.c.h.b16 %v5223
    %v5788 = vunpack.c.l.b16 %v5224
    %v5789 = vunpack.c.l.b16 %v5225
    %v5790 = vunpack.c.l.b16 %v5226
    %v5791 = vunpack.c.l.b16 %v5227
    %v5792 = vunpack.c.l.b16 %v5228
    %v5793 = vunpack.c.l.b16 %v5229
    %v5794 = vunpack.c.l.b16 %v5230
    %v5795 = vunpack.c.l.b16 %v5231
    %v5796 = vunpack.c.l.b16 %v5232
    %v5797 = vunpack.c.l.b16 %v5233
    %v5798 = vunpack.c.l.b16 %v5234
    %v5799 = vunpack.c.l.b16 %v5235
    %v5800 = vunpack.c.h.b16 %v5224
    %v5801 = vunpack.c.h.b16 %v5225
    %v5802 = vunpack.c.h.b16 %v5226
    %v5803 = vunpack.c.h.b16 %v5227
    %v5804 = vunpack.c.h.b16 %v5228
    %v5805 = vunpack.c.h.b16 %v5229
    %v5806 = vunpack.c.h.b16 %v5230
    %v5807 = vunpack.c.h.b16 %v5231
    %v5808 = vunpack.c.h.b16 %v5232
    %v5809 = vunpack.c.h.b16 %v5233
    %v5810 = vunpack.c.h.b16 %v5234
    %v5811 = vunpack.c.h.b16 %v5235
    %v5812 = vpack.c.b16 %v5429, %v5428
    %v5813 = vpack.c.b16 %v5431, %v5430
    %v5814 = vpack.c.b16 %v5433, %v5432
    %v5815 = vpack.c.b16 %v5435, %v5434
    %v5816 = vpack.c.b16 %v5437, %v5436
    %v5817 = vpack.c.b16 %v5439, %v5438
    %v5818 = vpack.c.b16 %v5441, %v5440
    %v5819 = vpack.c.b16 %v5443, %v5442
    %v5820 = vpack.c.b16 %v5445, %v5444
    %v5821 = vpack.c.b16 %v5447, %v5446
    %v5822 = vpack.c.b16 %v5449, %v5448
    %v5823 = vpack.c.b16 %v5451, %v5450
    %v5824 = vpack.c.b16 %v5453, %v5452
    %v5825 = vpack.c.b16 %v5455, %v5454
    %v5826 = vpack.c.b16 %v5457, %v5456
    %v5827 = vpack.c.b16 %v5459, %v5458
    %v5828 = vpack.c.b16 %v5461, %v5460
    %v5829 = vpack.c.b16 %v5463, %v5462
    %v5830 = vpack.c.b16 %v5465, %v5464
    %v5831 = vpack.c.b16 %v5467, %v5466
    %v5832 = vpack.c.b16 %v5469, %v5468
    %v5833 = vpack.c.b16 %v5471, %v5470
    %v5834 = vpack.c.b16 %v5473, %v5472
    %v5835 = vpack.c.b16 %v5475, %v5474
    %v5836 = vpack.c.b16 %v5477, %v5476
    %v5837 = vpack.c.b16 %v5479, %v5478
    %v5838 = vpack.c.b16 %v5481, %v5480
    %v5839 = vpack.c.b16 %v5483, %v5482
    %v5840 = vpack.c.b16 %v5485, %v5484
    %v5841 = vpack.c.b16 %v5487, %v5486
    %v5842 = vpack.c.b16 %v5489, %v5488
    %v5843 = vpack.c.b16 %v5491, %v5490
    %v5844 = vpack.c.b16 %v5493, %v5492
    %v5845 = vpack.c.b16 %v5495, %v5494
    %v5846 = vpack.c.b16 %v5497, %v5496
    %v5847 = vpack.c.b16 %v5499, %v5498
    %v5848 = vpack.c.b16 %v5501, %v5500
    %v5849 = vpack.c.b16 %v5503, %v5502
    %v5850 = vpack.c.b16 %v5505, %v5504
    %v5851 = vpack.c.b16 %v5507, %v5506
    %v5852 = vpack.c.b16 %v5509, %v5508
    %v5853 = vpack.c.b16 %v5511, %v5510
    %v5854 = vpack.c.b16 %v5513, %v5512
    %v5855 = vpack.c.b16 %v5515, %v5514
    %v5856 = vpack.c.b16 %v5517, %v5516
    %v5857 = vpack.c.b16 %v5519, %v5518
    %v5858 = vpack.c.b16 %v5521, %v5520
    %v5859 = vpack.c.b16 %v5523, %v5522
    %v5860 = vpack.c.b16 %v5525, %v5524
    %v5861 = vpack.c.b16 %v5527, %v5526
    %v5862 = vpack.c.b16 %v5529, %v5528
    %v5863 = vpack.c.b16 %v5531, %v5530
    %v5864 = vpack.c.b16 %v5533, %v5532
    %v5865 = vpack.c.b16 %v5535, %v5534
    %v5866 = vpack.c.b16 %v5537, %v5536
    %v5867 = vpack.c.b16 %v5539, %v5538
    %v5868 = vpack.c.b16 %v5541, %v5540
    %v5869 = vpack.c.b16 %v5543, %v5542
    %v5870 = vpack.c.b16 %v5545, %v5544
    %v5871 = vpack.c.b16 %v5547, %v5546
    %v5872 = vpack.c.b16 %v5549, %v5548
    %v5873 = vpack.c.b16 %v5551, %v5550
    %v5874 = vpack.c.b16 %v5553, %v5552
    %v5875 = vpack.c.b16 %v5555, %v5554
    %v5876 = vpack.c.b16 %v5557, %v5556
    %v5877 = vpack.c.b16 %v5559, %v5558
    %v5878 = vpack.c.b16 %v5561, %v5560
    %v5879 = vpack.c.b16 %v5563, %v5562
    %v5880 = vpack.c.b16 %v5565, %v5564
    %v5881 = vpack.c.b16 %v5567, %v5566
    %v5882 = vpack.c.b16 %v5569, %v5568
    %v5883 = vpack.c.b16 %v5571, %v5570
    %v5884 = vpack.c.b16 %v5573, %v5572
    %v5885 = vpack.c.b16 %v5575, %v5574
    %v5886 = vpack.c.b16 %v5577, %v5576
    %v5887 = vpack.c.b16 %v5579, %v5578
    %v5888 = vpack.c.b16 %v5581, %v5580
    %v5889 = vpack.c.b16 %v5583, %v5582
    %v5890 = vpack.c.b16 %v5585, %v5584
    %v5891 = vpack.c.b16 %v5587, %v5586
    %v5892 = vpack.c.b16 %v5589, %v5588
    %v5893 = vpack.c.b16 %v5591, %v5590
    %v5894 = vpack.c.b16 %v5593, %v5592
    %v5895 = vpack.c.b16 %v5595, %v5594
    %v5896 = vpack.c.b16 %v5597, %v5596
    %v5897 = vpack.c.b16 %v5599, %v5598
    %v5898 = vpack.c.b16 %v5601, %v5600
    %v5899 = vpack.c.b16 %v5603, %v5602
    %v5900 = vpack.c.b16 %v5605, %v5604
    %v5901 = vpack.c.b16 %v5607, %v5606
    %v5902 = vpack.c.b16 %v5609, %v5608
    %v5903 = vpack.c.b16 %v5611, %v5610
    %v5904 = vpack.c.b16 %v5613, %v5612
    %v5905 = vpack.c.b16 %v5615, %v5614
    %v5906 = vpack.c.b16 %v5617, %v5616
    %v5907 = vpack.c.b16 %v5619, %v5618
    %v5908 = vpack.c.b16 %v5621, %v5620
    %v5909 = vpack.c.b16 %v5623, %v5622
    %v5910 = vpack.c.b16 %v5625, %v5624
    %v5911 = vpack.c.b16 %v5627, %v5626
    %v5912 = vpack.c.b16 %v5629, %v5628
    %v5913 = vpack.c.b16 %v5631, %v5630
    %v5914 = vpack.c.b16 %v5633, %v5632
    %v5915 = vpack.c.b16 %v5635, %v5634
    %v5916 = vpack.c.b16 %v5637, %v5636
    %v5917 = vpack.c.b16 %v5639, %v5638
    %v5918 = vpack.c.b16 %v5641, %v5640
    %v5919 = vpack.c.b16 %v5643, %v5642
    %v5920 = vpack.c.b16 %v5645, %v5644
    %v5921 = vpack.c.b16 %v5647, %v5646
    %v5922 = vpack.c.b16 %v5649, %v5648
    %v5923 = vpack.c.b16 %v5651, %v5650
    %v5924 = vpack.c.b16 %v5653, %v5652
    %v5925 = vpack.c.b16 %v5655, %v5654
    %v5926 = vpack.c.b16 %v5657, %v5656
    %v5927 = vpack.c.b16 %v5659, %v5658
    %v5928 = vpack.c.b16 %v5661, %v5660
    %v5929 = vpack.c.b16 %v5663, %v5662
    %v5930 = vpack.c.b16 %v5665, %v5664
    %v5931 = vpack.c.b16 %v5667, %v5666
    %v5932 = vpack.c.b16 %v5669, %v5668
    %v5933 = vpack.c.b16 %v5671, %v5670
    %v5934 = vpack.c.b16 %v5673, %v5672
    %v5935 = vpack.c.b16 %v5675, %v5674
    %v5936 = vpack.c.b16 %v5677, %v5676
    %v5937 = vpack.c.b16 %v5679, %v5678
    %v5938 = vpack.c.b16 %v5681, %v5680
    %v5939 = vpack.c.b16 %v5683, %v5682
    %v5940 = vpack.c.b16 %v5685, %v5684
    %v5941 = vpack.c.b16 %v5687, %v5686
    %v5942 = vpack.c.b16 %v5689, %v5688
    %v5943 = vpack.c.b16 %v5691, %v5690
    %v5944 = vpack.c.b16 %v5693, %v5692
    %v5945 = vpack.c.b16 %v5695, %v5694
    %v5946 = vpack.c.b16 %v5697, %v5696
    %v5947 = vpack.c.b16 %v5699, %v5698
    %v5948 = vpack.c.b16 %v5701, %v5700
    %v5949 = vpack.c.b16 %v5703, %v5702
    %v5950 = vpack.c.b16 %v5705, %v5704
    %v5951 = vpack.c.b16 %v5707, %v5706
    %v5952 = vpack.c.b16 %v5709, %v5708
    %v5953 = vpack.c.b16 %v5711, %v5710
    %v5954 = vpack.c.b16 %v5713, %v5712
    %v5955 = vpack.c.b16 %v5715, %v5714
    %v5956 = vpack.c.b16 %v5717, %v5716
    %v5957 = vpack.c.b16 %v5719, %v5718
    %v5958 = vpack.c.b16 %v5721, %v5720
    %v5959 = vpack.c.b16 %v5723, %v5722
    %v5960 = vpack.c.b16 %v5725, %v5724
    %v5961 = vpack.c.b16 %v5727, %v5726
    %v5962 = vpack.c.b16 %v5729, %v5728
    %v5963 = vpack.c.b16 %v5731, %v5730
    %v5964 = vpack.c.b16 %v5733, %v5732
    %v5965 = vpack.c.b16 %v5735, %v5734
    %v5966 = vpack.c.b16 %v5737, %v5736
    %v5967 = vpack.c.b16 %v5739, %v5738
    %v5968 = vpack.c.b16 %v5741, %v5740
    %v5969 = vpack.c.b16 %v5743, %v5742
    %v5970 = vpack.c.b16 %v5745, %v5744
    %v5971 = vpack.c.b16 %v5747, %v5746
    %v5972 = vpack.c.b16 %v5749, %v5748
    %v5973 = vpack.c.b16 %v5751, %v5750
    %v5974 = vpack.c.b16 %v5753, %v5752
    %v5975 = vpack.c.b16 %v5755, %v5754
    %v5976 = vpack.c.b16 %v5757, %v5756
    %v5977 = vpack.c.b16 %v5759, %v5758
    %v5978 = vpack.c.b16 %v5761, %v5760
    %v5979 = vpack.c.b16 %v5763, %v5762
    %v5980 = vpack.c.b16 %v5765, %v5764
    %v5981 = vpack.c.b16 %v5767, %v5766
    %v5982 = vpack.c.b16 %v5769, %v5768
    %v5983 = vpack.c.b16 %v5771, %v5770
    %v5984 = vpack.c.b16 %v5773, %v5772
    %v5985 = vpack.c.b16 %v5775, %v5774
    %v5986 = vpack.c.b16 %v5777, %v5776
    %v5987 = vpack.c.b16 %v5779, %v5778
    %v5988 = vpack.c.b16 %v5781, %v5780
    %v5989 = vpack.c.b16 %v5783, %v5782
    %v5990 = vpack.c.b16 %v5785, %v5784
    %v5991 = vpack.c.b16 %v5787, %v5786
    %v5992 = vpack.c.b16 %v5789, %v5788
    %v5993 = vpack.c.b16 %v5791, %v5790
    %v5994 = vpack.c.b16 %v5793, %v5792
    %v5995 = vpack.c.b16 %v5795, %v5794
    %v5996 = vpack.c.b16 %v5797, %v5796
    %v5997 = vpack.c.b16 %v5799, %v5798
    %v5998 = vpack.c.b16 %v5801, %v5800
    %v5999 = vpack.c.b16 %v5803, %v5802
    %v6000 = vpack.c.b16 %v5805, %v5804
    %v6001 = vpack.c.b16 %v5807, %v5806
    %v6002 = vpack.c.b16 %v5809, %v5808
    %v6003 = vpack.c.b16 %v5811, %v5810
    %6196 = vst [vmem:[#allocation7] sm:$0xff] %v5812
    %6197 = vst [vmem:[#allocation7 + $0x8] sm:$0xff] %v5813
    %6198 = vst [vmem:[#allocation7 + $0x10] sm:$0xff] %v5814
    %6199 = vst [vmem:[#allocation7 + $0x18] sm:$0xff] %v5815
    %6200 = vst [vmem:[#allocation7 + $0x20] sm:$0xff] %v5816
    %6201 = vst [vmem:[#allocation7 + $0x28] sm:$0xff] %v5817
    %6202 = vst [vmem:[#allocation7 + $0x30] sm:$0xff] %v5818
    %6203 = vst [vmem:[#allocation7 + $0x38] sm:$0xff] %v5819
    %6204 = vst [vmem:[#allocation7 + $0x40] sm:$0xff] %v5820
    %6205 = vst [vmem:[#allocation7 + $0x48] sm:$0xff] %v5821
    %6206 = vst [vmem:[#allocation7 + $0x50] sm:$0xff] %v5822
    %6207 = vst [vmem:[#allocation7 + $0x58] sm:$0xff] %v5823
    %6208 = vst [vmem:[#allocation7 + $0x60] sm:$0xff] %v5824
    %6209 = vst [vmem:[#allocation7 + $0x68] sm:$0xff] %v5825
    %6210 = vst [vmem:[#allocation7 + $0x70] sm:$0xff] %v5826
    %6211 = vst [vmem:[#allocation7 + $0x78] sm:$0xff] %v5827
    %6212 = vst [vmem:[#allocation7 + $0x80] sm:$0xff] %v5828
    %6213 = vst [vmem:[#allocation7 + $0x88] sm:$0xff] %v5829
    %6214 = vst [vmem:[#allocation7 + $0x90] sm:$0xff] %v5830
    %6215 = vst [vmem:[#allocation7 + $0x98] sm:$0xff] %v5831
    %6216 = vst [vmem:[#allocation7 + $0xa0] sm:$0xff] %v5832
    %6217 = vst [vmem:[#allocation7 + $0xa8] sm:$0xff] %v5833
    %6218 = vst [vmem:[#allocation7 + $0xb0] sm:$0xff] %v5834
    %6219 = vst [vmem:[#allocation7 + $0xb8] sm:$0xff] %v5835
    %6220 = vst [vmem:[#allocation7 + $0xc0] sm:$0xff] %v5836
    %6221 = vst [vmem:[#allocation7 + $0xc8] sm:$0xff] %v5837
    %6222 = vst [vmem:[#allocation7 + $0xd0] sm:$0xff] %v5838
    %6223 = vst [vmem:[#allocation7 + $0xd8] sm:$0xff] %v5839
    %6224 = vst [vmem:[#allocation7 + $0xe0] sm:$0xff] %v5840
    %6225 = vst [vmem:[#allocation7 + $0xe8] sm:$0xff] %v5841
    %6226 = vst [vmem:[#allocation7 + $0xf0] sm:$0xff] %v5842
    %6227 = vst [vmem:[#allocation7 + $0xf8] sm:$0xff] %v5843
    %6228 = vst [vmem:[#allocation7 + $0x100] sm:$0xff] %v5844
    %6229 = vst [vmem:[#allocation7 + $0x108] sm:$0xff] %v5845
    %6230 = vst [vmem:[#allocation7 + $0x110] sm:$0xff] %v5846
    %6231 = vst [vmem:[#allocation7 + $0x118] sm:$0xff] %v5847
    %6232 = vst [vmem:[#allocation7 + $0x120] sm:$0xff] %v5848
    %6233 = vst [vmem:[#allocation7 + $0x128] sm:$0xff] %v5849
    %6234 = vst [vmem:[#allocation7 + $0x130] sm:$0xff] %v5850
    %6235 = vst [vmem:[#allocation7 + $0x138] sm:$0xff] %v5851
    %6236 = vst [vmem:[#allocation7 + $0x140] sm:$0xff] %v5852
    %6237 = vst [vmem:[#allocation7 + $0x148] sm:$0xff] %v5853
    %6238 = vst [vmem:[#allocation7 + $0x150] sm:$0xff] %v5854
    %6239 = vst [vmem:[#allocation7 + $0x158] sm:$0xff] %v5855
    %6240 = vst [vmem:[#allocation7 + $0x160] sm:$0xff] %v5856
    %6241 = vst [vmem:[#allocation7 + $0x168] sm:$0xff] %v5857
    %6242 = vst [vmem:[#allocation7 + $0x170] sm:$0xff] %v5858
    %6243 = vst [vmem:[#allocation7 + $0x178] sm:$0xff] %v5859
    %6244 = vst [vmem:[#allocation7 + $0x180] sm:$0xff] %v5860
    %6245 = vst [vmem:[#allocation7 + $0x188] sm:$0xff] %v5861
    %6246 = vst [vmem:[#allocation7 + $0x190] sm:$0xff] %v5862
    %6247 = vst [vmem:[#allocation7 + $0x198] sm:$0xff] %v5863
    %6248 = vst [vmem:[#allocation7 + $0x1a0] sm:$0xff] %v5864
    %6249 = vst [vmem:[#allocation7 + $0x1a8] sm:$0xff] %v5865
    %6250 = vst [vmem:[#allocation7 + $0x1b0] sm:$0xff] %v5866
    %6251 = vst [vmem:[#allocation7 + $0x1b8] sm:$0xff] %v5867
    %6252 = vst [vmem:[#allocation7 + $0x1c0] sm:$0xff] %v5868
    %6253 = vst [vmem:[#allocation7 + $0x1c8] sm:$0xff] %v5869
    %6254 = vst [vmem:[#allocation7 + $0x1d0] sm:$0xff] %v5870
    %6255 = vst [vmem:[#allocation7 + $0x1d8] sm:$0xff] %v5871
    %6256 = vst [vmem:[#allocation7 + $0x1e0] sm:$0xff] %v5872
    %6257 = vst [vmem:[#allocation7 + $0x1e8] sm:$0xff] %v5873
    %6258 = vst [vmem:[#allocation7 + $0x1f0] sm:$0xff] %v5874
    %6259 = vst [vmem:[#allocation7 + $0x1f8] sm:$0xff] %v5875
    %6260 = vst [vmem:[#allocation7 + $0x200] sm:$0xff] %v5876
    %6261 = vst [vmem:[#allocation7 + $0x208] sm:$0xff] %v5877
    %6262 = vst [vmem:[#allocation7 + $0x210] sm:$0xff] %v5878
    %6263 = vst [vmem:[#allocation7 + $0x218] sm:$0xff] %v5879
    %6264 = vst [vmem:[#allocation7 + $0x220] sm:$0xff] %v5880
    %6265 = vst [vmem:[#allocation7 + $0x228] sm:$0xff] %v5881
    %6266 = vst [vmem:[#allocation7 + $0x230] sm:$0xff] %v5882
    %6267 = vst [vmem:[#allocation7 + $0x238] sm:$0xff] %v5883
    %6268 = vst [vmem:[#allocation7 + $0x240] sm:$0xff] %v5884
    %6269 = vst [vmem:[#allocation7 + $0x248] sm:$0xff] %v5885
    %6270 = vst [vmem:[#allocation7 + $0x250] sm:$0xff] %v5886
    %6271 = vst [vmem:[#allocation7 + $0x258] sm:$0xff] %v5887
    %6272 = vst [vmem:[#allocation7 + $0x260] sm:$0xff] %v5888
    %6273 = vst [vmem:[#allocation7 + $0x268] sm:$0xff] %v5889
    %6274 = vst [vmem:[#allocation7 + $0x270] sm:$0xff] %v5890
    %6275 = vst [vmem:[#allocation7 + $0x278] sm:$0xff] %v5891
    %6276 = vst [vmem:[#allocation7 + $0x280] sm:$0xff] %v5892
    %6277 = vst [vmem:[#allocation7 + $0x288] sm:$0xff] %v5893
    %6278 = vst [vmem:[#allocation7 + $0x290] sm:$0xff] %v5894
    %6279 = vst [vmem:[#allocation7 + $0x298] sm:$0xff] %v5895
    %6280 = vst [vmem:[#allocation7 + $0x2a0] sm:$0xff] %v5896
    %6281 = vst [vmem:[#allocation7 + $0x2a8] sm:$0xff] %v5897
    %6282 = vst [vmem:[#allocation7 + $0x2b0] sm:$0xff] %v5898
    %6283 = vst [vmem:[#allocation7 + $0x2b8] sm:$0xff] %v5899
    %6284 = vst [vmem:[#allocation7 + $0x2c0] sm:$0xff] %v5900
    %6285 = vst [vmem:[#allocation7 + $0x2c8] sm:$0xff] %v5901
    %6286 = vst [vmem:[#allocation7 + $0x2d0] sm:$0xff] %v5902
    %6287 = vst [vmem:[#allocation7 + $0x2d8] sm:$0xff] %v5903
    %6288 = vst [vmem:[#allocation7 + $0x2e0] sm:$0xff] %v5904
    %6289 = vst [vmem:[#allocation7 + $0x2e8] sm:$0xff] %v5905
    %6290 = vst [vmem:[#allocation7 + $0x2f0] sm:$0xff] %v5906
    %6291 = vst [vmem:[#allocation7 + $0x2f8] sm:$0xff] %v5907
    %6292 = vst [vmem:[#allocation7 + $0x300] sm:$0xff] %v5908
    %6293 = vst [vmem:[#allocation7 + $0x308] sm:$0xff] %v5909
    %6294 = vst [vmem:[#allocation7 + $0x310] sm:$0xff] %v5910
    %6295 = vst [vmem:[#allocation7 + $0x318] sm:$0xff] %v5911
    %6296 = vst [vmem:[#allocation7 + $0x320] sm:$0xff] %v5912
    %6297 = vst [vmem:[#allocation7 + $0x328] sm:$0xff] %v5913
    %6298 = vst [vmem:[#allocation7 + $0x330] sm:$0xff] %v5914
    %6299 = vst [vmem:[#allocation7 + $0x338] sm:$0xff] %v5915
    %6300 = vst [vmem:[#allocation7 + $0x340] sm:$0xff] %v5916
    %6301 = vst [vmem:[#allocation7 + $0x348] sm:$0xff] %v5917
    %6302 = vst [vmem:[#allocation7 + $0x350] sm:$0xff] %v5918
    %6303 = vst [vmem:[#allocation7 + $0x358] sm:$0xff] %v5919
    %6304 = vst [vmem:[#allocation7 + $0x360] sm:$0xff] %v5920
    %6305 = vst [vmem:[#allocation7 + $0x368] sm:$0xff] %v5921
    %6306 = vst [vmem:[#allocation7 + $0x370] sm:$0xff] %v5922
    %6307 = vst [vmem:[#allocation7 + $0x378] sm:$0xff] %v5923
    %6308 = vst [vmem:[#allocation7 + $0x380] sm:$0xff] %v5924
    %6309 = vst [vmem:[#allocation7 + $0x388] sm:$0xff] %v5925
    %6310 = vst [vmem:[#allocation7 + $0x390] sm:$0xff] %v5926
    %6311 = vst [vmem:[#allocation7 + $0x398] sm:$0xff] %v5927
    %6312 = vst [vmem:[#allocation7 + $0x3a0] sm:$0xff] %v5928
    %6313 = vst [vmem:[#allocation7 + $0x3a8] sm:$0xff] %v5929
    %6314 = vst [vmem:[#allocation7 + $0x3b0] sm:$0xff] %v5930
    %6315 = vst [vmem:[#allocation7 + $0x3b8] sm:$0xff] %v5931
    %6316 = vst [vmem:[#allocation7 + $0x3c0] sm:$0xff] %v5932
    %6317 = vst [vmem:[#allocation7 + $0x3c8] sm:$0xff] %v5933
    %6318 = vst [vmem:[#allocation7 + $0x3d0] sm:$0xff] %v5934
    %6319 = vst [vmem:[#allocation7 + $0x3d8] sm:$0xff] %v5935
    %6320 = vst [vmem:[#allocation7 + $0x3e0] sm:$0xff] %v5936
    %6321 = vst [vmem:[#allocation7 + $0x3e8] sm:$0xff] %v5937
    %6322 = vst [vmem:[#allocation7 + $0x3f0] sm:$0xff] %v5938
    %6323 = vst [vmem:[#allocation7 + $0x3f8] sm:$0xff] %v5939
    %6324 = vst [vmem:[#allocation7 + $0x400] sm:$0xff] %v5940
    %6325 = vst [vmem:[#allocation7 + $0x408] sm:$0xff] %v5941
    %6326 = vst [vmem:[#allocation7 + $0x410] sm:$0xff] %v5942
    %6327 = vst [vmem:[#allocation7 + $0x418] sm:$0xff] %v5943
    %6328 = vst [vmem:[#allocation7 + $0x420] sm:$0xff] %v5944
    %6329 = vst [vmem:[#allocation7 + $0x428] sm:$0xff] %v5945
    %6330 = vst [vmem:[#allocation7 + $0x430] sm:$0xff] %v5946
    %6331 = vst [vmem:[#allocation7 + $0x438] sm:$0xff] %v5947
    %6332 = vst [vmem:[#allocation7 + $0x440] sm:$0xff] %v5948
    %6333 = vst [vmem:[#allocation7 + $0x448] sm:$0xff] %v5949
    %6334 = vst [vmem:[#allocation7 + $0x450] sm:$0xff] %v5950
    %6335 = vst [vmem:[#allocation7 + $0x458] sm:$0xff] %v5951
    %6336 = vst [vmem:[#allocation7 + $0x460] sm:$0xff] %v5952
    %6337 = vst [vmem:[#allocation7 + $0x468] sm:$0xff] %v5953
    %6338 = vst [vmem:[#allocation7 + $0x470] sm:$0xff] %v5954
    %6339 = vst [vmem:[#allocation7 + $0x478] sm:$0xff] %v5955
    %6340 = vst [vmem:[#allocation7 + $0x480] sm:$0xff] %v5956
    %6341 = vst [vmem:[#allocation7 + $0x488] sm:$0xff] %v5957
    %6342 = vst [vmem:[#allocation7 + $0x490] sm:$0xff] %v5958
    %6343 = vst [vmem:[#allocation7 + $0x498] sm:$0xff] %v5959
    %6344 = vst [vmem:[#allocation7 + $0x4a0] sm:$0xff] %v5960
    %6345 = vst [vmem:[#allocation7 + $0x4a8] sm:$0xff] %v5961
    %6346 = vst [vmem:[#allocation7 + $0x4b0] sm:$0xff] %v5962
    %6347 = vst [vmem:[#allocation7 + $0x4b8] sm:$0xff] %v5963
    %6348 = vst [vmem:[#allocation7 + $0x4c0] sm:$0xff] %v5964
    %6349 = vst [vmem:[#allocation7 + $0x4c8] sm:$0xff] %v5965
    %6350 = vst [vmem:[#allocation7 + $0x4d0] sm:$0xff] %v5966
    %6351 = vst [vmem:[#allocation7 + $0x4d8] sm:$0xff] %v5967
    %6352 = vst [vmem:[#allocation7 + $0x4e0] sm:$0xff] %v5968
    %6353 = vst [vmem:[#allocation7 + $0x4e8] sm:$0xff] %v5969
    %6354 = vst [vmem:[#allocation7 + $0x4f0] sm:$0xff] %v5970
    %6355 = vst [vmem:[#allocation7 + $0x4f8] sm:$0xff] %v5971
    %6356 = vst [vmem:[#allocation7 + $0x500] sm:$0xff] %v5972
    %6357 = vst [vmem:[#allocation7 + $0x508] sm:$0xff] %v5973
    %6358 = vst [vmem:[#allocation7 + $0x510] sm:$0xff] %v5974
    %6359 = vst [vmem:[#allocation7 + $0x518] sm:$0xff] %v5975
    %6360 = vst [vmem:[#allocation7 + $0x520] sm:$0xff] %v5976
    %6361 = vst [vmem:[#allocation7 + $0x528] sm:$0xff] %v5977
    %6362 = vst [vmem:[#allocation7 + $0x530] sm:$0xff] %v5978
    %6363 = vst [vmem:[#allocation7 + $0x538] sm:$0xff] %v5979
    %6364 = vst [vmem:[#allocation7 + $0x540] sm:$0xff] %v5980
    %6365 = vst [vmem:[#allocation7 + $0x548] sm:$0xff] %v5981
    %6366 = vst [vmem:[#allocation7 + $0x550] sm:$0xff] %v5982
    %6367 = vst [vmem:[#allocation7 + $0x558] sm:$0xff] %v5983
    %6368 = vst [vmem:[#allocation7 + $0x560] sm:$0xff] %v5984
    %6369 = vst [vmem:[#allocation7 + $0x568] sm:$0xff] %v5985
    %6370 = vst [vmem:[#allocation7 + $0x570] sm:$0xff] %v5986
    %6371 = vst [vmem:[#allocation7 + $0x578] sm:$0xff] %v5987
    %6372 = vst [vmem:[#allocation7 + $0x580] sm:$0xff] %v5988
    %6373 = vst [vmem:[#allocation7 + $0x588] sm:$0xff] %v5989
    %6374 = vst [vmem:[#allocation7 + $0x590] sm:$0xff] %v5990
    %6375 = vst [vmem:[#allocation7 + $0x598] sm:$0xff] %v5991
    %6376 = vst [vmem:[#allocation7 + $0x5a0] sm:$0xff] %v5992
    %6377 = vst [vmem:[#allocation7 + $0x5a8] sm:$0xff] %v5993
    %6378 = vst [vmem:[#allocation7 + $0x5b0] sm:$0xff] %v5994
    %6379 = vst [vmem:[#allocation7 + $0x5b8] sm:$0xff] %v5995
    %6380 = vst [vmem:[#allocation7 + $0x5c0] sm:$0xff] %v5996
    %6381 = vst [vmem:[#allocation7 + $0x5c8] sm:$0xff] %v5997
    %6382 = vst [vmem:[#allocation7 + $0x5d0] sm:$0xff] %v5998
    %6383 = vst [vmem:[#allocation7 + $0x5d8] sm:$0xff] %v5999
    %6384 = vst [vmem:[#allocation7 + $0x5e0] sm:$0xff] %v6000
    %6385 = vst [vmem:[#allocation7 + $0x5e8] sm:$0xff] %v6001
    %6386 = vst [vmem:[#allocation7 + $0x5f0] sm:$0xff] %v6002
    %6387 = vst [vmem:[#allocation7 + $0x5f8] sm:$0xff] %v6003
    // Predicated region
    $region18: #{tpu_custom_call.1} parent=1 // pred_check
      _
    $region19: #{tpu_custom_call.1} parent=1 // pred_check_branch
      %6389 = sbr.rel (0) target = $region21
    $region20: #{tpu_custom_call.1} parent=1 // pred_region
      %s6391 = ssub.s32 24576, 24576
      %6392 = vsyncadd [#allocation4], %s6391
      %s6393 = sshll.u32 [#allocation7], 4
      %s6394 = int_to_ptr.vmem [resolvable:$true] %s6393
      %6399 = dma.vmem_to_hbm [thread:$0]  %s6394, 24576, %s2, [#allocation4], 768, 768, 48
    $region21: #{tpu_custom_call.1} parent=1 // pred_fallthru
      _
    // Predicated region
    $region22: #{tpu_custom_call.1} parent=1 // pred_check
      _
    $region23: #{tpu_custom_call.1} parent=1 // pred_check_branch
      %6401 = sbr.rel (0) target = $region25
    $region24: #{tpu_custom_call.1} parent=1 // pred_region
      %6402 = dma.done [#allocation4], 24576
    $region25: #{tpu_custom_call.1} parent=1 // pred_fallthru
      _
    %6403 = vsyncpa [#allocation3], 1
    %6404 = vsyncpa [#allocation6], 1
    %6405 = vsyncpa [#allocation4], 1

</llo_original>
